<compile_context>
chip_gen: v7x
topology: tpu7x:2x2x1
jax: 0.10.0
libtpu: 0.0.40
codegen_flags: <defaults>
</compile_context>

<pallas_src>
import math
from functools import partial

import jax
import jax.numpy as jnp
from jax.experimental import pallas as pl
from jax.experimental.pallas import tpu as pltpu

F32 = jnp.float32
BF16 = jnp.bfloat16
NEG = float(jnp.finfo(jnp.float32).min)   # matches torch.finfo(dtype).min in _expand_mask


def _round_up(x, m):
    return (x + m - 1) // m * m


def _pad2(a, s0, s1, dtype):
    """Cast to dtype and zero-pad a 2-D array up to (s0, s1) (no-op copy avoided)."""
    a = a.astype(dtype)
    if a.shape == (s0, s1):
        return a
    return jnp.zeros((s0, s1), dtype).at[:a.shape[0], :a.shape[1]].set(a)


# ---------------------------------------------------------------------------
# Tiled linear: o = act(x @ w + b) [+ residual]   (bf16 MXU, f32 accumulation)
# ---------------------------------------------------------------------------
def _linear_kernel(*refs, act, has_res):
    if has_res:
        x_ref, w_ref, b_ref, r_ref, o_ref, acc_ref = refs
    else:
        x_ref, w_ref, b_ref, o_ref, acc_ref = refs
        r_ref = None

    @pl.when(pl.program_id(2) == 0)
    def _():
        acc_ref[...] = jnp.zeros_like(acc_ref)

    acc_ref[...] += jnp.dot(x_ref[...], w_ref[...],
                            preferred_element_type=jnp.float32)

    @pl.when(pl.program_id(2) == pl.num_programs(2) - 1)
    def _():
        y = acc_ref[...] + b_ref[...]
        if act == "relu":
            y = jnp.maximum(y, 0.0)
        elif act == "gelu":
            # TODO(synk): BART uses exact erf-GELU; tanh approximation used for Mosaic-safe lowering.
            y = jax.nn.gelu(y, approximate=True)
        if r_ref is not None:
            y = y + r_ref[...]
        o_ref[...] = y.astype(o_ref.dtype)


def linear(x2d, w, b, act=None, residual=None, *, tm=256, tn=256, tk=256):
    """x2d:[M,K] w:[K,N] b:[N] residual:[M,N]|None.  Pads to MXU/lane granules,
    tiles with a 3-D grid and a VMEM f32 accumulator."""
    M, K = x2d.shape
    N = w.shape[1]
    Mp, Kp, Np = _round_up(M, 8), _round_up(K, 128), _round_up(N, 128)
    tm, tk, tn = min(tm, Mp), min(tk, Kp), min(tn, Np)
    Mp, Kp, Np = _round_up(Mp, tm), _round_up(Kp, tk), _round_up(Np, tn)

    xp = _pad2(x2d, Mp, Kp, BF16)
    wp = _pad2(w, Kp, Np, BF16)
    bp = _pad2(b.reshape(1, N), 1, Np, F32)

    has_res = residual is not None
    inputs = [xp, wp, bp]
    in_specs = [pl.BlockSpec((tm, tk), lambda i, j, k: (i, k)),
                pl.BlockSpec((tk, tn), lambda i, j, k: (k, j)),
                pl.BlockSpec((1, tn), lambda i, j, k: (0, j))]
    if has_res:
        inputs.append(_pad2(residual, Mp, Np, F32))
        in_specs.append(pl.BlockSpec((tm, tn), lambda i, j, k: (i, j)))

    out = pl.pallas_call(
        partial(_linear_kernel, act=act, has_res=has_res),
        out_shape=jax.ShapeDtypeStruct((Mp, Np), F32),
        grid=(Mp // tm, Np // tn, Kp // tk),
        in_specs=in_specs,
        out_specs=pl.BlockSpec((tm, tn), lambda i, j, k: (i, j)),
        scratch_shapes=[pltpu.VMEM((tm, tn), jnp.float32)],
        compiler_params=pltpu.CompilerParams(
            dimension_semantics=("parallel", "parallel", "arbitrary")),
    )(*inputs)
    return out[:M, :N]


# ---------------------------------------------------------------------------
# Row-tiled LayerNorm and CMVN
# ---------------------------------------------------------------------------
def _ln_kernel(x_ref, g_ref, b_ref, o_ref, *, eps):
    x = x_ref[...]
    mu = jnp.mean(x, axis=-1, keepdims=True)
    xc = x - mu
    var = jnp.mean(xc * xc, axis=-1, keepdims=True)
    o_ref[...] = (xc * jax.lax.rsqrt(var + eps) * g_ref[...] + b_ref[...]).astype(o_ref.dtype)


def layer_norm(x2d, g, b, eps=1e-5, *, tm=512):
    M, D = x2d.shape
    Mp = _round_up(M, 8)
    tm = min(tm, Mp)
    Mp = _round_up(Mp, tm)
    xp = _pad2(x2d, Mp, D, F32)
    out = pl.pallas_call(
        partial(_ln_kernel, eps=eps),
        out_shape=jax.ShapeDtypeStruct((Mp, D), F32),
        grid=(Mp // tm,),
        in_specs=[pl.BlockSpec((tm, D), lambda i: (i, 0)),
                  pl.BlockSpec((1, D), lambda i: (0, 0)),
                  pl.BlockSpec((1, D), lambda i: (0, 0))],
        out_specs=pl.BlockSpec((tm, D), lambda i: (i, 0)),
        compiler_params=pltpu.CompilerParams(dimension_semantics=("parallel",)),
    )(xp, g.reshape(1, D), b.reshape(1, D))
    return out[:M]


def _cmvn_kernel(x_ref, m_ref, s_ref, o_ref):
    o_ref[...] = ((x_ref[...] - m_ref[...]) * s_ref[...]).astype(o_ref.dtype)


def cmvn_apply(x2d, mean, istd, *, tm=512):
    M, D = x2d.shape
    Mp = _round_up(M, 8)
    tm = min(tm, Mp)
    Mp = _round_up(Mp, tm)
    xp = _pad2(x2d, Mp, D, F32)
    out = pl.pallas_call(
        _cmvn_kernel,
        out_shape=jax.ShapeDtypeStruct((Mp, D), F32),
        grid=(Mp // tm,),
        in_specs=[pl.BlockSpec((tm, D), lambda i: (i, 0)),
                  pl.BlockSpec((1, D), lambda i: (0, 0)),
                  pl.BlockSpec((1, D), lambda i: (0, 0))],
        out_specs=pl.BlockSpec((tm, D), lambda i: (i, 0)),
        compiler_params=pltpu.CompilerParams(dimension_semantics=("parallel",)),
    )(xp, mean.reshape(1, D), istd.reshape(1, D))
    return out[:M]


# ---------------------------------------------------------------------------
# Attention: grid over batch, all heads per step, in-kernel mask bias
# ---------------------------------------------------------------------------
def _attn_kernel(mask_ref, qkv_ref, o_ref, *, num_heads, d_model, scale):
    qkv = qkv_ref[0]                            # [T, 3D] f32 (q|k|v concatenated)
    key_ok = mask_ref[0]                        # [1, T] f32 (1 = valid key)
    bias = jnp.where(key_ok > 0.5, 0.0, NEG)    # additive key mask, broadcast over queries
    dh = d_model // num_heads
    outs = []
    for h in range(num_heads):
        q = qkv[:, h * dh:(h + 1) * dh].astype(BF16)
        k = qkv[:, d_model + h * dh:d_model + (h + 1) * dh].astype(BF16)
        v = qkv[:, 2 * d_model + h * dh:2 * d_model + (h + 1) * dh].astype(BF16)
        s = jax.lax.dot_general(q, k, (((1,), (1,)), ((), ())),
                                preferred_element_type=jnp.float32) * scale + bias
        s = s - jnp.max(s, axis=-1, keepdims=True)
        p = jnp.exp(s)
        p = p * pl.reciprocal(jnp.sum(p, axis=-1, keepdims=True), approx=True)
        outs.append(jnp.dot(p.astype(BF16), v, preferred_element_type=jnp.float32))
    # lane-dense [T, D] store (all heads concatenated)
    o_ref[0] = jnp.concatenate(outs, axis=-1).astype(o_ref.dtype)


def attention(qkv, mask_f32, num_heads, d_model):
    """qkv:[B,T,3D]  mask_f32:[B,1,T].  One grid step per batch element; no [B,T,T]
    bias materialization and no host-side head split/merge transposes."""
    B, T, threeD = qkv.shape
    scale = 1.0 / math.sqrt(d_model // num_heads)
    return pl.pallas_call(
        partial(_attn_kernel, num_heads=num_heads, d_model=d_model, scale=scale),
        out_shape=jax.ShapeDtypeStruct((B, T, d_model), F32),
        grid=(B,),
        in_specs=[pl.BlockSpec((1, 1, T), lambda b: (b, 0, 0)),
                  pl.BlockSpec((1, T, threeD), lambda b: (b, 0, 0))],
        out_specs=pl.BlockSpec((1, T, d_model), lambda b: (b, 0, 0)),
        compiler_params=pltpu.CompilerParams(dimension_semantics=("parallel",)),
    )(mask_f32, qkv)


# ---------------------------------------------------------------------------
# Modules built from the Pallas kernels
# ---------------------------------------------------------------------------
def mha(x_in, residual, p, mask_f32, num_heads):
    """Multi-head self-attention with fused QKV projection; the residual add is fused
    into the output-projection matmul epilogue."""
    B, T, D = x_in.shape
    qkv = linear(x_in.reshape(B * T, D), p["wqkv"], p["bqkv"])          # [B*T, 3D]
    ctx = attention(qkv.reshape(B, T, 3 * D), mask_f32, num_heads, D)   # [B, T, D]
    out = linear(ctx.reshape(B * T, D), p["wo"], p["bo"],
                 residual=residual.reshape(B * T, D))
    return out.reshape(B, T, D)


def sp_encoder_layer(x, p, mask_f32, num_heads):
    """wenet TransformerEncoderLayer, normalize_before=True, ReLU FFN."""
    B, T, D = x.shape
    xn1 = layer_norm(x.reshape(B * T, D), p["ln1_g"], p["ln1_b"], eps=1e-12).reshape(B, T, D)
    x1 = mha(xn1, x, p["attn"], mask_f32, num_heads)          # x + SelfAttn(LN(x))
    x1f = x1.reshape(B * T, D)
    xn2 = layer_norm(x1f, p["ln2_g"], p["ln2_b"], eps=1e-12)
    h = linear(xn2, p["w1"], p["b1"], act="relu")
    out = linear(h, p["w2"], p["b2"], residual=x1f)           # x1 + FFN(LN(x1))
    return out.reshape(B, T, D)


def bart_encoder_layer(h, p, mask_f32, num_heads):
    """HF BartEncoderLayer (post-LN), GELU FFN, eval mode (no dropout)."""
    B, T, D = h.shape
    s1 = mha(h, h, p["attn"], mask_f32, num_heads)            # h + SelfAttn(h)
    h1 = layer_norm(s1.reshape(B * T, D), p["ln1_g"], p["ln1_b"], eps=1e-5)
    f = linear(h1, p["w1"], p["b1"], act="gelu")
    s2 = linear(f, p["w2"], p["b2"], residual=h1)             # h1 + FFN(h1)
    h2 = layer_norm(s2, p["ln2_g"], p["ln2_b"], eps=1e-5)
    return h2.reshape(B, T, D)


def _im2col_nchw(x, k=3, stride=2):
    """x:[B,C,H,W] -> patches [B,Ho,Wo,C*k*k] in (C,kh,kw) order (matches torch Conv2d
    weight.reshape(outC, inC*k*k))."""
    B, C, H, W = x.shape
    Ho = (H - k) // stride + 1
    Wo = (W - k) // stride + 1
    pats = []
    for i in range(k):
        for j in range(k):
            pats.append(x[:, :, i:i + stride * (Ho - 1) + 1:stride,
                          j:j + stride * (Wo - 1) + 1:stride])
    p = jnp.stack(pats, axis=2)                    # [B, C, k*k, Ho, Wo]
    p = p.transpose(0, 3, 4, 1, 2).reshape(B, Ho, Wo, C * k * k)
    return p, Ho, Wo


def conv2d_relu(x_nchw, w, b):
    """torch.nn.Conv2d(in,out,3,stride=2)+ReLU via im2col + tiled Pallas matmul."""
    out_c = w.shape[0]
    B = x_nchw.shape[0]
    p, Ho, Wo = _im2col_nchw(x_nchw, 3, 2)
    y = linear(p.reshape(B * Ho * Wo, -1), w.reshape(out_c, -1).T, b, act="relu")
    return y.reshape(B, Ho, Wo, out_c).transpose(0, 3, 1, 2)   # back to NCHW


def sinusoidal_pe(T, D):
    pos = jnp.arange(T, dtype=F32)[:, None]
    div = jnp.exp(jnp.arange(0, D, 2, dtype=F32) * (-math.log(10000.0) / D))
    pe = jnp.zeros((T, D), F32)
    pe = pe.at[:, 0::2].set(jnp.sin(pos * div))
    pe = pe.at[:, 1::2].set(jnp.cos(pos * div))
    return pe


def speech_encoder(sp_feat, sp_feat_lens, params, num_heads):
    B, Tm, Fm = sp_feat.shape
    # GlobalCMVN
    x = cmvn_apply(sp_feat.reshape(B * Tm, Fm), params["cmvn_mean"],
                   params["cmvn_istd"]).reshape(B, Tm, Fm)
    # Conv2dSubsampling4: [B,1,T,F] -> two stride-2 convs + ReLU
    x = x[:, None, :, :]
    x = conv2d_relu(x, params["conv1_w"], params["conv1_b"])
    x = conv2d_relu(x, params["conv2_w"], params["conv2_b"])
    _, C, Tp, Fp = x.shape
    x = x.transpose(0, 2, 1, 3).reshape(B, Tp, C * Fp)          # (c,f) flatten like torch
    D = params["sub_out_w"].shape[1]
    x = linear(x.reshape(B * Tp, C * Fp), params["sub_out_w"],
               params["sub_out_b"]).reshape(B, Tp, D)
    # positional encoding: x*sqrt(d_model) + pe
    x = x * math.sqrt(D) + sinusoidal_pe(Tp, D)[None]
    # pad mask, subsampled the wenet way
    mask = jnp.arange(Tm)[None, :] < sp_feat_lens[:, None]       # [B, Tm] bool
    mask = mask[:, 2::2][:, 2::2]                                # [B, Tp]
    mask_f32 = mask.astype(F32)[:, None, :]                      # [B, 1, Tp] for in-kernel bias
    for lp in params["sp_layers"]:
        x = sp_encoder_layer(x, lp, mask_f32, num_heads)
    x = layer_norm(x.reshape(B * Tp, D), params["after_g"], params["after_b"],
                   eps=1e-12).reshape(B, Tp, D)
    return x, mask


def bart_encoder(inputs_embeds, attention_mask, params, num_heads):
    # NOTE: original forward computes embed_positions + layernorm_embedding and then
    # overwrites hidden_states with inputs_embeds, so they have no effect; reproduced here.
    mask_f32 = attention_mask.astype(F32)[:, None, :]            # == _expand_mask, built in-kernel
    h = inputs_embeds
    for lp in params["bart_layers"]:
        h = bart_encoder_layer(h, lp, mask_f32, num_heads)
    return h


def bart_speech_ner_forward(sp_feat, sp_feat_lens, params, num_heads):
    enc_out, mask = speech_encoder(sp_feat, sp_feat_lens, params, num_heads)
    x = bart_encoder(enc_out, mask, params, num_heads)
    return x, mask


# ---------------------------------------------------------------------------
# Deterministic parameter init (synthetic; no checkpoint loading)
# ---------------------------------------------------------------------------
def init_params(key, *, n_mels, d_model, heads, sp_layers, sp_ffn, bart_layers, bart_ffn):
    del heads
    keys = iter(jax.random.split(key, 512))

    def nrm(shape, std=0.02):
        return jax.random.normal(next(keys), shape, F32) * std

    def attn_p(d):
        wq, wk, wv = nrm((d, d)), nrm((d, d)), nrm((d, d))
        bq, bk, bv = nrm((d,)), nrm((d,)), nrm((d,))
        return dict(wqkv=jnp.concatenate([wq, wk, wv], axis=1),   # fused QKV projection
                    bqkv=jnp.concatenate([bq, bk, bv], axis=0),
                    wo=nrm((d, d)), bo=nrm((d,)))

    f1 = (n_mels - 3) // 2 + 1
    f2 = (f1 - 3) // 2 + 1

    params = dict(
        cmvn_mean=nrm((n_mels,), 1.0),
        cmvn_istd=1.0 + 0.1 * jnp.abs(nrm((n_mels,), 1.0)),
        conv1_w=nrm((d_model, 1, 3, 3), 0.1), conv1_b=nrm((d_model,)),
        conv2_w=nrm((d_model, d_model, 3, 3), 0.05), conv2_b=nrm((d_model,)),
        sub_out_w=nrm((d_model * f2, d_model)), sub_out_b=nrm((d_model,)),
        after_g=jnp.ones((d_model,), F32), after_b=jnp.zeros((d_model,), F32),
        sp_layers=[], bart_layers=[],
    )
    for _ in range(sp_layers):
        params["sp_layers"].append(dict(
            ln1_g=jnp.ones((d_model,), F32), ln1_b=jnp.zeros((d_model,), F32),
            attn=attn_p(d_model),
            ln2_g=jnp.ones((d_model,), F32), ln2_b=jnp.zeros((d_model,), F32),
            w1=nrm((d_model, sp_ffn)), b1=nrm((sp_ffn,)),
            w2=nrm((sp_ffn, d_model)), b2=nrm((d_model,)),
        ))
    for _ in range(bart_layers):
        params["bart_layers"].append(dict(
            attn=attn_p(d_model),
            ln1_g=jnp.ones((d_model,), F32), ln1_b=jnp.zeros((d_model,), F32),
            w1=nrm((d_model, bart_ffn)), b1=nrm((bart_ffn,)),
            w2=nrm((bart_ffn, d_model)), b2=nrm((d_model,)),
            ln2_g=jnp.ones((d_model,), F32), ln2_b=jnp.zeros((d_model,), F32),
        ))
    return params


if __name__ == "__main__":
    B, T_MEL, N_MELS = 2, 64, 80
    D_MODEL, HEADS = 32, 4
    SP_LAYERS, SP_FFN = 2, 64
    BART_LAYERS, BART_FFN = 2, 64

    key = jax.random.PRNGKey(0)
    kp, kx = jax.random.split(key)
    params = init_params(kp, n_mels=N_MELS, d_model=D_MODEL, heads=HEADS,
                         sp_layers=SP_LAYERS, sp_ffn=SP_FFN,
                         bart_layers=BART_LAYERS, bart_ffn=BART_FFN)

    sp_feat = jax.random.normal(kx, (B, T_MEL, N_MELS), F32)
    sp_feat_lens = jnp.array([64, 40], dtype=jnp.int32)

    fwd = jax.jit(partial(bart_speech_ner_forward, num_heads=HEADS))
    x, attn_mask = fwd(sp_feat, sp_feat_lens, params)
    x = jax.block_until_ready(x)
    attn_mask = jax.block_until_ready(attn_mask)

    T_SUB = (((T_MEL - 3) // 2 + 1) - 3) // 2 + 1   # = 15 for T_MEL=64
    assert x.shape == (B, T_SUB, D_MODEL), x.shape
    assert attn_mask.shape == (B, T_SUB), attn_mask.shape
    assert bool(jnp.all(jnp.isfinite(x)))
    print("KERNEL_OK")
</pallas_src>

<mosaic_0001>
module attributes {stable_mosaic.version = 11 : i64} {
  func.func @_cmvn_kernel(%arg0: i32, %arg1: memref<128x80xf32, #tpu.memory_space<vmem>>, %arg2: memref<1x80xf32, #tpu.memory_space<vmem>>, %arg3: memref<1x80xf32, #tpu.memory_space<vmem>>, %arg4: memref<128x80xf32, #tpu.memory_space<vmem>>) attributes {dimension_semantics = [#tpu.dimension_semantics<parallel>], iteration_bounds = array<i64: 1>, scalar_prefetch = 0 : i64, scratch_operands = 0 : i64, tpu.core_type = #tpu.core_type<tc>, window_params = [{transform_indices = @transform_0, window_bounds = array<i64: 128, 80>}, {pipeline_mode = #tpu.pipeline_mode<synchronous>, transform_indices = @transform_1, window_bounds = array<i64: 1, 80>}, {pipeline_mode = #tpu.pipeline_mode<synchronous>, transform_indices = @transform_2, window_bounds = array<i64: 1, 80>}, {transform_indices = @transform_3, window_bounds = array<i64: 128, 80>}]} {
    %c0 = arith.constant 0 : index
    %c0_0 = arith.constant 0 : index
    %0 = vector.load %arg1[%c0, %c0_0] : memref<128x80xf32, #tpu.memory_space<vmem>>, vector<128x80xf32>
    %c0_1 = arith.constant 0 : index
    %c0_2 = arith.constant 0 : index
    %1 = vector.load %arg2[%c0_1, %c0_2] : memref<1x80xf32, #tpu.memory_space<vmem>>, vector<1x80xf32>
    %2 = vector.broadcast %1 : vector<1x80xf32> to vector<128x80xf32>
    %3 = arith.subf %0, %2 : vector<128x80xf32>
    %c0_3 = arith.constant 0 : index
    %c0_4 = arith.constant 0 : index
    %4 = vector.load %arg3[%c0_3, %c0_4] : memref<1x80xf32, #tpu.memory_space<vmem>>, vector<1x80xf32>
    %5 = vector.broadcast %4 : vector<1x80xf32> to vector<128x80xf32>
    %6 = arith.mulf %3, %5 : vector<128x80xf32>
    %c0_5 = arith.constant 0 : index
    %c0_6 = arith.constant 0 : index
    %7 = vector.load %arg4[%c0_5, %c0_6] : memref<128x80xf32, #tpu.memory_space<vmem>>, vector<128x80xf32>
    tpu.vector_store %arg4[%c0_5, %c0_6], %6 {strides = array<i32>} : memref<128x80xf32, #tpu.memory_space<vmem>>, vector<128x80xf32>,
    return
  }
  func.func @transform_0(%arg0: i32) -> (i32, i32) {
    %c0_i32 = arith.constant 0 : i32
    %c0_i32_0 = arith.constant 0 : i32
    return %arg0, %c0_i32 : i32, i32
  }
  func.func @transform_1(%arg0: i32) -> (i32, i32) {
    %c0_i32 = arith.constant 0 : i32
    %c0_i32_0 = arith.constant 0 : i32
    %c0_i32_1 = arith.constant 0 : i32
    return %c0_i32, %c0_i32_0 : i32, i32
  }
  func.func @transform_2(%arg0: i32) -> (i32, i32) {
    %c0_i32 = arith.constant 0 : i32
    %c0_i32_0 = arith.constant 0 : i32
    %c0_i32_1 = arith.constant 0 : i32
    return %c0_i32, %c0_i32_0 : i32, i32
  }
  func.func @transform_3(%arg0: i32) -> (i32, i32) {
    %c0_i32 = arith.constant 0 : i32
    %c0_i32_0 = arith.constant 0 : i32
    return %arg0, %c0_i32 : i32, i32
  }
}

module attributes {stable_mosaic.version = 11 : i64} {
  func.func @_linear_kernel(%arg0: i32, %arg1: i32, %arg2: i32, %arg3: memref<256x128xbf16, #tpu.memory_space<vmem>>, %arg4: memref<128x128xbf16, #tpu.memory_space<vmem>>, %arg5: memref<1x128xf32, #tpu.memory_space<vmem>>, %arg6: memref<256x128xf32, #tpu.memory_space<vmem>>, %arg7: memref<256x128xf32, #tpu.memory_space<vmem>>) attributes {dimension_semantics = [#tpu.dimension_semantics<parallel>, #tpu.dimension_semantics<parallel>, #tpu.dimension_semantics<arbitrary>], iteration_bounds = array<i64: 10, 1, 1>, scalar_prefetch = 0 : i64, scratch_operands = 1 : i64, tpu.core_type = #tpu.core_type<tc>, window_params = [{transform_indices = @transform_0, window_bounds = array<i64: 256, 128>}, {transform_indices = @transform_1, window_bounds = array<i64: 128, 128>}, {transform_indices = @transform_2, window_bounds = array<i64: 1, 128>}, {transform_indices = @transform_3, window_bounds = array<i64: 256, 128>}]} {
    %c0_i32 = arith.constant 0 : i32
    %0 = arith.cmpi eq, %arg2, %c0_i32 : i32
    %1 = arith.extui %0 : i1 to i32
    %c0_i32_0 = arith.constant 0 : i32
    %2 = arith.cmpi ne, %1, %c0_i32_0 : i32
    scf.if %2 {
      %cst_10 = arith.constant 0.000000e+00 : f32
      %12 = vector.broadcast %cst_10 : f32 to vector<256x128xf32>
      %c0_11 = arith.constant 0 : index
      %c0_12 = arith.constant 0 : index
      %13 = vector.load %arg7[%c0_11, %c0_12] : memref<256x128xf32, #tpu.memory_space<vmem>>, vector<256x128xf32>
      tpu.vector_store %arg7[%c0_11, %c0_12], %12 {strides = array<i32>} : memref<256x128xf32, #tpu.memory_space<vmem>>, vector<256x128xf32>,
    } else {
    }
    %c0 = arith.constant 0 : index
    %c0_1 = arith.constant 0 : index
    %3 = vector.load %arg7[%c0, %c0_1] : memref<256x128xf32, #tpu.memory_space<vmem>>, vector<256x128xf32>
    %c0_2 = arith.constant 0 : index
    %c0_3 = arith.constant 0 : index
    %4 = vector.load %arg3[%c0_2, %c0_3] : memref<256x128xbf16, #tpu.memory_space<vmem>>, vector<256x128xbf16>
    %c0_4 = arith.constant 0 : index
    %c0_5 = arith.constant 0 : index
    %5 = vector.load %arg4[%c0_4, %c0_5] : memref<128x128xbf16, #tpu.memory_space<vmem>>, vector<128x128xbf16>
    %cst = arith.constant dense<0.000000e+00> : vector<256x128xf32>
    %6 = tpu.matmul %4, %5, %cst {dimension_numbers = #tpu.dot_dimension_numbers<[1], [0], [0], [1], [0, 0, 1, 1], [], []>} : vector<256x128xbf16>, vector<128x128xbf16>, vector<256x128xf32> -> vector<256x128xf32>
    %7 = arith.addf %3, %6 : vector<256x128xf32>
    %c0_6 = arith.constant 0 : index
    %c0_7 = arith.constant 0 : index
    %8 = vector.load %arg7[%c0_6, %c0_7] : memref<256x128xf32, #tpu.memory_space<vmem>>, vector<256x128xf32>
    tpu.vector_store %arg7[%c0_6, %c0_7], %7 {strides = array<i32>} : memref<256x128xf32, #tpu.memory_space<vmem>>, vector<256x128xf32>,
    %c0_i32_8 = arith.constant 0 : i32
    %9 = arith.cmpi eq, %arg2, %c0_i32_8 : i32
    %10 = arith.extui %9 : i1 to i32
    %c0_i32_9 = arith.constant 0 : i32
    %11 = arith.cmpi ne, %10, %c0_i32_9 : i32
    scf.if %11 {
      %c0_10 = arith.constant 0 : index
      %c0_11 = arith.constant 0 : index
      %12 = vector.load %arg7[%c0_10, %c0_11] : memref<256x128xf32, #tpu.memory_space<vmem>>, vector<256x128xf32>
      %c0_12 = arith.constant 0 : index
      %c0_13 = arith.constant 0 : index
      %13 = vector.load %arg5[%c0_12, %c0_13] : memref<1x128xf32, #tpu.memory_space<vmem>>, vector<1x128xf32>
      %14 = vector.broadcast %13 : vector<1x128xf32> to vector<256x128xf32>
      %15 = arith.addf %12, %14 : vector<256x128xf32>
      %cst_14 = arith.constant 0.000000e+00 : f32
      %16 = vector.broadcast %cst_14 : f32 to vector<256x128xf32>
      %17 = arith.maximumf %15, %16 : vector<256x128xf32>
      %c0_15 = arith.constant 0 : index
      %c0_16 = arith.constant 0 : index
      %18 = vector.load %arg6[%c0_15, %c0_16] : memref<256x128xf32, #tpu.memory_space<vmem>>, vector<256x128xf32>
      tpu.vector_store %arg6[%c0_15, %c0_16], %17 {strides = array<i32>} : memref<256x128xf32, #tpu.memory_space<vmem>>, vector<256x128xf32>,
    } else {
    }
    return
  }
  func.func @transform_0(%arg0: i32, %arg1: i32, %arg2: i32) -> (i32, i32) {
    %c0_i32 = arith.constant 0 : i32
    return %arg0, %arg2 : i32, i32
  }
  func.func @transform_1(%arg0: i32, %arg1: i32, %arg2: i32) -> (i32, i32) {
    %c0_i32 = arith.constant 0 : i32
    return %arg2, %arg1 : i32, i32
  }
  func.func @transform_2(%arg0: i32, %arg1: i32, %arg2: i32) -> (i32, i32) {
    %c0_i32 = arith.constant 0 : i32
    %c0_i32_0 = arith.constant 0 : i32
    return %c0_i32, %arg1 : i32, i32
  }
  func.func @transform_3(%arg0: i32, %arg1: i32, %arg2: i32) -> (i32, i32) {
    %c0_i32 = arith.constant 0 : i32
    return %arg0, %arg1 : i32, i32
  }
}

module attributes {stable_mosaic.version = 11 : i64} {
  func.func @_linear_kernel(%arg0: i32, %arg1: i32, %arg2: i32, %arg3: memref<256x256xbf16, #tpu.memory_space<vmem>>, %arg4: memref<256x128xbf16, #tpu.memory_space<vmem>>, %arg5: memref<1x128xf32, #tpu.memory_space<vmem>>, %arg6: memref<256x128xf32, #tpu.memory_space<vmem>>, %arg7: memref<256x128xf32, #tpu.memory_space<vmem>>) attributes {dimension_semantics = [#tpu.dimension_semantics<parallel>, #tpu.dimension_semantics<parallel>, #tpu.dimension_semantics<arbitrary>], iteration_bounds = array<i64: 3, 1, 2>, scalar_prefetch = 0 : i64, scratch_operands = 1 : i64, tpu.core_type = #tpu.core_type<tc>, window_params = [{transform_indices = @transform_0, window_bounds = array<i64: 256, 256>}, {transform_indices = @transform_1, window_bounds = array<i64: 256, 128>}, {transform_indices = @transform_2, window_bounds = array<i64: 1, 128>}, {transform_indices = @transform_3, window_bounds = array<i64: 256, 128>}]} {
    %c0_i32 = arith.constant 0 : i32
    %0 = arith.cmpi eq, %arg2, %c0_i32 : i32
    %1 = arith.extui %0 : i1 to i32
    %c0_i32_0 = arith.constant 0 : i32
    %2 = arith.cmpi ne, %1, %c0_i32_0 : i32
    scf.if %2 {
      %cst_9 = arith.constant 0.000000e+00 : f32
      %12 = vector.broadcast %cst_9 : f32 to vector<256x128xf32>
      %c0_10 = arith.constant 0 : index
      %c0_11 = arith.constant 0 : index
      %13 = vector.load %arg7[%c0_10, %c0_11] : memref<256x128xf32, #tpu.memory_space<vmem>>, vector<256x128xf32>
      tpu.vector_store %arg7[%c0_10, %c0_11], %12 {strides = array<i32>} : memref<256x128xf32, #tpu.memory_space<vmem>>, vector<256x128xf32>,
    } else {
    }
    %c0 = arith.constant 0 : index
    %c0_1 = arith.constant 0 : index
    %3 = vector.load %arg7[%c0, %c0_1] : memref<256x128xf32, #tpu.memory_space<vmem>>, vector<256x128xf32>
    %c0_2 = arith.constant 0 : index
    %c0_3 = arith.constant 0 : index
    %4 = vector.load %arg3[%c0_2, %c0_3] : memref<256x256xbf16, #tpu.memory_space<vmem>>, vector<256x256xbf16>
    %c0_4 = arith.constant 0 : index
    %c0_5 = arith.constant 0 : index
    %5 = vector.load %arg4[%c0_4, %c0_5] : memref<256x128xbf16, #tpu.memory_space<vmem>>, vector<256x128xbf16>
    %cst = arith.constant dense<0.000000e+00> : vector<256x128xf32>
    %6 = tpu.matmul %4, %5, %cst {dimension_numbers = #tpu.dot_dimension_numbers<[1], [0], [0], [1], [0, 0, 1, 1], [], []>} : vector<256x256xbf16>, vector<256x128xbf16>, vector<256x128xf32> -> vector<256x128xf32>
    %7 = arith.addf %3, %6 : vector<256x128xf32>
    %c0_6 = arith.constant 0 : index
    %c0_7 = arith.constant 0 : index
    %8 = vector.load %arg7[%c0_6, %c0_7] : memref<256x128xf32, #tpu.memory_space<vmem>>, vector<256x128xf32>
    tpu.vector_store %arg7[%c0_6, %c0_7], %7 {strides = array<i32>} : memref<256x128xf32, #tpu.memory_space<vmem>>, vector<256x128xf32>,
    %c1_i32 = arith.constant 1 : i32
    %9 = arith.cmpi eq, %arg2, %c1_i32 : i32
    %10 = arith.extui %9 : i1 to i32
    %c0_i32_8 = arith.constant 0 : i32
    %11 = arith.cmpi ne, %10, %c0_i32_8 : i32
    scf.if %11 {
      %c0_9 = arith.constant 0 : index
      %c0_10 = arith.constant 0 : index
      %12 = vector.load %arg7[%c0_9, %c0_10] : memref<256x128xf32, #tpu.memory_space<vmem>>, vector<256x128xf32>
      %c0_11 = arith.constant 0 : index
      %c0_12 = arith.constant 0 : index
      %13 = vector.load %arg5[%c0_11, %c0_12] : memref<1x128xf32, #tpu.memory_space<vmem>>, vector<1x128xf32>
      %14 = vector.broadcast %13 : vector<1x128xf32> to vector<256x128xf32>
      %15 = arith.addf %12, %14 : vector<256x128xf32>
      %cst_13 = arith.constant 0.000000e+00 : f32
      %16 = vector.broadcast %cst_13 : f32 to vector<256x128xf32>
      %17 = arith.maximumf %15, %16 : vector<256x128xf32>
      %c0_14 = arith.constant 0 : index
      %c0_15 = arith.constant 0 : index
      %18 = vector.load %arg6[%c0_14, %c0_15] : memref<256x128xf32, #tpu.memory_space<vmem>>, vector<256x128xf32>
      tpu.vector_store %arg6[%c0_14, %c0_15], %17 {strides = array<i32>} : memref<256x128xf32, #tpu.memory_space<vmem>>, vector<256x128xf32>,
    } else {
    }
    return
  }
  func.func @transform_0(%arg0: i32, %arg1: i32, %arg2: i32) -> (i32, i32) {
    %c0_i32 = arith.constant 0 : i32
    return %arg0, %arg2 : i32, i32
  }
  func.func @transform_1(%arg0: i32, %arg1: i32, %arg2: i32) -> (i32, i32) {
    %c0_i32 = arith.constant 0 : i32
    return %arg2, %arg1 : i32, i32
  }
  func.func @transform_2(%arg0: i32, %arg1: i32, %arg2: i32) -> (i32, i32) {
    %c0_i32 = arith.constant 0 : i32
    %c0_i32_0 = arith.constant 0 : i32
    return %c0_i32, %arg1 : i32, i32
  }
  func.func @transform_3(%arg0: i32, %arg1: i32, %arg2: i32) -> (i32, i32) {
    %c0_i32 = arith.constant 0 : i32
    return %arg0, %arg1 : i32, i32
  }
}

module attributes {stable_mosaic.version = 11 : i64} {
  func.func @_linear_kernel(%arg0: i32, %arg1: i32, %arg2: i32, %arg3: memref<32x256xbf16, #tpu.memory_space<vmem>>, %arg4: memref<256x128xbf16, #tpu.memory_space<vmem>>, %arg5: memref<1x128xf32, #tpu.memory_space<vmem>>, %arg6: memref<32x128xf32, #tpu.memory_space<vmem>>, %arg7: memref<32x128xf32, #tpu.memory_space<vmem>>) attributes {dimension_semantics = [#tpu.dimension_semantics<parallel>, #tpu.dimension_semantics<parallel>, #tpu.dimension_semantics<arbitrary>], iteration_bounds = array<i64: 1, 1, 3>, scalar_prefetch = 0 : i64, scratch_operands = 1 : i64, tpu.core_type = #tpu.core_type<tc>, window_params = [{transform_indices = @transform_0, window_bounds = array<i64: 32, 256>}, {transform_indices = @transform_1, window_bounds = array<i64: 256, 128>}, {transform_indices = @transform_2, window_bounds = array<i64: 1, 128>}, {transform_indices = @transform_3, window_bounds = array<i64: 32, 128>}]} {
    %c0_i32 = arith.constant 0 : i32
    %0 = arith.cmpi eq, %arg2, %c0_i32 : i32
    %1 = arith.extui %0 : i1 to i32
    %c0_i32_0 = arith.constant 0 : i32
    %2 = arith.cmpi ne, %1, %c0_i32_0 : i32
    scf.if %2 {
      %cst_9 = arith.constant 0.000000e+00 : f32
      %12 = vector.broadcast %cst_9 : f32 to vector<32x128xf32>
      %c0_10 = arith.constant 0 : index
      %c0_11 = arith.constant 0 : index
      %13 = vector.load %arg7[%c0_10, %c0_11] : memref<32x128xf32, #tpu.memory_space<vmem>>, vector<32x128xf32>
      tpu.vector_store %arg7[%c0_10, %c0_11], %12 {strides = array<i32>} : memref<32x128xf32, #tpu.memory_space<vmem>>, vector<32x128xf32>,
    } else {
    }
    %c0 = arith.constant 0 : index
    %c0_1 = arith.constant 0 : index
    %3 = vector.load %arg7[%c0, %c0_1] : memref<32x128xf32, #tpu.memory_space<vmem>>, vector<32x128xf32>
    %c0_2 = arith.constant 0 : index
    %c0_3 = arith.constant 0 : index
    %4 = vector.load %arg3[%c0_2, %c0_3] : memref<32x256xbf16, #tpu.memory_space<vmem>>, vector<32x256xbf16>
    %c0_4 = arith.constant 0 : index
    %c0_5 = arith.constant 0 : index
    %5 = vector.load %arg4[%c0_4, %c0_5] : memref<256x128xbf16, #tpu.memory_space<vmem>>, vector<256x128xbf16>
    %cst = arith.constant dense<0.000000e+00> : vector<32x128xf32>
    %6 = tpu.matmul %4, %5, %cst {dimension_numbers = #tpu.dot_dimension_numbers<[1], [0], [0], [1], [0, 0, 1, 1], [], []>} : vector<32x256xbf16>, vector<256x128xbf16>, vector<32x128xf32> -> vector<32x128xf32>
    %7 = arith.addf %3, %6 : vector<32x128xf32>
    %c0_6 = arith.constant 0 : index
    %c0_7 = arith.constant 0 : index
    %8 = vector.load %arg7[%c0_6, %c0_7] : memref<32x128xf32, #tpu.memory_space<vmem>>, vector<32x128xf32>
    tpu.vector_store %arg7[%c0_6, %c0_7], %7 {strides = array<i32>} : memref<32x128xf32, #tpu.memory_space<vmem>>, vector<32x128xf32>,
    %c2_i32 = arith.constant 2 : i32
    %9 = arith.cmpi eq, %arg2, %c2_i32 : i32
    %10 = arith.extui %9 : i1 to i32
    %c0_i32_8 = arith.constant 0 : i32
    %11 = arith.cmpi ne, %10, %c0_i32_8 : i32
    scf.if %11 {
      %c0_9 = arith.constant 0 : index
      %c0_10 = arith.constant 0 : index
      %12 = vector.load %arg7[%c0_9, %c0_10] : memref<32x128xf32, #tpu.memory_space<vmem>>, vector<32x128xf32>
      %c0_11 = arith.constant 0 : index
      %c0_12 = arith.constant 0 : index
      %13 = vector.load %arg5[%c0_11, %c0_12] : memref<1x128xf32, #tpu.memory_space<vmem>>, vector<1x128xf32>
      %14 = vector.broadcast %13 : vector<1x128xf32> to vector<32x128xf32>
      %15 = arith.addf %12, %14 : vector<32x128xf32>
      %c0_13 = arith.constant 0 : index
      %c0_14 = arith.constant 0 : index
      %16 = vector.load %arg6[%c0_13, %c0_14] : memref<32x128xf32, #tpu.memory_space<vmem>>, vector<32x128xf32>
      tpu.vector_store %arg6[%c0_13, %c0_14], %15 {strides = array<i32>} : memref<32x128xf32, #tpu.memory_space<vmem>>, vector<32x128xf32>,
    } else {
    }
    return
  }
  func.func @transform_0(%arg0: i32, %arg1: i32, %arg2: i32) -> (i32, i32) {
    %c0_i32 = arith.constant 0 : i32
    return %arg0, %arg2 : i32, i32
  }
  func.func @transform_1(%arg0: i32, %arg1: i32, %arg2: i32) -> (i32, i32) {
    %c0_i32 = arith.constant 0 : i32
    return %arg2, %arg1 : i32, i32
  }
  func.func @transform_2(%arg0: i32, %arg1: i32, %arg2: i32) -> (i32, i32) {
    %c0_i32 = arith.constant 0 : i32
    %c0_i32_0 = arith.constant 0 : i32
    return %c0_i32, %arg1 : i32, i32
  }
  func.func @transform_3(%arg0: i32, %arg1: i32, %arg2: i32) -> (i32, i32) {
    %c0_i32 = arith.constant 0 : i32
    return %arg0, %arg1 : i32, i32
  }
}

module attributes {stable_mosaic.version = 11 : i64} {
  func.func @_ln_kernel(%arg0: i32, %arg1: memref<32x32xf32, #tpu.memory_space<vmem>>, %arg2: memref<1x32xf32, #tpu.memory_space<vmem>>, %arg3: memref<1x32xf32, #tpu.memory_space<vmem>>, %arg4: memref<32x32xf32, #tpu.memory_space<vmem>>) attributes {dimension_semantics = [#tpu.dimension_semantics<parallel>], iteration_bounds = array<i64: 1>, scalar_prefetch = 0 : i64, scratch_operands = 0 : i64, tpu.core_type = #tpu.core_type<tc>, window_params = [{transform_indices = @transform_0, window_bounds = array<i64: 32, 32>}, {pipeline_mode = #tpu.pipeline_mode<synchronous>, transform_indices = @transform_1, window_bounds = array<i64: 1, 32>}, {pipeline_mode = #tpu.pipeline_mode<synchronous>, transform_indices = @transform_2, window_bounds = array<i64: 1, 32>}, {transform_indices = @transform_3, window_bounds = array<i64: 32, 32>}]} {
    %c0 = arith.constant 0 : index
    %c0_0 = arith.constant 0 : index
    %0 = vector.load %arg1[%c0, %c0_0] : memref<32x32xf32, #tpu.memory_space<vmem>>, vector<32x32xf32>
    %cst = arith.constant dense<0.000000e+00> : vector<32xf32>
    %1 = vector.multi_reduction <add>, %0, %cst [1] : vector<32x32xf32> to vector<32xf32>
    %2 = vector.shape_cast %1 : vector<32xf32> to vector<32x1xf32>
    %cst_1 = arith.constant 3.200000e+01 : f32
    %3 = vector.broadcast %cst_1 : f32 to vector<32x1xf32>
    %4 = arith.divf %2, %3 : vector<32x1xf32>
    %5 = vector.broadcast %4 : vector<32x1xf32> to vector<32x32xf32>
    %6 = arith.subf %0, %5 : vector<32x32xf32>
    %7 = arith.mulf %6, %6 : vector<32x32xf32>
    %cst_2 = arith.constant dense<0.000000e+00> : vector<32xf32>
    %8 = vector.multi_reduction <add>, %7, %cst_2 [1] : vector<32x32xf32> to vector<32xf32>
    %9 = vector.shape_cast %8 : vector<32xf32> to vector<32x1xf32>
    %cst_3 = arith.constant 3.200000e+01 : f32
    %10 = vector.broadcast %cst_3 : f32 to vector<32x1xf32>
    %11 = arith.divf %9, %10 : vector<32x1xf32>
    %cst_4 = arith.constant 9.99999996E-13 : f32
    %12 = vector.broadcast %cst_4 : f32 to vector<32x1xf32>
    %13 = arith.addf %11, %12 : vector<32x1xf32>
    %14 = math.rsqrt %13 : vector<32x1xf32>
    %15 = vector.broadcast %14 : vector<32x1xf32> to vector<32x32xf32>
    %16 = arith.mulf %6, %15 : vector<32x32xf32>
    %c0_5 = arith.constant 0 : index
    %c0_6 = arith.constant 0 : index
    %17 = vector.load %arg2[%c0_5, %c0_6] : memref<1x32xf32, #tpu.memory_space<vmem>>, vector<1x32xf32>
    %18 = vector.broadcast %17 : vector<1x32xf32> to vector<32x32xf32>
    %19 = arith.mulf %16, %18 : vector<32x32xf32>
    %c0_7 = arith.constant 0 : index
    %c0_8 = arith.constant 0 : index
    %20 = vector.load %arg3[%c0_7, %c0_8] : memref<1x32xf32, #tpu.memory_space<vmem>>, vector<1x32xf32>
    %21 = vector.broadcast %20 : vector<1x32xf32> to vector<32x32xf32>
    %22 = arith.addf %19, %21 : vector<32x32xf32>
    %c0_9 = arith.constant 0 : index
    %c0_10 = arith.constant 0 : index
    %23 = vector.load %arg4[%c0_9, %c0_10] : memref<32x32xf32, #tpu.memory_space<vmem>>, vector<32x32xf32>
    tpu.vector_store %arg4[%c0_9, %c0_10], %22 {strides = array<i32>} : memref<32x32xf32, #tpu.memory_space<vmem>>, vector<32x32xf32>,
    return
  }
  func.func @transform_0(%arg0: i32) -> (i32, i32) {
    %c0_i32 = arith.constant 0 : i32
    %c0_i32_0 = arith.constant 0 : i32
    return %arg0, %c0_i32 : i32, i32
  }
  func.func @transform_1(%arg0: i32) -> (i32, i32) {
    %c0_i32 = arith.constant 0 : i32
    %c0_i32_0 = arith.constant 0 : i32
    %c0_i32_1 = arith.constant 0 : i32
    return %c0_i32, %c0_i32_0 : i32, i32
  }
  func.func @transform_2(%arg0: i32) -> (i32, i32) {
    %c0_i32 = arith.constant 0 : i32
    %c0_i32_0 = arith.constant 0 : i32
    %c0_i32_1 = arith.constant 0 : i32
    return %c0_i32, %c0_i32_0 : i32, i32
  }
  func.func @transform_3(%arg0: i32) -> (i32, i32) {
    %c0_i32 = arith.constant 0 : i32
    %c0_i32_0 = arith.constant 0 : i32
    return %arg0, %c0_i32 : i32, i32
  }
}

module attributes {stable_mosaic.version = 11 : i64} {
  func.func @_linear_kernel(%arg0: i32, %arg1: i32, %arg2: i32, %arg3: memref<32x128xbf16, #tpu.memory_space<vmem>>, %arg4: memref<128x128xbf16, #tpu.memory_space<vmem>>, %arg5: memref<1x128xf32, #tpu.memory_space<vmem>>, %arg6: memref<32x128xf32, #tpu.memory_space<vmem>>, %arg7: memref<32x128xf32, #tpu.memory_space<vmem>>) attributes {dimension_semantics = [#tpu.dimension_semantics<parallel>, #tpu.dimension_semantics<parallel>, #tpu.dimension_semantics<arbitrary>], iteration_bounds = array<i64: 1, 1, 1>, scalar_prefetch = 0 : i64, scratch_operands = 1 : i64, tpu.core_type = #tpu.core_type<tc>, window_params = [{transform_indices = @transform_0, window_bounds = array<i64: 32, 128>}, {transform_indices = @transform_1, window_bounds = array<i64: 128, 128>}, {transform_indices = @transform_2, window_bounds = array<i64: 1, 128>}, {transform_indices = @transform_3, window_bounds = array<i64: 32, 128>}]} {
    %c0_i32 = arith.constant 0 : i32
    %0 = arith.cmpi eq, %arg2, %c0_i32 : i32
    %1 = arith.extui %0 : i1 to i32
    %c0_i32_0 = arith.constant 0 : i32
    %2 = arith.cmpi ne, %1, %c0_i32_0 : i32
    scf.if %2 {
      %cst_10 = arith.constant 0.000000e+00 : f32
      %12 = vector.broadcast %cst_10 : f32 to vector<32x128xf32>
      %c0_11 = arith.constant 0 : index
      %c0_12 = arith.constant 0 : index
      %13 = vector.load %arg7[%c0_11, %c0_12] : memref<32x128xf32, #tpu.memory_space<vmem>>, vector<32x128xf32>
      tpu.vector_store %arg7[%c0_11, %c0_12], %12 {strides = array<i32>} : memref<32x128xf32, #tpu.memory_space<vmem>>, vector<32x128xf32>,
    } else {
    }
    %c0 = arith.constant 0 : index
    %c0_1 = arith.constant 0 : index
    %3 = vector.load %arg7[%c0, %c0_1] : memref<32x128xf32, #tpu.memory_space<vmem>>, vector<32x128xf32>
    %c0_2 = arith.constant 0 : index
    %c0_3 = arith.constant 0 : index
    %4 = vector.load %arg3[%c0_2, %c0_3] : memref<32x128xbf16, #tpu.memory_space<vmem>>, vector<32x128xbf16>
    %c0_4 = arith.constant 0 : index
    %c0_5 = arith.constant 0 : index
    %5 = vector.load %arg4[%c0_4, %c0_5] : memref<128x128xbf16, #tpu.memory_space<vmem>>, vector<128x128xbf16>
    %cst = arith.constant dense<0.000000e+00> : vector<32x128xf32>
    %6 = tpu.matmul %4, %5, %cst {dimension_numbers = #tpu.dot_dimension_numbers<[1], [0], [0], [1], [0, 0, 1, 1], [], []>} : vector<32x128xbf16>, vector<128x128xbf16>, vector<32x128xf32> -> vector<32x128xf32>
    %7 = arith.addf %3, %6 : vector<32x128xf32>
    %c0_6 = arith.constant 0 : index
    %c0_7 = arith.constant 0 : index
    %8 = vector.load %arg7[%c0_6, %c0_7] : memref<32x128xf32, #tpu.memory_space<vmem>>, vector<32x128xf32>
    tpu.vector_store %arg7[%c0_6, %c0_7], %7 {strides = array<i32>} : memref<32x128xf32, #tpu.memory_space<vmem>>, vector<32x128xf32>,
    %c0_i32_8 = arith.constant 0 : i32
    %9 = arith.cmpi eq, %arg2, %c0_i32_8 : i32
    %10 = arith.extui %9 : i1 to i32
    %c0_i32_9 = arith.constant 0 : i32
    %11 = arith.cmpi ne, %10, %c0_i32_9 : i32
    scf.if %11 {
      %c0_10 = arith.constant 0 : index
      %c0_11 = arith.constant 0 : index
      %12 = vector.load %arg7[%c0_10, %c0_11] : memref<32x128xf32, #tpu.memory_space<vmem>>, vector<32x128xf32>
      %c0_12 = arith.constant 0 : index
      %c0_13 = arith.constant 0 : index
      %13 = vector.load %arg5[%c0_12, %c0_13] : memref<1x128xf32, #tpu.memory_space<vmem>>, vector<1x128xf32>
      %14 = vector.broadcast %13 : vector<1x128xf32> to vector<32x128xf32>
      %15 = arith.addf %12, %14 : vector<32x128xf32>
      %c0_14 = arith.constant 0 : index
      %c0_15 = arith.constant 0 : index
      %16 = vector.load %arg6[%c0_14, %c0_15] : memref<32x128xf32, #tpu.memory_space<vmem>>, vector<32x128xf32>
      tpu.vector_store %arg6[%c0_14, %c0_15], %15 {strides = array<i32>} : memref<32x128xf32, #tpu.memory_space<vmem>>, vector<32x128xf32>,
    } else {
    }
    return
  }
  func.func @transform_0(%arg0: i32, %arg1: i32, %arg2: i32) -> (i32, i32) {
    %c0_i32 = arith.constant 0 : i32
    return %arg0, %arg2 : i32, i32
  }
  func.func @transform_1(%arg0: i32, %arg1: i32, %arg2: i32) -> (i32, i32) {
    %c0_i32 = arith.constant 0 : i32
    return %arg2, %arg1 : i32, i32
  }
  func.func @transform_2(%arg0: i32, %arg1: i32, %arg2: i32) -> (i32, i32) {
    %c0_i32 = arith.constant 0 : i32
    %c0_i32_0 = arith.constant 0 : i32
    return %c0_i32, %arg1 : i32, i32
  }
  func.func @transform_3(%arg0: i32, %arg1: i32, %arg2: i32) -> (i32, i32) {
    %c0_i32 = arith.constant 0 : i32
    return %arg0, %arg1 : i32, i32
  }
}

module attributes {stable_mosaic.version = 11 : i64} {
  func.func @_attn_kernel(%arg0: i32, %arg1: memref<1x1x15xf32, #tpu.memory_space<vmem>>, %arg2: memref<1x15x96xf32, #tpu.memory_space<vmem>>, %arg3: memref<1x15x32xf32, #tpu.memory_space<vmem>>) attributes {dimension_semantics = [#tpu.dimension_semantics<parallel>], iteration_bounds = array<i64: 2>, scalar_prefetch = 0 : i64, scratch_operands = 0 : i64, tpu.core_type = #tpu.core_type<tc>, window_params = [{transform_indices = @transform_0, window_bounds = array<i64: 1, 1, 15>}, {transform_indices = @transform_1, window_bounds = array<i64: 1, 15, 96>}, {transform_indices = @transform_2, window_bounds = array<i64: 1, 15, 32>}]} {
    %c0 = arith.constant 0 : index
    %c0_0 = arith.constant 0 : index
    %c0_1 = arith.constant 0 : index
    %0 = vector.load %arg2[%c0, %c0_0, %c0_1] : memref<1x15x96xf32, #tpu.memory_space<vmem>>, vector<1x15x96xf32>
    %1 = vector.shape_cast %0 : vector<1x15x96xf32> to vector<15x96xf32>
    %c0_2 = arith.constant 0 : index
    %c0_3 = arith.constant 0 : index
    %c0_4 = arith.constant 0 : index
    %2 = vector.load %arg1[%c0_2, %c0_3, %c0_4] : memref<1x1x15xf32, #tpu.memory_space<vmem>>, vector<1x1x15xf32>
    %3 = vector.shape_cast %2 : vector<1x1x15xf32> to vector<1x15xf32>
    %cst = arith.constant 5.000000e-01 : f32
    %4 = vector.broadcast %cst : f32 to vector<1x15xf32>
    %5 = arith.cmpf ogt, %3, %4 : vector<1x15xf32>
    %cst_5 = arith.constant 0.000000e+00 : f32
    %cst_6 = arith.constant -3.40282347E+38 : f32
    %6 = vector.broadcast %cst_5 : f32 to vector<1x15xf32>
    %7 = vector.broadcast %cst_6 : f32 to vector<1x15xf32>
    %8 = arith.select %5, %6, %7 : vector<1x15xi1>, vector<1x15xf32>
    %9 = vector.extract_strided_slice %1 {offsets = [0, 0], sizes = [15, 8], strides = [1, 1]} : vector<15x96xf32> to vector<15x8xf32>
    %10 = arith.truncf %9 : vector<15x8xf32> to vector<15x8xbf16>
    %11 = vector.extract_strided_slice %1 {offsets = [0, 32], sizes = [15, 8], strides = [1, 1]} : vector<15x96xf32> to vector<15x8xf32>
    %12 = arith.truncf %11 : vector<15x8xf32> to vector<15x8xbf16>
    %13 = vector.extract_strided_slice %1 {offsets = [0, 64], sizes = [15, 8], strides = [1, 1]} : vector<15x96xf32> to vector<15x8xf32>
    %14 = arith.truncf %13 : vector<15x8xf32> to vector<15x8xbf16>
    %cst_7 = arith.constant dense<0.000000e+00> : vector<15x15xf32>
    %15 = tpu.matmul %10, %12, %cst_7 {dimension_numbers = #tpu.dot_dimension_numbers<[1], [1], [0], [0], [0, 0, 1, 0], [], []>} : vector<15x8xbf16>, vector<15x8xbf16>, vector<15x15xf32> -> vector<15x15xf32>
    %cst_8 = arith.constant 0.353553385 : f32
    %16 = vector.broadcast %cst_8 : f32 to vector<15x15xf32>
    %17 = arith.mulf %15, %16 : vector<15x15xf32>
    %18 = vector.broadcast %8 : vector<1x15xf32> to vector<15x15xf32>
    %19 = arith.addf %17, %18 : vector<15x15xf32>
    %cst_9 = arith.constant dense<0xFF800000> : vector<15xf32>
    %20 = vector.multi_reduction <maximumf>, %19, %cst_9 [1] : vector<15x15xf32> to vector<15xf32>
    %21 = vector.shape_cast %20 : vector<15xf32> to vector<15x1xf32>
    %22 = vector.broadcast %21 : vector<15x1xf32> to vector<15x15xf32>
    %23 = arith.subf %19, %22 : vector<15x15xf32>
    %24 = math.exp %23 : vector<15x15xf32>
    %cst_10 = arith.constant dense<0.000000e+00> : vector<15xf32>
    %25 = vector.multi_reduction <add>, %24, %cst_10 [1] : vector<15x15xf32> to vector<15xf32>
    %26 = vector.shape_cast %25 : vector<15xf32> to vector<15x1xf32>
    %27 = tpu.reciprocal %26 {approx = true} : vector<15x1xf32> -> vector<15x1xf32>
    %28 = vector.broadcast %27 : vector<15x1xf32> to vector<15x15xf32>
    %29 = arith.mulf %24, %28 : vector<15x15xf32>
    %30 = arith.truncf %29 : vector<15x15xf32> to vector<15x15xbf16>
    %cst_11 = arith.constant dense<0.000000e+00> : vector<15x8xf32>
    %31 = tpu.matmul %30, %14, %cst_11 {dimension_numbers = #tpu.dot_dimension_numbers<[1], [0], [0], [1], [0, 0, 1, 1], [], []>} : vector<15x15xbf16>, vector<15x8xbf16>, vector<15x8xf32> -> vector<15x8xf32>
    %32 = vector.extract_strided_slice %1 {offsets = [0, 8], sizes = [15, 8], strides = [1, 1]} : vector<15x96xf32> to vector<15x8xf32>
    %33 = arith.truncf %32 : vector<15x8xf32> to vector<15x8xbf16>
    %34 = vector.extract_strided_slice %1 {offsets = [0, 40], sizes = [15, 8], strides = [1, 1]} : vector<15x96xf32> to vector<15x8xf32>
    %35 = arith.truncf %34 : vector<15x8xf32> to vector<15x8xbf16>
    %36 = vector.extract_strided_slice %1 {offsets = [0, 72], sizes = [15, 8], strides = [1, 1]} : vector<15x96xf32> to vector<15x8xf32>
    %37 = arith.truncf %36 : vector<15x8xf32> to vector<15x8xbf16>
    %cst_12 = arith.constant dense<0.000000e+00> : vector<15x15xf32>
    %38 = tpu.matmul %33, %35, %cst_12 {dimension_numbers = #tpu.dot_dimension_numbers<[1], [1], [0], [0], [0, 0, 1, 0], [], []>} : vector<15x8xbf16>, vector<15x8xbf16>, vector<15x15xf32> -> vector<15x15xf32>
    %cst_13 = arith.constant 0.353553385 : f32
    %39 = vector.broadcast %cst_13 : f32 to vector<15x15xf32>
    %40 = arith.mulf %38, %39 : vector<15x15xf32>
    %41 = vector.broadcast %8 : vector<1x15xf32> to vector<15x15xf32>
    %42 = arith.addf %40, %41 : vector<15x15xf32>
    %cst_14 = arith.constant dense<0xFF800000> : vector<15xf32>
    %43 = vector.multi_reduction <maximumf>, %42, %cst_14 [1] : vector<15x15xf32> to vector<15xf32>
    %44 = vector.shape_cast %43 : vector<15xf32> to vector<15x1xf32>
    %45 = vector.broadcast %44 : vector<15x1xf32> to vector<15x15xf32>
    %46 = arith.subf %42, %45 : vector<15x15xf32>
    %47 = math.exp %46 : vector<15x15xf32>
    %cst_15 = arith.constant dense<0.000000e+00> : vector<15xf32>
    %48 = vector.multi_reduction <add>, %47, %cst_15 [1] : vector<15x15xf32> to vector<15xf32>
    %49 = vector.shape_cast %48 : vector<15xf32> to vector<15x1xf32>
    %50 = tpu.reciprocal %49 {approx = true} : vector<15x1xf32> -> vector<15x1xf32>
    %51 = vector.broadcast %50 : vector<15x1xf32> to vector<15x15xf32>
    %52 = arith.mulf %47, %51 : vector<15x15xf32>
    %53 = arith.truncf %52 : vector<15x15xf32> to vector<15x15xbf16>
    %cst_16 = arith.constant dense<0.000000e+00> : vector<15x8xf32>
    %54 = tpu.matmul %53, %37, %cst_16 {dimension_numbers = #tpu.dot_dimension_numbers<[1], [0], [0], [1], [0, 0, 1, 1], [], []>} : vector<15x15xbf16>, vector<15x8xbf16>, vector<15x8xf32> -> vector<15x8xf32>
    %55 = vector.extract_strided_slice %1 {offsets = [0, 16], sizes = [15, 8], strides = [1, 1]} : vector<15x96xf32> to vector<15x8xf32>
    %56 = arith.truncf %55 : vector<15x8xf32> to vector<15x8xbf16>
    %57 = vector.extract_strided_slice %1 {offsets = [0, 48], sizes = [15, 8], strides = [1, 1]} : vector<15x96xf32> to vector<15x8xf32>
    %58 = arith.truncf %57 : vector<15x8xf32> to vector<15x8xbf16>
    %59 = vector.extract_strided_slice %1 {offsets = [0, 80], sizes = [15, 8], strides = [1, 1]} : vector<15x96xf32> to vector<15x8xf32>
    %60 = arith.truncf %59 : vector<15x8xf32> to vector<15x8xbf16>
    %cst_17 = arith.constant dense<0.000000e+00> : vector<15x15xf32>
    %61 = tpu.matmul %56, %58, %cst_17 {dimension_numbers = #tpu.dot_dimension_numbers<[1], [1], [0], [0], [0, 0, 1, 0], [], []>} : vector<15x8xbf16>, vector<15x8xbf16>, vector<15x15xf32> -> vector<15x15xf32>
    %cst_18 = arith.constant 0.353553385 : f32
    %62 = vector.broadcast %cst_18 : f32 to vector<15x15xf32>
    %63 = arith.mulf %61, %62 : vector<15x15xf32>
    %64 = vector.broadcast %8 : vector<1x15xf32> to vector<15x15xf32>
    %65 = arith.addf %63, %64 : vector<15x15xf32>
    %cst_19 = arith.constant dense<0xFF800000> : vector<15xf32>
    %66 = vector.multi_reduction <maximumf>, %65, %cst_19 [1] : vector<15x15xf32> to vector<15xf32>
    %67 = vector.shape_cast %66 : vector<15xf32> to vector<15x1xf32>
    %68 = vector.broadcast %67 : vector<15x1xf32> to vector<15x15xf32>
    %69 = arith.subf %65, %68 : vector<15x15xf32>
    %70 = math.exp %69 : vector<15x15xf32>
    %cst_20 = arith.constant dense<0.000000e+00> : vector<15xf32>
    %71 = vector.multi_reduction <add>, %70, %cst_20 [1] : vector<15x15xf32> to vector<15xf32>
    %72 = vector.shape_cast %71 : vector<15xf32> to vector<15x1xf32>
    %73 = tpu.reciprocal %72 {approx = true} : vector<15x1xf32> -> vector<15x1xf32>
    %74 = vector.broadcast %73 : vector<15x1xf32> to vector<15x15xf32>
    %75 = arith.mulf %70, %74 : vector<15x15xf32>
    %76 = arith.truncf %75 : vector<15x15xf32> to vector<15x15xbf16>
    %cst_21 = arith.constant dense<0.000000e+00> : vector<15x8xf32>
    %77 = tpu.matmul %76, %60, %cst_21 {dimension_numbers = #tpu.dot_dimension_numbers<[1], [0], [0], [1], [0, 0, 1, 1], [], []>} : vector<15x15xbf16>, vector<15x8xbf16>, vector<15x8xf32> -> vector<15x8xf32>
    %78 = vector.extract_strided_slice %1 {offsets = [0, 24], sizes = [15, 8], strides = [1, 1]} : vector<15x96xf32> to vector<15x8xf32>
    %79 = arith.truncf %78 : vector<15x8xf32> to vector<15x8xbf16>
    %80 = vector.extract_strided_slice %1 {offsets = [0, 56], sizes = [15, 8], strides = [1, 1]} : vector<15x96xf32> to vector<15x8xf32>
    %81 = arith.truncf %80 : vector<15x8xf32> to vector<15x8xbf16>
    %82 = vector.extract_strided_slice %1 {offsets = [0, 88], sizes = [15, 8], strides = [1, 1]} : vector<15x96xf32> to vector<15x8xf32>
    %83 = arith.truncf %82 : vector<15x8xf32> to vector<15x8xbf16>
    %cst_22 = arith.constant dense<0.000000e+00> : vector<15x15xf32>
    %84 = tpu.matmul %79, %81, %cst_22 {dimension_numbers = #tpu.dot_dimension_numbers<[1], [1], [0], [0], [0, 0, 1, 0], [], []>} : vector<15x8xbf16>, vector<15x8xbf16>, vector<15x15xf32> -> vector<15x15xf32>
    %cst_23 = arith.constant 0.353553385 : f32
    %85 = vector.broadcast %cst_23 : f32 to vector<15x15xf32>
    %86 = arith.mulf %84, %85 : vector<15x15xf32>
    %87 = vector.broadcast %8 : vector<1x15xf32> to vector<15x15xf32>
    %88 = arith.addf %86, %87 : vector<15x15xf32>
    %cst_24 = arith.constant dense<0xFF800000> : vector<15xf32>
    %89 = vector.multi_reduction <maximumf>, %88, %cst_24 [1] : vector<15x15xf32> to vector<15xf32>
    %90 = vector.shape_cast %89 : vector<15xf32> to vector<15x1xf32>
    %91 = vector.broadcast %90 : vector<15x1xf32> to vector<15x15xf32>
    %92 = arith.subf %88, %91 : vector<15x15xf32>
    %93 = math.exp %92 : vector<15x15xf32>
    %cst_25 = arith.constant dense<0.000000e+00> : vector<15xf32>
    %94 = vector.multi_reduction <add>, %93, %cst_25 [1] : vector<15x15xf32> to vector<15xf32>
    %95 = vector.shape_cast %94 : vector<15xf32> to vector<15x1xf32>
    %96 = tpu.reciprocal %95 {approx = true} : vector<15x1xf32> -> vector<15x1xf32>
    %97 = vector.broadcast %96 : vector<15x1xf32> to vector<15x15xf32>
    %98 = arith.mulf %93, %97 : vector<15x15xf32>
    %99 = arith.truncf %98 : vector<15x15xf32> to vector<15x15xbf16>
    %cst_26 = arith.constant dense<0.000000e+00> : vector<15x8xf32>
    %100 = tpu.matmul %99, %83, %cst_26 {dimension_numbers = #tpu.dot_dimension_numbers<[1], [0], [0], [1], [0, 0, 1, 1], [], []>} : vector<15x15xbf16>, vector<15x8xbf16>, vector<15x8xf32> -> vector<15x8xf32>
    %101 = tpu.concatenate %31, %54, %77, %100 in 1 : vector<15x8xf32>, vector<15x8xf32>, vector<15x8xf32>, vector<15x8xf32> -> vector<15x32xf32>
    %c0_27 = arith.constant 0 : index
    %c0_28 = arith.constant 0 : index
    %c0_29 = arith.constant 0 : index
    %102 = vector.load %arg3[%c0_27, %c0_28, %c0_29] : memref<1x15x32xf32, #tpu.memory_space<vmem>>, vector<1x15x32xf32>
    %103 = vector.shape_cast %102 : vector<1x15x32xf32> to vector<15x32xf32>
    %104 = vector.shape_cast %101 : vector<15x32xf32> to vector<1x15x32xf32>
    tpu.vector_store %arg3[%c0_27, %c0_28, %c0_29], %104 {strides = array<i32>} : memref<1x15x32xf32, #tpu.memory_space<vmem>>, vector<1x15x32xf32>,
    return
  }
  func.func @transform_0(%arg0: i32) -> (i32, i32, i32) {
    %c0_i32 = arith.constant 0 : i32
    %c0_i32_0 = arith.constant 0 : i32
    %c0_i32_1 = arith.constant 0 : i32
    return %arg0, %c0_i32, %c0_i32_0 : i32, i32, i32
  }
  func.func @transform_1(%arg0: i32) -> (i32, i32, i32) {
    %c0_i32 = arith.constant 0 : i32
    %c0_i32_0 = arith.constant 0 : i32
    %c0_i32_1 = arith.constant 0 : i32
    return %arg0, %c0_i32, %c0_i32_0 : i32, i32, i32
  }
  func.func @transform_2(%arg0: i32) -> (i32, i32, i32) {
    %c0_i32 = arith.constant 0 : i32
    %c0_i32_0 = arith.constant 0 : i32
    %c0_i32_1 = arith.constant 0 : i32
    return %arg0, %c0_i32, %c0_i32_0 : i32, i32, i32
  }
}

module attributes {stable_mosaic.version = 11 : i64} {
  func.func @_linear_kernel(%arg0: i32, %arg1: i32, %arg2: i32, %arg3: memref<32x128xbf16, #tpu.memory_space<vmem>>, %arg4: memref<128x128xbf16, #tpu.memory_space<vmem>>, %arg5: memref<1x128xf32, #tpu.memory_space<vmem>>, %arg6: memref<32x128xf32, #tpu.memory_space<vmem>>, %arg7: memref<32x128xf32, #tpu.memory_space<vmem>>, %arg8: memref<32x128xf32, #tpu.memory_space<vmem>>) attributes {dimension_semantics = [#tpu.dimension_semantics<parallel>, #tpu.dimension_semantics<parallel>, #tpu.dimension_semantics<arbitrary>], iteration_bounds = array<i64: 1, 1, 1>, scalar_prefetch = 0 : i64, scratch_operands = 1 : i64, tpu.core_type = #tpu.core_type<tc>, window_params = [{transform_indices = @transform_0, window_bounds = array<i64: 32, 128>}, {transform_indices = @transform_1, window_bounds = array<i64: 128, 128>}, {transform_indices = @transform_2, window_bounds = array<i64: 1, 128>}, {transform_indices = @transform_3, window_bounds = array<i64: 32, 128>}, {transform_indices = @transform_4, window_bounds = array<i64: 32, 128>}]} {
    %c0_i32 = arith.constant 0 : i32
    %0 = arith.cmpi eq, %arg2, %c0_i32 : i32
    %1 = arith.extui %0 : i1 to i32
    %c0_i32_0 = arith.constant 0 : i32
    %2 = arith.cmpi ne, %1, %c0_i32_0 : i32
    scf.if %2 {
      %cst_10 = arith.constant 0.000000e+00 : f32
      %12 = vector.broadcast %cst_10 : f32 to vector<32x128xf32>
      %c0_11 = arith.constant 0 : index
      %c0_12 = arith.constant 0 : index
      %13 = vector.load %arg8[%c0_11, %c0_12] : memref<32x128xf32, #tpu.memory_space<vmem>>, vector<32x128xf32>
      tpu.vector_store %arg8[%c0_11, %c0_12], %12 {strides = array<i32>} : memref<32x128xf32, #tpu.memory_space<vmem>>, vector<32x128xf32>,
    } else {
    }
    %c0 = arith.constant 0 : index
    %c0_1 = arith.constant 0 : index
    %3 = vector.load %arg8[%c0, %c0_1] : memref<32x128xf32, #tpu.memory_space<vmem>>, vector<32x128xf32>
    %c0_2 = arith.constant 0 : index
    %c0_3 = arith.constant 0 : index
    %4 = vector.load %arg3[%c0_2, %c0_3] : memref<32x128xbf16, #tpu.memory_space<vmem>>, vector<32x128xbf16>
    %c0_4 = arith.constant 0 : index
    %c0_5 = arith.constant 0 : index
    %5 = vector.load %arg4[%c0_4, %c0_5] : memref<128x128xbf16, #tpu.memory_space<vmem>>, vector<128x128xbf16>
    %cst = arith.constant dense<0.000000e+00> : vector<32x128xf32>
    %6 = tpu.matmul %4, %5, %cst {dimension_numbers = #tpu.dot_dimension_numbers<[1], [0], [0], [1], [0, 0, 1, 1], [], []>} : vector<32x128xbf16>, vector<128x128xbf16>, vector<32x128xf32> -> vector<32x128xf32>
    %7 = arith.addf %3, %6 : vector<32x128xf32>
    %c0_6 = arith.constant 0 : index
    %c0_7 = arith.constant 0 : index
    %8 = vector.load %arg8[%c0_6, %c0_7] : memref<32x128xf32, #tpu.memory_space<vmem>>, vector<32x128xf32>
    tpu.vector_store %arg8[%c0_6, %c0_7], %7 {strides = array<i32>} : memref<32x128xf32, #tpu.memory_space<vmem>>, vector<32x128xf32>,
    %c0_i32_8 = arith.constant 0 : i32
    %9 = arith.cmpi eq, %arg2, %c0_i32_8 : i32
    %10 = arith.extui %9 : i1 to i32
    %c0_i32_9 = arith.constant 0 : i32
    %11 = arith.cmpi ne, %10, %c0_i32_9 : i32
    scf.if %11 {
      %c0_10 = arith.constant 0 : index
      %c0_11 = arith.constant 0 : index
      %12 = vector.load %arg8[%c0_10, %c0_11] : memref<32x128xf32, #tpu.memory_space<vmem>>, vector<32x128xf32>
      %c0_12 = arith.constant 0 : index
      %c0_13 = arith.constant 0 : index
      %13 = vector.load %arg5[%c0_12, %c0_13] : memref<1x128xf32, #tpu.memory_space<vmem>>, vector<1x128xf32>
      %14 = vector.broadcast %13 : vector<1x128xf32> to vector<32x128xf32>
      %15 = arith.addf %12, %14 : vector<32x128xf32>
      %c0_14 = arith.constant 0 : index
      %c0_15 = arith.constant 0 : index
      %16 = vector.load %arg6[%c0_14, %c0_15] : memref<32x128xf32, #tpu.memory_space<vmem>>, vector<32x128xf32>
      %17 = arith.addf %15, %16 : vector<32x128xf32>
      %c0_16 = arith.constant 0 : index
      %c0_17 = arith.constant 0 : index
      %18 = vector.load %arg7[%c0_16, %c0_17] : memref<32x128xf32, #tpu.memory_space<vmem>>, vector<32x128xf32>
      tpu.vector_store %arg7[%c0_16, %c0_17], %17 {strides = array<i32>} : memref<32x128xf32, #tpu.memory_space<vmem>>, vector<32x128xf32>,
    } else {
    }
    return
  }
  func.func @transform_0(%arg0: i32, %arg1: i32, %arg2: i32) -> (i32, i32) {
    %c0_i32 = arith.constant 0 : i32
    return %arg0, %arg2 : i32, i32
  }
  func.func @transform_1(%arg0: i32, %arg1: i32, %arg2: i32) -> (i32, i32) {
    %c0_i32 = arith.constant 0 : i32
    return %arg2, %arg1 : i32, i32
  }
  func.func @transform_2(%arg0: i32, %arg1: i32, %arg2: i32) -> (i32, i32) {
    %c0_i32 = arith.constant 0 : i32
    %c0_i32_0 = arith.constant 0 : i32
    return %c0_i32, %arg1 : i32, i32
  }
  func.func @transform_3(%arg0: i32, %arg1: i32, %arg2: i32) -> (i32, i32) {
    %c0_i32 = arith.constant 0 : i32
    return %arg0, %arg1 : i32, i32
  }
  func.func @transform_4(%arg0: i32, %arg1: i32, %arg2: i32) -> (i32, i32) {
    %c0_i32 = arith.constant 0 : i32
    return %arg0, %arg1 : i32, i32
  }
}

module attributes {stable_mosaic.version = 11 : i64} {
  func.func @_linear_kernel(%arg0: i32, %arg1: i32, %arg2: i32, %arg3: memref<32x128xbf16, #tpu.memory_space<vmem>>, %arg4: memref<128x128xbf16, #tpu.memory_space<vmem>>, %arg5: memref<1x128xf32, #tpu.memory_space<vmem>>, %arg6: memref<32x128xf32, #tpu.memory_space<vmem>>, %arg7: memref<32x128xf32, #tpu.memory_space<vmem>>) attributes {dimension_semantics = [#tpu.dimension_semantics<parallel>, #tpu.dimension_semantics<parallel>, #tpu.dimension_semantics<arbitrary>], iteration_bounds = array<i64: 1, 1, 1>, scalar_prefetch = 0 : i64, scratch_operands = 1 : i64, tpu.core_type = #tpu.core_type<tc>, window_params = [{transform_indices = @transform_0, window_bounds = array<i64: 32, 128>}, {transform_indices = @transform_1, window_bounds = array<i64: 128, 128>}, {transform_indices = @transform_2, window_bounds = array<i64: 1, 128>}, {transform_indices = @transform_3, window_bounds = array<i64: 32, 128>}]} {
    %c0_i32 = arith.constant 0 : i32
    %0 = arith.cmpi eq, %arg2, %c0_i32 : i32
    %1 = arith.extui %0 : i1 to i32
    %c0_i32_0 = arith.constant 0 : i32
    %2 = arith.cmpi ne, %1, %c0_i32_0 : i32
    scf.if %2 {
      %cst_10 = arith.constant 0.000000e+00 : f32
      %12 = vector.broadcast %cst_10 : f32 to vector<32x128xf32>
      %c0_11 = arith.constant 0 : index
      %c0_12 = arith.constant 0 : index
      %13 = vector.load %arg7[%c0_11, %c0_12] : memref<32x128xf32, #tpu.memory_space<vmem>>, vector<32x128xf32>
      tpu.vector_store %arg7[%c0_11, %c0_12], %12 {strides = array<i32>} : memref<32x128xf32, #tpu.memory_space<vmem>>, vector<32x128xf32>,
    } else {
    }
    %c0 = arith.constant 0 : index
    %c0_1 = arith.constant 0 : index
    %3 = vector.load %arg7[%c0, %c0_1] : memref<32x128xf32, #tpu.memory_space<vmem>>, vector<32x128xf32>
    %c0_2 = arith.constant 0 : index
    %c0_3 = arith.constant 0 : index
    %4 = vector.load %arg3[%c0_2, %c0_3] : memref<32x128xbf16, #tpu.memory_space<vmem>>, vector<32x128xbf16>
    %c0_4 = arith.constant 0 : index
    %c0_5 = arith.constant 0 : index
    %5 = vector.load %arg4[%c0_4, %c0_5] : memref<128x128xbf16, #tpu.memory_space<vmem>>, vector<128x128xbf16>
    %cst = arith.constant dense<0.000000e+00> : vector<32x128xf32>
    %6 = tpu.matmul %4, %5, %cst {dimension_numbers = #tpu.dot_dimension_numbers<[1], [0], [0], [1], [0, 0, 1, 1], [], []>} : vector<32x128xbf16>, vector<128x128xbf16>, vector<32x128xf32> -> vector<32x128xf32>
    %7 = arith.addf %3, %6 : vector<32x128xf32>
    %c0_6 = arith.constant 0 : index
    %c0_7 = arith.constant 0 : index
    %8 = vector.load %arg7[%c0_6, %c0_7] : memref<32x128xf32, #tpu.memory_space<vmem>>, vector<32x128xf32>
    tpu.vector_store %arg7[%c0_6, %c0_7], %7 {strides = array<i32>} : memref<32x128xf32, #tpu.memory_space<vmem>>, vector<32x128xf32>,
    %c0_i32_8 = arith.constant 0 : i32
    %9 = arith.cmpi eq, %arg2, %c0_i32_8 : i32
    %10 = arith.extui %9 : i1 to i32
    %c0_i32_9 = arith.constant 0 : i32
    %11 = arith.cmpi ne, %10, %c0_i32_9 : i32
    scf.if %11 {
      %c0_10 = arith.constant 0 : index
      %c0_11 = arith.constant 0 : index
      %12 = vector.load %arg7[%c0_10, %c0_11] : memref<32x128xf32, #tpu.memory_space<vmem>>, vector<32x128xf32>
      %c0_12 = arith.constant 0 : index
      %c0_13 = arith.constant 0 : index
      %13 = vector.load %arg5[%c0_12, %c0_13] : memref<1x128xf32, #tpu.memory_space<vmem>>, vector<1x128xf32>
      %14 = vector.broadcast %13 : vector<1x128xf32> to vector<32x128xf32>
      %15 = arith.addf %12, %14 : vector<32x128xf32>
      %cst_14 = arith.constant 0.000000e+00 : f32
      %16 = vector.broadcast %cst_14 : f32 to vector<32x128xf32>
      %17 = arith.maximumf %15, %16 : vector<32x128xf32>
      %c0_15 = arith.constant 0 : index
      %c0_16 = arith.constant 0 : index
      %18 = vector.load %arg6[%c0_15, %c0_16] : memref<32x128xf32, #tpu.memory_space<vmem>>, vector<32x128xf32>
      tpu.vector_store %arg6[%c0_15, %c0_16], %17 {strides = array<i32>} : memref<32x128xf32, #tpu.memory_space<vmem>>, vector<32x128xf32>,
    } else {
    }
    return
  }
  func.func @transform_0(%arg0: i32, %arg1: i32, %arg2: i32) -> (i32, i32) {
    %c0_i32 = arith.constant 0 : i32
    return %arg0, %arg2 : i32, i32
  }
  func.func @transform_1(%arg0: i32, %arg1: i32, %arg2: i32) -> (i32, i32) {
    %c0_i32 = arith.constant 0 : i32
    return %arg2, %arg1 : i32, i32
  }
  func.func @transform_2(%arg0: i32, %arg1: i32, %arg2: i32) -> (i32, i32) {
    %c0_i32 = arith.constant 0 : i32
    %c0_i32_0 = arith.constant 0 : i32
    return %c0_i32, %arg1 : i32, i32
  }
  func.func @transform_3(%arg0: i32, %arg1: i32, %arg2: i32) -> (i32, i32) {
    %c0_i32 = arith.constant 0 : i32
    return %arg0, %arg1 : i32, i32
  }
}

module attributes {stable_mosaic.version = 11 : i64} {
  func.func @_ln_kernel(%arg0: i32, %arg1: memref<32x32xf32, #tpu.memory_space<vmem>>, %arg2: memref<1x32xf32, #tpu.memory_space<vmem>>, %arg3: memref<1x32xf32, #tpu.memory_space<vmem>>, %arg4: memref<32x32xf32, #tpu.memory_space<vmem>>) attributes {dimension_semantics = [#tpu.dimension_semantics<parallel>], iteration_bounds = array<i64: 1>, scalar_prefetch = 0 : i64, scratch_operands = 0 : i64, tpu.core_type = #tpu.core_type<tc>, window_params = [{transform_indices = @transform_0, window_bounds = array<i64: 32, 32>}, {pipeline_mode = #tpu.pipeline_mode<synchronous>, transform_indices = @transform_1, window_bounds = array<i64: 1, 32>}, {pipeline_mode = #tpu.pipeline_mode<synchronous>, transform_indices = @transform_2, window_bounds = array<i64: 1, 32>}, {transform_indices = @transform_3, window_bounds = array<i64: 32, 32>}]} {
    %c0 = arith.constant 0 : index
    %c0_0 = arith.constant 0 : index
    %0 = vector.load %arg1[%c0, %c0_0] : memref<32x32xf32, #tpu.memory_space<vmem>>, vector<32x32xf32>
    %cst = arith.constant dense<0.000000e+00> : vector<32xf32>
    %1 = vector.multi_reduction <add>, %0, %cst [1] : vector<32x32xf32> to vector<32xf32>
    %2 = vector.shape_cast %1 : vector<32xf32> to vector<32x1xf32>
    %cst_1 = arith.constant 3.200000e+01 : f32
    %3 = vector.broadcast %cst_1 : f32 to vector<32x1xf32>
    %4 = arith.divf %2, %3 : vector<32x1xf32>
    %5 = vector.broadcast %4 : vector<32x1xf32> to vector<32x32xf32>
    %6 = arith.subf %0, %5 : vector<32x32xf32>
    %7 = arith.mulf %6, %6 : vector<32x32xf32>
    %cst_2 = arith.constant dense<0.000000e+00> : vector<32xf32>
    %8 = vector.multi_reduction <add>, %7, %cst_2 [1] : vector<32x32xf32> to vector<32xf32>
    %9 = vector.shape_cast %8 : vector<32xf32> to vector<32x1xf32>
    %cst_3 = arith.constant 3.200000e+01 : f32
    %10 = vector.broadcast %cst_3 : f32 to vector<32x1xf32>
    %11 = arith.divf %9, %10 : vector<32x1xf32>
    %cst_4 = arith.constant 9.99999974E-6 : f32
    %12 = vector.broadcast %cst_4 : f32 to vector<32x1xf32>
    %13 = arith.addf %11, %12 : vector<32x1xf32>
    %14 = math.rsqrt %13 : vector<32x1xf32>
    %15 = vector.broadcast %14 : vector<32x1xf32> to vector<32x32xf32>
    %16 = arith.mulf %6, %15 : vector<32x32xf32>
    %c0_5 = arith.constant 0 : index
    %c0_6 = arith.constant 0 : index
    %17 = vector.load %arg2[%c0_5, %c0_6] : memref<1x32xf32, #tpu.memory_space<vmem>>, vector<1x32xf32>
    %18 = vector.broadcast %17 : vector<1x32xf32> to vector<32x32xf32>
    %19 = arith.mulf %16, %18 : vector<32x32xf32>
    %c0_7 = arith.constant 0 : index
    %c0_8 = arith.constant 0 : index
    %20 = vector.load %arg3[%c0_7, %c0_8] : memref<1x32xf32, #tpu.memory_space<vmem>>, vector<1x32xf32>
    %21 = vector.broadcast %20 : vector<1x32xf32> to vector<32x32xf32>
    %22 = arith.addf %19, %21 : vector<32x32xf32>
    %c0_9 = arith.constant 0 : index
    %c0_10 = arith.constant 0 : index
    %23 = vector.load %arg4[%c0_9, %c0_10] : memref<32x32xf32, #tpu.memory_space<vmem>>, vector<32x32xf32>
    tpu.vector_store %arg4[%c0_9, %c0_10], %22 {strides = array<i32>} : memref<32x32xf32, #tpu.memory_space<vmem>>, vector<32x32xf32>,
    return
  }
  func.func @transform_0(%arg0: i32) -> (i32, i32) {
    %c0_i32 = arith.constant 0 : i32
    %c0_i32_0 = arith.constant 0 : i32
    return %arg0, %c0_i32 : i32, i32
  }
  func.func @transform_1(%arg0: i32) -> (i32, i32) {
    %c0_i32 = arith.constant 0 : i32
    %c0_i32_0 = arith.constant 0 : i32
    %c0_i32_1 = arith.constant 0 : i32
    return %c0_i32, %c0_i32_0 : i32, i32
  }
  func.func @transform_2(%arg0: i32) -> (i32, i32) {
    %c0_i32 = arith.constant 0 : i32
    %c0_i32_0 = arith.constant 0 : i32
    %c0_i32_1 = arith.constant 0 : i32
    return %c0_i32, %c0_i32_0 : i32, i32
  }
  func.func @transform_3(%arg0: i32) -> (i32, i32) {
    %c0_i32 = arith.constant 0 : i32
    %c0_i32_0 = arith.constant 0 : i32
    return %arg0, %c0_i32 : i32, i32
  }
}

module attributes {stable_mosaic.version = 11 : i64} {
  func.func @_linear_kernel(%arg0: i32, %arg1: i32, %arg2: i32, %arg3: memref<32x128xbf16, #tpu.memory_space<vmem>>, %arg4: memref<128x128xbf16, #tpu.memory_space<vmem>>, %arg5: memref<1x128xf32, #tpu.memory_space<vmem>>, %arg6: memref<32x128xf32, #tpu.memory_space<vmem>>, %arg7: memref<32x128xf32, #tpu.memory_space<vmem>>) attributes {dimension_semantics = [#tpu.dimension_semantics<parallel>, #tpu.dimension_semantics<parallel>, #tpu.dimension_semantics<arbitrary>], iteration_bounds = array<i64: 1, 1, 1>, scalar_prefetch = 0 : i64, scratch_operands = 1 : i64, tpu.core_type = #tpu.core_type<tc>, window_params = [{transform_indices = @transform_0, window_bounds = array<i64: 32, 128>}, {transform_indices = @transform_1, window_bounds = array<i64: 128, 128>}, {transform_indices = @transform_2, window_bounds = array<i64: 1, 128>}, {transform_indices = @transform_3, window_bounds = array<i64: 32, 128>}]} {
    %c0_i32 = arith.constant 0 : i32
    %0 = arith.cmpi eq, %arg2, %c0_i32 : i32
    %1 = arith.extui %0 : i1 to i32
    %c0_i32_0 = arith.constant 0 : i32
    %2 = arith.cmpi ne, %1, %c0_i32_0 : i32
    scf.if %2 {
      %cst_10 = arith.constant 0.000000e+00 : f32
      %12 = vector.broadcast %cst_10 : f32 to vector<32x128xf32>
      %c0_11 = arith.constant 0 : index
      %c0_12 = arith.constant 0 : index
      %13 = vector.load %arg7[%c0_11, %c0_12] : memref<32x128xf32, #tpu.memory_space<vmem>>, vector<32x128xf32>
      tpu.vector_store %arg7[%c0_11, %c0_12], %12 {strides = array<i32>} : memref<32x128xf32, #tpu.memory_space<vmem>>, vector<32x128xf32>,
    } else {
    }
    %c0 = arith.constant 0 : index
    %c0_1 = arith.constant 0 : index
    %3 = vector.load %arg7[%c0, %c0_1] : memref<32x128xf32, #tpu.memory_space<vmem>>, vector<32x128xf32>
    %c0_2 = arith.constant 0 : index
    %c0_3 = arith.constant 0 : index
    %4 = vector.load %arg3[%c0_2, %c0_3] : memref<32x128xbf16, #tpu.memory_space<vmem>>, vector<32x128xbf16>
    %c0_4 = arith.constant 0 : index
    %c0_5 = arith.constant 0 : index
    %5 = vector.load %arg4[%c0_4, %c0_5] : memref<128x128xbf16, #tpu.memory_space<vmem>>, vector<128x128xbf16>
    %cst = arith.constant dense<0.000000e+00> : vector<32x128xf32>
    %6 = tpu.matmul %4, %5, %cst {dimension_numbers = #tpu.dot_dimension_numbers<[1], [0], [0], [1], [0, 0, 1, 1], [], []>} : vector<32x128xbf16>, vector<128x128xbf16>, vector<32x128xf32> -> vector<32x128xf32>
    %7 = arith.addf %3, %6 : vector<32x128xf32>
    %c0_6 = arith.constant 0 : index
    %c0_7 = arith.constant 0 : index
    %8 = vector.load %arg7[%c0_6, %c0_7] : memref<32x128xf32, #tpu.memory_space<vmem>>, vector<32x128xf32>
    tpu.vector_store %arg7[%c0_6, %c0_7], %7 {strides = array<i32>} : memref<32x128xf32, #tpu.memory_space<vmem>>, vector<32x128xf32>,
    %c0_i32_8 = arith.constant 0 : i32
    %9 = arith.cmpi eq, %arg2, %c0_i32_8 : i32
    %10 = arith.extui %9 : i1 to i32
    %c0_i32_9 = arith.constant 0 : i32
    %11 = arith.cmpi ne, %10, %c0_i32_9 : i32
    scf.if %11 {
      %c0_10 = arith.constant 0 : index
      %c0_11 = arith.constant 0 : index
      %12 = vector.load %arg7[%c0_10, %c0_11] : memref<32x128xf32, #tpu.memory_space<vmem>>, vector<32x128xf32>
      %c0_12 = arith.constant 0 : index
      %c0_13 = arith.constant 0 : index
      %13 = vector.load %arg5[%c0_12, %c0_13] : memref<1x128xf32, #tpu.memory_space<vmem>>, vector<1x128xf32>
      %14 = vector.broadcast %13 : vector<1x128xf32> to vector<32x128xf32>
      %15 = arith.addf %12, %14 : vector<32x128xf32>
      %16 = arith.mulf %15, %15 : vector<32x128xf32>
      %17 = arith.mulf %15, %16 : vector<32x128xf32>
      %cst_14 = arith.constant 4.471500e-02 : f32
      %18 = vector.broadcast %cst_14 : f32 to vector<32x128xf32>
      %19 = arith.mulf %18, %17 : vector<32x128xf32>
      %20 = arith.addf %15, %19 : vector<32x128xf32>
      %cst_15 = arith.constant 0.797884583 : f32
      %21 = vector.broadcast %cst_15 : f32 to vector<32x128xf32>
      %22 = arith.mulf %21, %20 : vector<32x128xf32>
      %23 = math.tanh %22 : vector<32x128xf32>
      %cst_16 = arith.constant 1.000000e+00 : f32
      %24 = vector.broadcast %cst_16 : f32 to vector<32x128xf32>
      %25 = arith.addf %24, %23 : vector<32x128xf32>
      %cst_17 = arith.constant 5.000000e-01 : f32
      %26 = vector.broadcast %cst_17 : f32 to vector<32x128xf32>
      %27 = arith.mulf %26, %25 : vector<32x128xf32>
      %28 = arith.mulf %15, %27 : vector<32x128xf32>
      %c0_18 = arith.constant 0 : index
      %c0_19 = arith.constant 0 : index
      %29 = vector.load %arg6[%c0_18, %c0_19] : memref<32x128xf32, #tpu.memory_space<vmem>>, vector<32x128xf32>
      tpu.vector_store %arg6[%c0_18, %c0_19], %28 {strides = array<i32>} : memref<32x128xf32, #tpu.memory_space<vmem>>, vector<32x128xf32>,
    } else {
    }
    return
  }
  func.func @transform_0(%arg0: i32, %arg1: i32, %arg2: i32) -> (i32, i32) {
    %c0_i32 = arith.constant 0 : i32
    return %arg0, %arg2 : i32, i32
  }
  func.func @transform_1(%arg0: i32, %arg1: i32, %arg2: i32) -> (i32, i32) {
    %c0_i32 = arith.constant 0 : i32
    return %arg2, %arg1 : i32, i32
  }
  func.func @transform_2(%arg0: i32, %arg1: i32, %arg2: i32) -> (i32, i32) {
    %c0_i32 = arith.constant 0 : i32
    %c0_i32_0 = arith.constant 0 : i32
    return %c0_i32, %arg1 : i32, i32
  }
  func.func @transform_3(%arg0: i32, %arg1: i32, %arg2: i32) -> (i32, i32) {
    %c0_i32 = arith.constant 0 : i32
    return %arg0, %arg1 : i32, i32
  }
}

</mosaic_0001>

<llo_original>
// kernel: bart_speech_ner_forward.33
$region0: #{bart_speech_ner_forward.33}
  #allocation0 [shape = 'u32[]', space=smem, size = 0x4, offset = 0x4, fixed_abs, tag = 'smem constant byte address 0x4 - core index']
  #allocation1 [shape = 'u32[144,128]{1,0:T(1,128)}', space=vmem, size = 0x12000, scoped, tag = 'internal scratch']
  %s0 = inlined_call_operand.hbm [shape: f32[128,80], index: 0, kind: input, shape index: {}]
  %s1 = inlined_call_operand.hbm [shape: f32[1,80], index: 1, kind: input, shape index: {}]
  %s2 = inlined_call_operand.hbm [shape: f32[1,80], index: 2, kind: input, shape index: {}]
  %s3 = inlined_call_operand.vmem [shape: f32[128,80], index: 3, kind: output, shape index: {}]
  %s4 = sld [smem:[#allocation0]]
  $region34: #{bart_speech_ner_forward.33} parent=0
    _
  %s6 = ssub.s32 1, %s4
  %s7 = scalar_select 0, %s6, %s4
  $region1: #{bart_speech_ner_forward.33} parent=0
    #allocation2 [shape = 'u8[65536]{0}', space=vmem, size = 0x10000, scoped, tag = 'input window, operand 0, single buffered']
    #allocation3 [shape = 's32[1]{0}', space=sflag, size = 0x4, scoped, tag = 'scoped memory for bart_speech_ner_forward.33']
    #allocation4 [shape = 'u8[512]{0}', space=vmem, size = 0x400, scoped, tag = 'input window, operand 1, single buffered']
    #allocation5 [shape = 's32[1]{0}', space=sflag, size = 0x4, scoped, tag = 'scoped memory for bart_speech_ner_forward.33']
    #allocation6 [shape = 'u8[512]{0}', space=vmem, size = 0x400, scoped, tag = 'input window, operand 2, single buffered']
    %8 = vsyncpa [#allocation3], 0
    %9 = vsyncpa [#allocation5], 0
    // Predicated region
    $region2: #{bart_speech_ner_forward.33} parent=1 // pred_check
      _
    $region3: #{bart_speech_ner_forward.33} parent=1 // pred_check_branch
      %11 = sbr.rel (0) target = $region5
    $region4: #{bart_speech_ner_forward.33} parent=1 // pred_region
      %s13 = ssub.s32 2048, 2048
      %14 = vsyncadd [#allocation3], %s13
      %s15 = sshll.u32 [#allocation2], 4
      %s16 = int_to_ptr.vmem [resolvable:$true] %s15
      %21 = dma.hbm_to_vmem [thread:$0]  %s0, 2048, %s16, [#allocation3], 128, 128, 8
    $region5: #{bart_speech_ner_forward.33} parent=1 // pred_fallthru
      _
    // Predicated region
    $region6: #{bart_speech_ner_forward.33} parent=1 // pred_check
      _
    $region7: #{bart_speech_ner_forward.33} parent=1 // pred_check_branch
      %23 = sbr.rel (0) target = $region9
    $region8: #{bart_speech_ner_forward.33} parent=1 // pred_region
      %s25 = ssub.s32 16, 16
      %26 = vsyncadd [#allocation5], %s25
      %s28 = sshll.u32 [#allocation4], 4
      %s29 = int_to_ptr.vmem [resolvable:$true] %s28
      %31 = dma.hbm_to_vmem [thread:$0]  %s1, 16, %s29, [#allocation5]
    $region9: #{bart_speech_ner_forward.33} parent=1 // pred_fallthru
      _
    // Predicated region
    $region10: #{bart_speech_ner_forward.33} parent=1 // pred_check
      _
    $region11: #{bart_speech_ner_forward.33} parent=1 // pred_check_branch
      %33 = sbr.rel (0) target = $region13
    $region12: #{bart_speech_ner_forward.33} parent=1 // pred_region
      %s35 = ssub.s32 16, 16
      %36 = vsyncadd [#allocation5], %s35
      %s38 = sshll.u32 [#allocation6], 4
      %s39 = int_to_ptr.vmem [resolvable:$true] %s38
      %41 = dma.hbm_to_vmem [thread:$0]  %s2, 16, %s39, [#allocation5]
    $region13: #{bart_speech_ner_forward.33} parent=1 // pred_fallthru
      _
    // Predicated region
    $region14: #{bart_speech_ner_forward.33} parent=1 // pred_check
      _
    $region15: #{bart_speech_ner_forward.33} parent=1 // pred_check_branch
      %43 = sbr.rel (0) target = $region17
    $region16: #{bart_speech_ner_forward.33} parent=1 // pred_region
      %44 = dma.done [#allocation3], 2048
    $region17: #{bart_speech_ner_forward.33} parent=1 // pred_fallthru
      _
    // Predicated region
    $region18: #{bart_speech_ner_forward.33} parent=1 // pred_check
      _
    $region19: #{bart_speech_ner_forward.33} parent=1 // pred_check_branch
      %46 = sbr.rel (0) target = $region21
    $region20: #{bart_speech_ner_forward.33} parent=1 // pred_region
      %47 = dma.done [#allocation5], 16
    $region21: #{bart_speech_ner_forward.33} parent=1 // pred_fallthru
      _
    // Predicated region
    $region22: #{bart_speech_ner_forward.33} parent=1 // pred_check
      _
    $region23: #{bart_speech_ner_forward.33} parent=1 // pred_check_branch
      %49 = sbr.rel (0) target = $region25
    $region24: #{bart_speech_ner_forward.33} parent=1 // pred_region
      %50 = dma.done [#allocation5], 16
    $region25: #{bart_speech_ner_forward.33} parent=1 // pred_fallthru
      _
    %v51 = vld [vmem:[#allocation2] sm:$0xff]
    %v52 = vld [vmem:[#allocation2 + $0x8] sm:$0xff]
    %v53 = vld [vmem:[#allocation2 + $0x10] sm:$0xff]
    %v54 = vld [vmem:[#allocation2 + $0x18] sm:$0xff]
    %v55 = vld [vmem:[#allocation2 + $0x20] sm:$0xff]
    %v56 = vld [vmem:[#allocation2 + $0x28] sm:$0xff]
    %v57 = vld [vmem:[#allocation2 + $0x30] sm:$0xff]
    %v58 = vld [vmem:[#allocation2 + $0x38] sm:$0xff]
    %v59 = vld [vmem:[#allocation2 + $0x40] sm:$0xff]
    %v60 = vld [vmem:[#allocation2 + $0x48] sm:$0xff]
    %v61 = vld [vmem:[#allocation2 + $0x50] sm:$0xff]
    %v62 = vld [vmem:[#allocation2 + $0x58] sm:$0xff]
    %v63 = vld [vmem:[#allocation2 + $0x60] sm:$0xff]
    %v64 = vld [vmem:[#allocation2 + $0x68] sm:$0xff]
    %v65 = vld [vmem:[#allocation2 + $0x70] sm:$0xff]
    %v66 = vld [vmem:[#allocation2 + $0x78] sm:$0xff]
    %v67 = vld [vmem:[#allocation4] sm:$0x1]
    %v69 = vlaneseq
    %v70 = vshrl.u32 %v69, 7
    %v71 = vsub.s32 0, %v70
    %v72 = vrot.slane %v67, %v71
    %v74 = vsub.f32 %v51, %v72
    %v75 = vsub.f32 %v52, %v72
    %v76 = vsub.f32 %v53, %v72
    %v77 = vsub.f32 %v54, %v72
    %v78 = vsub.f32 %v55, %v72
    %v79 = vsub.f32 %v56, %v72
    %v80 = vsub.f32 %v57, %v72
    %v81 = vsub.f32 %v58, %v72
    %v82 = vsub.f32 %v59, %v72
    %v83 = vsub.f32 %v60, %v72
    %v84 = vsub.f32 %v61, %v72
    %v85 = vsub.f32 %v62, %v72
    %v86 = vsub.f32 %v63, %v72
    %v87 = vsub.f32 %v64, %v72
    %v88 = vsub.f32 %v65, %v72
    %v89 = vsub.f32 %v66, %v72
    %v90 = vld [vmem:[#allocation6] sm:$0x1]
    %v92 = vlaneseq
    %v93 = vshrl.u32 %v92, 7
    %v94 = vsub.s32 0, %v93
    %v95 = vrot.slane %v90, %v94
    %v97 = vmul.f32 %v74, %v95
    %v98 = vmul.f32 %v75, %v95
    %v99 = vmul.f32 %v76, %v95
    %v100 = vmul.f32 %v77, %v95
    %v101 = vmul.f32 %v78, %v95
    %v102 = vmul.f32 %v79, %v95
    %v103 = vmul.f32 %v80, %v95
    %v104 = vmul.f32 %v81, %v95
    %v105 = vmul.f32 %v82, %v95
    %v106 = vmul.f32 %v83, %v95
    %v107 = vmul.f32 %v84, %v95
    %v108 = vmul.f32 %v85, %v95
    %v109 = vmul.f32 %v86, %v95
    %v110 = vmul.f32 %v87, %v95
    %v111 = vmul.f32 %v88, %v95
    %v112 = vmul.f32 %v89, %v95
    %vm113 = vcmask 654336
    %114 = vst.msk [vmem:[%s3] sm:$0xff] %vm113, %v97
    %115 = vst.msk [vmem:[%s3 + $0x8] sm:$0xff] %vm113, %v98
    %116 = vst.msk [vmem:[%s3 + $0x10] sm:$0xff] %vm113, %v99
    %117 = vst.msk [vmem:[%s3 + $0x18] sm:$0xff] %vm113, %v100
    %118 = vst.msk [vmem:[%s3 + $0x20] sm:$0xff] %vm113, %v101
    %119 = vst.msk [vmem:[%s3 + $0x28] sm:$0xff] %vm113, %v102
    %120 = vst.msk [vmem:[%s3 + $0x30] sm:$0xff] %vm113, %v103
    %121 = vst.msk [vmem:[%s3 + $0x38] sm:$0xff] %vm113, %v104
    %122 = vst.msk [vmem:[%s3 + $0x40] sm:$0xff] %vm113, %v105
    %123 = vst.msk [vmem:[%s3 + $0x48] sm:$0xff] %vm113, %v106
    %124 = vst.msk [vmem:[%s3 + $0x50] sm:$0xff] %vm113, %v107
    %125 = vst.msk [vmem:[%s3 + $0x58] sm:$0xff] %vm113, %v108
    %126 = vst.msk [vmem:[%s3 + $0x60] sm:$0xff] %vm113, %v109
    %127 = vst.msk [vmem:[%s3 + $0x68] sm:$0xff] %vm113, %v110
    %128 = vst.msk [vmem:[%s3 + $0x70] sm:$0xff] %vm113, %v111
    %129 = vst.msk [vmem:[%s3 + $0x78] sm:$0xff] %vm113, %v112
    // Predicated region
    $region26: #{bart_speech_ner_forward.33} parent=1 // pred_check
      _
    $region27: #{bart_speech_ner_forward.33} parent=1 // pred_check_branch
      %131 = sbr.rel (0) target = $region29
    $region28: #{bart_speech_ner_forward.33} parent=1 // pred_region
      _
    $region29: #{bart_speech_ner_forward.33} parent=1 // pred_fallthru
      _
    // Predicated region
    $region30: #{bart_speech_ner_forward.33} parent=1 // pred_check
      _
    $region31: #{bart_speech_ner_forward.33} parent=1 // pred_check_branch
      %133 = sbr.rel (0) target = $region33
    $region32: #{bart_speech_ner_forward.33} parent=1 // pred_region
      _
    $region33: #{bart_speech_ner_forward.33} parent=1 // pred_fallthru
      _
    %134 = vsyncpa [#allocation3], 1
    %135 = vsyncpa [#allocation5], 1

// kernel: bart_speech_ner_forward.34
$region0: #{bart_speech_ner_forward.34}
  #allocation0 [shape = 'u32[]', space=smem, size = 0x4, offset = 0x4, fixed_abs, tag = 'smem constant byte address 0x4 - core index']
  #allocation1 [shape = 'u32[144,128]{1,0:T(1,128)}', space=vmem, size = 0x12000, scoped, tag = 'internal scratch']
  #allocation2 [shape = 'f32[256,128]{1,0:T(8,128)}', space=vmem, size = 0x20000, scoped, tag = 'scratch operand']
  %s0 = inlined_call_operand.vmem [shape: bf16[2560,128], index: 0, kind: input, shape index: {}]
  %s1 = inlined_call_operand.vmem [shape: bf16[128,128], index: 1, kind: input, shape index: {}]
  %s2 = inlined_call_operand.vmem [shape: f32[1,128], index: 2, kind: input, shape index: {}]
  %s3 = inlined_call_operand.vmem [shape: f32[2560,128], index: 3, kind: output, shape index: {}]
  %s4 = sld [smem:[#allocation0]]
  $region53: #{bart_speech_ner_forward.34} parent=0
    _
  %s6 = ssub.s32 1, %s4
  %s7 = scalar_select 0, %s6, %s4
  loop: start=0, step=1, limit=12
  $region2: #{bart_speech_ner_forward.34} parent=0 // loop_pre_header
    _
  $region3: #{bart_speech_ner_forward.34} parent=0 // loop_header
    %s9 = sphi 0, %s13
    %p10 = scmp.ge.s32.totalorder %s9, 12
    %s16 = sphi 0, %s35
    %s17 = sphi 0, %s31
    %s18 = sphi 0, %s27
    %s19 = sphi 0, %s16
    %s20 = sphi 0, %s17
    %s21 = sphi 0, %s18
    %s22 = sphi 0, %s19
    %s23 = sphi 0, %s20
    %s24 = sphi 0, %s21
    %s40 = sphi 0, %s42
    %s43 = sphi 0, %s40
    %s44 = sphi 0, %s43
    %s60 = sphi 0, %s44
    %s68 = sphi 0, %s70
    %s71 = sphi 0, %s68
    %s72 = sphi 0, %s71
    %s88 = sphi 0, %s72
    %s94 = sphi 0, %s96
    %s97 = sphi 0, %s94
    %s98 = sphi 0, %s97
    %s114 = sphi 0, %s98
    %s122 = sphi 0, %s124
    %s125 = sphi 0, %s122
    %s126 = sphi 0, %s125
    %s142 = sphi 0, %s126
  $region4: #{bart_speech_ner_forward.34} parent=0 // loop_header_branch
    %12 = sbr.rel (%p10) target = $region8
  $region5: #{bart_speech_ner_forward.34} parent=0 // loop_body
    %s14 = ssub.s32 %s9, 1
    %s15 = ssub.s32 %s9, 2
    %s25 = sadd.s32 1, %s18
    %p26 = scmp.ge.s32.totalorder %s25, 1
    %s27 = scalar_select %p26, 0, %s25
    %s28 = sadd.s32 1, %s17
    %s29 = scalar_select %p26, %s28, %s17
    %p30 = scmp.ge.s32.totalorder %s29, 1
    %s31 = scalar_select %p30, 0, %s29
    %s32 = sadd.s32 1, %s16
    %s33 = scalar_select %p30, %s32, %s16
    %p34 = scmp.ge.s32.totalorder %s33, 10
    %s35 = scalar_select %p34, 0, %s33
    %s36 = ssub.s32 %s16, %s35
    %s37 = ssub.s32 %s18, %s27
    %s38 = sor.u32 %s36, %s37
    %p39 = scmp.eq.s32.totalorder %s38, 0
    %s41 = sadd.s32 %s40, 1
    %s42 = scalar_select %p39, %s40, %s41
    %p45 = pneg %p39
    %p46 = scmp.eq.s32.totalorder %s9, 9
    %p47 = por %p45, %p46
    %p48 = scmp.ne.s32.totalorder %s40, %s43
    %p49 = scmp.eq.s32.totalorder %s9, 0
    %p50 = por %p48, %p49
    %p51 = scmp.ne.s32.totalorder %s40, %s43
    %p52 = scmp.eq.s32.totalorder %s14, 9
    %p53 = por %p51, %p52
    %p54 = scmp.ne.s32.totalorder %s43, %s44
    %p55 = scmp.eq.s32.totalorder %s14, 0
    %p56 = por %p54, %p55
    %p57 = scmp.ne.s32.totalorder %s43, %s44
    %p58 = scmp.eq.s32.totalorder %s15, 9
    %p59 = por %p57, %p58
    %p61 = scmp.ne.s32.totalorder %s44, %s60
    %p62 = scmp.eq.s32.totalorder %s15, 0
    %p63 = por %p61, %p62
    %s64 = ssub.s32 %s18, %s27
    %s65 = ssub.s32 %s17, %s31
    %s66 = sor.u32 %s64, %s65
    %p67 = scmp.eq.s32.totalorder %s66, 0
    %s69 = sadd.s32 %s68, 1
    %s70 = scalar_select %p67, %s68, %s69
    %p73 = pneg %p67
    %p74 = scmp.eq.s32.totalorder %s9, 9
    %p75 = por %p73, %p74
    %p76 = scmp.ne.s32.totalorder %s68, %s71
    %p77 = scmp.eq.s32.totalorder %s9, 0
    %p78 = por %p76, %p77
    %p79 = scmp.ne.s32.totalorder %s68, %s71
    %p80 = scmp.eq.s32.totalorder %s14, 9
    %p81 = por %p79, %p80
    %p82 = scmp.ne.s32.totalorder %s71, %s72
    %p83 = scmp.eq.s32.totalorder %s14, 0
    %p84 = por %p82, %p83
    %p85 = scmp.ne.s32.totalorder %s71, %s72
    %p86 = scmp.eq.s32.totalorder %s15, 9
    %p87 = por %p85, %p86
    %p89 = scmp.ne.s32.totalorder %s72, %s88
    %p90 = scmp.eq.s32.totalorder %s15, 0
    %p91 = por %p89, %p90
    %s92 = ssub.s32 %s17, %s31
    %p93 = scmp.eq.s32.totalorder %s92, 0
    %s95 = sadd.s32 %s94, 1
    %s96 = scalar_select %p93, %s94, %s95
    %p99 = pneg %p93
    %p100 = scmp.eq.s32.totalorder %s9, 9
    %p101 = por %p99, %p100
    %p102 = scmp.ne.s32.totalorder %s94, %s97
    %p103 = scmp.eq.s32.totalorder %s9, 0
    %p104 = por %p102, %p103
    %p105 = scmp.ne.s32.totalorder %s94, %s97
    %p106 = scmp.eq.s32.totalorder %s14, 9
    %p107 = por %p105, %p106
    %p108 = scmp.ne.s32.totalorder %s97, %s98
    %p109 = scmp.eq.s32.totalorder %s14, 0
    %p110 = por %p108, %p109
    %p111 = scmp.ne.s32.totalorder %s97, %s98
    %p112 = scmp.eq.s32.totalorder %s15, 9
    %p113 = por %p111, %p112
    %p115 = scmp.ne.s32.totalorder %s98, %s114
    %p116 = scmp.eq.s32.totalorder %s15, 0
    %p117 = por %p115, %p116
    %s118 = ssub.s32 %s16, %s35
    %s119 = ssub.s32 %s17, %s31
    %s120 = sor.u32 %s118, %s119
    %p121 = scmp.eq.s32.totalorder %s120, 0
    %s123 = sadd.s32 %s122, 1
    %s124 = scalar_select %p121, %s122, %s123
    %p127 = pneg %p121
    %p128 = scmp.eq.s32.totalorder %s9, 9
    %p129 = por %p127, %p128
    %p130 = scmp.ne.s32.totalorder %s122, %s125
    %p131 = scmp.eq.s32.totalorder %s9, 0
    %p132 = por %p130, %p131
    %p133 = scmp.ne.s32.totalorder %s122, %s125
    %p134 = scmp.eq.s32.totalorder %s14, 9
    %p135 = por %p133, %p134
    %p136 = scmp.ne.s32.totalorder %s125, %s126
    %p137 = scmp.eq.s32.totalorder %s14, 0
    %p138 = por %p136, %p137
    %p139 = scmp.ne.s32.totalorder %s125, %s126
    %p140 = scmp.eq.s32.totalorder %s15, 9
    %p141 = por %p139, %p140
    %p143 = scmp.ne.s32.totalorder %s126, %s142
    %p144 = scmp.eq.s32.totalorder %s15, 0
    %p145 = por %p143, %p144
    %p146 = scmp.le.s32.totalorder 1, %s9
    %p147 = scmp.lt.s32.totalorder %s9, 11
    %p148 = pnand %p146, %p147
    %p149 = pneg %p148
    // Predicated region
    $region9: #{bart_speech_ner_forward.34} parent=5 // pred_check
      _
    $region10: #{bart_speech_ner_forward.34} parent=5 // pred_check_branch
      %151 = sbr.rel (%p148) target = $region12
    $region11: #{bart_speech_ner_forward.34} parent=5 // pred_region
      %s152 = ssub.s32 %s9, 1
      // Predicated region
      $region13: #{bart_speech_ner_forward.34} parent=11 // pred_check
        %p153 = pneg %p84
      $region14: #{bart_speech_ner_forward.34} parent=11 // pred_check_branch
        %155 = sbr.rel (%p153) target = $region16
      $region15: #{bart_speech_ner_forward.34} parent=11 // pred_region
        %s156 = smul.u32 16, %s21
        %p157 = scmp.lt.s32.totalorder %s156, 15
        %s158 = scalar_select %p157, %s156, 15
        %p159 = scmp.lt.s32.totalorder %s20, 0
        %s160 = scalar_select %p159, %s20, 0
        %s161 = sadd.s32 %s160, %s158
        %s162 = smul.addr %s161, 4
        %s163 = scalar_lea.vmem %s1, %s162
        %s164 = smul.u32 16, %s21
      $region16: #{bart_speech_ner_forward.34} parent=11 // pred_fallthru
        _
      // Predicated region
      $region17: #{bart_speech_ner_forward.34} parent=11 // pred_check
        %p165 = pneg %p110
      $region18: #{bart_speech_ner_forward.34} parent=11 // pred_check_branch
        %167 = sbr.rel (%p165) target = $region20
      $region19: #{bart_speech_ner_forward.34} parent=11 // pred_region
        %p168 = scmp.lt.s32.totalorder %s20, 0
        %s169 = scalar_select %p168, %s20, 0
        %s170 = scalar_lea.vmem %s2, %s169
      $region20: #{bart_speech_ner_forward.34} parent=11 // pred_fallthru
        _
    $region12: #{bart_speech_ner_forward.34} parent=5 // pred_fallthru
      _
    %p171 = scmp.lt.s32.totalorder %s9, 10
    // Predicated region
    $region21: #{bart_speech_ner_forward.34} parent=5 // pred_check
      %p172 = pneg %p171
    $region22: #{bart_speech_ner_forward.34} parent=5 // pred_check_branch
      %174 = sbr.rel (%p172) target = $region24
    $region23: #{bart_speech_ner_forward.34} parent=5 // pred_region
      // Predicated region
      $region25: #{bart_speech_ner_forward.34} parent=23 // pred_check
        %p175 = pneg %p50
      $region26: #{bart_speech_ner_forward.34} parent=23 // pred_check_branch
        %177 = sbr.rel (%p175) target = $region28
      $region27: #{bart_speech_ner_forward.34} parent=23 // pred_region
        %s178 = smul.u32 32, %s16
        %p179 = scmp.lt.s32.totalorder %s178, 319
        %s180 = scalar_select %p179, %s178, 319
        %p181 = scmp.lt.s32.totalorder %s18, 0
        %s182 = scalar_select %p181, %s18, 0
        %s183 = sadd.s32 %s182, %s180
        %s184 = smul.addr %s183, 4
        %s185 = scalar_lea.vmem %s0, %s184
        %s186 = smul.u32 32, %s16
      $region28: #{bart_speech_ner_forward.34} parent=23 // pred_fallthru
        _
    $region24: #{bart_speech_ner_forward.34} parent=5 // pred_fallthru
      _
    %p187 = scmp.le.s32.totalorder 1, %s9
    %p188 = scmp.lt.s32.totalorder %s9, 11
    %p189 = pnand %p187, %p188
    %p190 = pneg %p189
    // Predicated region
    $region29: #{bart_speech_ner_forward.34} parent=5 // pred_check
      _
    $region30: #{bart_speech_ner_forward.34} parent=5 // pred_check_branch
      %192 = sbr.rel (%p189) target = $region32
    $region31: #{bart_speech_ner_forward.34} parent=5 // pred_region
      %s193 = ssub.s32 %s9, 1
      %s194 = smul.u32 32, %s19
      %p195 = scmp.lt.s32.totalorder %s194, 319
      %s196 = scalar_select %p195, %s194, 319
      %p197 = scmp.lt.s32.totalorder %s21, 0
      %s198 = scalar_select %p197, %s21, 0
      %s199 = sadd.s32 %s198, %s196
      %s200 = smul.addr %s199, 4
      %s201 = scalar_lea.vmem %s0, %s200
      %p202 = pneg %p56
      %p203 = pneg %p53
      %s204 = smul.u32 16, %s21
      %p205 = scmp.lt.s32.totalorder %s204, 15
      %s206 = scalar_select %p205, %s204, 15
      %p207 = scmp.lt.s32.totalorder %s20, 0
      %s208 = scalar_select %p207, %s20, 0
      %s209 = sadd.s32 %s208, %s206
      %s210 = smul.addr %s209, 4
      %s211 = scalar_lea.vmem %s1, %s210
      %p212 = pneg %p84
      %p213 = pneg %p81
      %p214 = scmp.lt.s32.totalorder %s20, 0
      %s215 = scalar_select %p214, %s20, 0
      %s216 = scalar_lea.vmem %s2, %s215
      %p217 = pneg %p110
      %p218 = pneg %p107
      %p219 = pneg %p138
      %p220 = pneg %p135
      %s221 = smul.u32 32, %s19
      %p222 = scmp.lt.s32.totalorder %s221, 319
      %s223 = scalar_select %p222, %s221, 319
      %p224 = scmp.lt.s32.totalorder %s20, 0
      %s225 = scalar_select %p224, %s20, 0
      %s226 = sadd.s32 %s225, %s223
      %s227 = smul.addr %s226, 8
      %s228 = scalar_lea.vmem %s3, %s227
      %s229 = smul.u32 32, %s19
      %p230 = scmp.lt.s32.totalorder %s229, 319
      %s231 = scalar_select %p230, %s229, 319
      %p232 = scmp.lt.s32.totalorder %s21, 0
      %s233 = scalar_select %p232, %s21, 0
      %s234 = sadd.s32 %s233, %s231
      %s235 = smul.addr %s234, 4
      %s236 = scalar_lea.vmem %s0, %s235
      %s237 = smul.u32 32, %s19
      %s238 = smul.u32 16, %s21
      %p239 = scmp.lt.s32.totalorder %s238, 15
      %s240 = scalar_select %p239, %s238, 15
      %p241 = scmp.lt.s32.totalorder %s20, 0
      %s242 = scalar_select %p241, %s20, 0
      %s243 = sadd.s32 %s242, %s240
      %s244 = smul.addr %s243, 4
      %s245 = scalar_lea.vmem %s1, %s244
      %s246 = smul.u32 16, %s21
      %p247 = scmp.lt.s32.totalorder %s20, 0
      %s248 = scalar_select %p247, %s20, 0
      %s249 = scalar_lea.vmem %s2, %s248
      %s250 = smul.u32 32, %s19
      %p251 = scmp.lt.s32.totalorder %s250, 319
      %s252 = scalar_select %p251, %s250, 319
      %p253 = scmp.lt.s32.totalorder %s20, 0
      %s254 = scalar_select %p253, %s20, 0
      %s255 = sadd.s32 %s254, %s252
      %s256 = smul.addr %s255, 8
      %s257 = scalar_lea.vmem %s3, %s256
      %s258 = smul.u32 32, %s19
      %p260 = scmp.eq.s32.totalorder %s21, 0
      // Predicated region
      $region33: #{bart_speech_ner_forward.34} parent=31 // pred_check
        %p261 = pneg %p260
      $region34: #{bart_speech_ner_forward.34} parent=31 // pred_check_branch
        %263 = sbr.rel (%p261) target = $region36
      $region35: #{bart_speech_ner_forward.34} parent=31 // pred_region
        %264 = vst [vmem:[#allocation2] sm:$0xff] 0.0
        %265 = vst [vmem:[#allocation2 + $0x8] sm:$0xff] 0.0
        %266 = vst [vmem:[#allocation2 + $0x10] sm:$0xff] 0.0
        %267 = vst [vmem:[#allocation2 + $0x18] sm:$0xff] 0.0
        %268 = vst [vmem:[#allocation2 + $0x20] sm:$0xff] 0.0
        %269 = vst [vmem:[#allocation2 + $0x28] sm:$0xff] 0.0
        %270 = vst [vmem:[#allocation2 + $0x30] sm:$0xff] 0.0
        %271 = vst [vmem:[#allocation2 + $0x38] sm:$0xff] 0.0
        %272 = vst [vmem:[#allocation2 + $0x40] sm:$0xff] 0.0
        %273 = vst [vmem:[#allocation2 + $0x48] sm:$0xff] 0.0
        %274 = vst [vmem:[#allocation2 + $0x50] sm:$0xff] 0.0
        %275 = vst [vmem:[#allocation2 + $0x58] sm:$0xff] 0.0
        %276 = vst [vmem:[#allocation2 + $0x60] sm:$0xff] 0.0
        %277 = vst [vmem:[#allocation2 + $0x68] sm:$0xff] 0.0
        %278 = vst [vmem:[#allocation2 + $0x70] sm:$0xff] 0.0
        %279 = vst [vmem:[#allocation2 + $0x78] sm:$0xff] 0.0
        %280 = vst [vmem:[#allocation2 + $0x80] sm:$0xff] 0.0
        %281 = vst [vmem:[#allocation2 + $0x88] sm:$0xff] 0.0
        %282 = vst [vmem:[#allocation2 + $0x90] sm:$0xff] 0.0
        %283 = vst [vmem:[#allocation2 + $0x98] sm:$0xff] 0.0
        %284 = vst [vmem:[#allocation2 + $0xa0] sm:$0xff] 0.0
        %285 = vst [vmem:[#allocation2 + $0xa8] sm:$0xff] 0.0
        %286 = vst [vmem:[#allocation2 + $0xb0] sm:$0xff] 0.0
        %287 = vst [vmem:[#allocation2 + $0xb8] sm:$0xff] 0.0
        %288 = vst [vmem:[#allocation2 + $0xc0] sm:$0xff] 0.0
        %289 = vst [vmem:[#allocation2 + $0xc8] sm:$0xff] 0.0
        %290 = vst [vmem:[#allocation2 + $0xd0] sm:$0xff] 0.0
        %291 = vst [vmem:[#allocation2 + $0xd8] sm:$0xff] 0.0
        %292 = vst [vmem:[#allocation2 + $0xe0] sm:$0xff] 0.0
        %293 = vst [vmem:[#allocation2 + $0xe8] sm:$0xff] 0.0
        %294 = vst [vmem:[#allocation2 + $0xf0] sm:$0xff] 0.0
        %295 = vst [vmem:[#allocation2 + $0xf8] sm:$0xff] 0.0
      $region36: #{bart_speech_ner_forward.34} parent=31 // pred_fallthru
        _
      %v296 = vld [vmem:[#allocation2] sm:$0xff]
      %v297 = vld [vmem:[#allocation2 + $0x8] sm:$0xff]
      %v298 = vld [vmem:[#allocation2 + $0x10] sm:$0xff]
      %v299 = vld [vmem:[#allocation2 + $0x18] sm:$0xff]
      %v300 = vld [vmem:[#allocation2 + $0x20] sm:$0xff]
      %v301 = vld [vmem:[#allocation2 + $0x28] sm:$0xff]
      %v302 = vld [vmem:[#allocation2 + $0x30] sm:$0xff]
      %v303 = vld [vmem:[#allocation2 + $0x38] sm:$0xff]
      %v304 = vld [vmem:[#allocation2 + $0x40] sm:$0xff]
      %v305 = vld [vmem:[#allocation2 + $0x48] sm:$0xff]
      %v306 = vld [vmem:[#allocation2 + $0x50] sm:$0xff]
      %v307 = vld [vmem:[#allocation2 + $0x58] sm:$0xff]
      %v308 = vld [vmem:[#allocation2 + $0x60] sm:$0xff]
      %v309 = vld [vmem:[#allocation2 + $0x68] sm:$0xff]
      %v310 = vld [vmem:[#allocation2 + $0x70] sm:$0xff]
      %v311 = vld [vmem:[#allocation2 + $0x78] sm:$0xff]
      %v312 = vld [vmem:[#allocation2 + $0x80] sm:$0xff]
      %v313 = vld [vmem:[#allocation2 + $0x88] sm:$0xff]
      %v314 = vld [vmem:[#allocation2 + $0x90] sm:$0xff]
      %v315 = vld [vmem:[#allocation2 + $0x98] sm:$0xff]
      %v316 = vld [vmem:[#allocation2 + $0xa0] sm:$0xff]
      %v317 = vld [vmem:[#allocation2 + $0xa8] sm:$0xff]
      %v318 = vld [vmem:[#allocation2 + $0xb0] sm:$0xff]
      %v319 = vld [vmem:[#allocation2 + $0xb8] sm:$0xff]
      %v320 = vld [vmem:[#allocation2 + $0xc0] sm:$0xff]
      %v321 = vld [vmem:[#allocation2 + $0xc8] sm:$0xff]
      %v322 = vld [vmem:[#allocation2 + $0xd0] sm:$0xff]
      %v323 = vld [vmem:[#allocation2 + $0xd8] sm:$0xff]
      %v324 = vld [vmem:[#allocation2 + $0xe0] sm:$0xff]
      %v325 = vld [vmem:[#allocation2 + $0xe8] sm:$0xff]
      %v326 = vld [vmem:[#allocation2 + $0xf0] sm:$0xff]
      %v327 = vld [vmem:[#allocation2 + $0xf8] sm:$0xff]
      %v328 = vld [vmem:[%s236] sm:$0xf]
      %v329 = vld [vmem:[%s236 + $0x4] sm:$0xf]
      %v330 = vld [vmem:[%s236 + $0x8] sm:$0xf]
      %v331 = vld [vmem:[%s236 + $0xc] sm:$0xf]
      %v332 = vld [vmem:[%s236 + $0x10] sm:$0xf]
      %v333 = vld [vmem:[%s236 + $0x14] sm:$0xf]
      %v334 = vld [vmem:[%s236 + $0x18] sm:$0xf]
      %v335 = vld [vmem:[%s236 + $0x1c] sm:$0xf]
      %v336 = vld [vmem:[%s236 + $0x20] sm:$0xf]
      %v337 = vld [vmem:[%s236 + $0x24] sm:$0xf]
      %v338 = vld [vmem:[%s236 + $0x28] sm:$0xf]
      %v339 = vld [vmem:[%s236 + $0x2c] sm:$0xf]
      %v340 = vld [vmem:[%s236 + $0x30] sm:$0xf]
      %v341 = vld [vmem:[%s236 + $0x34] sm:$0xf]
      %v342 = vld [vmem:[%s236 + $0x38] sm:$0xf]
      %v343 = vld [vmem:[%s236 + $0x3c] sm:$0xf]
      %v344 = vld [vmem:[%s236 + $0x40] sm:$0xf]
      %v345 = vld [vmem:[%s236 + $0x44] sm:$0xf]
      %v346 = vld [vmem:[%s236 + $0x48] sm:$0xf]
      %v347 = vld [vmem:[%s236 + $0x4c] sm:$0xf]
      %v348 = vld [vmem:[%s236 + $0x50] sm:$0xf]
      %v349 = vld [vmem:[%s236 + $0x54] sm:$0xf]
      %v350 = vld [vmem:[%s236 + $0x58] sm:$0xf]
      %v351 = vld [vmem:[%s236 + $0x5c] sm:$0xf]
      %v352 = vld [vmem:[%s236 + $0x60] sm:$0xf]
      %v353 = vld [vmem:[%s236 + $0x64] sm:$0xf]
      %v354 = vld [vmem:[%s236 + $0x68] sm:$0xf]
      %v355 = vld [vmem:[%s236 + $0x6c] sm:$0xf]
      %v356 = vld [vmem:[%s236 + $0x70] sm:$0xf]
      %v357 = vld [vmem:[%s236 + $0x74] sm:$0xf]
      %v358 = vld [vmem:[%s236 + $0x78] sm:$0xf]
      %v359 = vld [vmem:[%s236 + $0x7c] sm:$0xf]
      %v360 = vld [vmem:[%s245] sm:$0xf]
      %v361 = vld [vmem:[%s245 + $0x4] sm:$0xf]
      %v362 = vld [vmem:[%s245 + $0x8] sm:$0xf]
      %v363 = vld [vmem:[%s245 + $0xc] sm:$0xf]
      %v364 = vld [vmem:[%s245 + $0x10] sm:$0xf]
      %v365 = vld [vmem:[%s245 + $0x14] sm:$0xf]
      %v366 = vld [vmem:[%s245 + $0x18] sm:$0xf]
      %v367 = vld [vmem:[%s245 + $0x1c] sm:$0xf]
      %v368 = vld [vmem:[%s245 + $0x20] sm:$0xf]
      %v369 = vld [vmem:[%s245 + $0x24] sm:$0xf]
      %v370 = vld [vmem:[%s245 + $0x28] sm:$0xf]
      %v371 = vld [vmem:[%s245 + $0x2c] sm:$0xf]
      %v372 = vld [vmem:[%s245 + $0x30] sm:$0xf]
      %v373 = vld [vmem:[%s245 + $0x34] sm:$0xf]
      %v374 = vld [vmem:[%s245 + $0x38] sm:$0xf]
      %v375 = vld [vmem:[%s245 + $0x3c] sm:$0xf]
      %v408 = vunpack.c.l.b16 %v328
      %v409 = vunpack.c.l.b16 %v329
      %v410 = vunpack.c.l.b16 %v330
      %v411 = vunpack.c.l.b16 %v331
      %v412 = vunpack.c.l.b16 %v332
      %v413 = vunpack.c.l.b16 %v333
      %v414 = vunpack.c.l.b16 %v334
      %v415 = vunpack.c.l.b16 %v335
      %v416 = vunpack.c.l.b16 %v336
      %v417 = vunpack.c.l.b16 %v337
      %v418 = vunpack.c.l.b16 %v338
      %v419 = vunpack.c.l.b16 %v339
      %v420 = vunpack.c.l.b16 %v340
      %v421 = vunpack.c.l.b16 %v341
      %v422 = vunpack.c.l.b16 %v342
      %v423 = vunpack.c.l.b16 %v343
      %v424 = vunpack.c.l.b16 %v344
      %v425 = vunpack.c.l.b16 %v345
      %v426 = vunpack.c.l.b16 %v346
      %v427 = vunpack.c.l.b16 %v347
      %v428 = vunpack.c.l.b16 %v348
      %v429 = vunpack.c.l.b16 %v349
      %v430 = vunpack.c.l.b16 %v350
      %v431 = vunpack.c.l.b16 %v351
      %v432 = vunpack.c.l.b16 %v352
      %v433 = vunpack.c.l.b16 %v353
      %v434 = vunpack.c.l.b16 %v354
      %v435 = vunpack.c.l.b16 %v355
      %v436 = vunpack.c.l.b16 %v356
      %v437 = vunpack.c.l.b16 %v357
      %v438 = vunpack.c.l.b16 %v358
      %v439 = vunpack.c.l.b16 %v359
      %v440 = vpack.c.b16 %v409, %v408
      %v441 = vpack.c.b16 %v411, %v410
      %v442 = vpack.c.b16 %v413, %v412
      %v443 = vpack.c.b16 %v415, %v414
      %v444 = vpack.c.b16 %v417, %v416
      %v445 = vpack.c.b16 %v419, %v418
      %v446 = vpack.c.b16 %v421, %v420
      %v447 = vpack.c.b16 %v423, %v422
      %v448 = vpack.c.b16 %v425, %v424
      %v449 = vpack.c.b16 %v427, %v426
      %v450 = vpack.c.b16 %v429, %v428
      %v451 = vpack.c.b16 %v431, %v430
      %v452 = vpack.c.b16 %v433, %v432
      %v453 = vpack.c.b16 %v435, %v434
      %v454 = vpack.c.b16 %v437, %v436
      %v455 = vpack.c.b16 %v439, %v438
      %v488 = vunpack.c.l.b16 %v360
      %v489 = vunpack.c.l.b16 %v361
      %v490 = vunpack.c.l.b16 %v362
      %v491 = vunpack.c.l.b16 %v363
      %v492 = vunpack.c.l.b16 %v364
      %v493 = vunpack.c.l.b16 %v365
      %v494 = vunpack.c.l.b16 %v366
      %v495 = vunpack.c.l.b16 %v367
      %v496 = vunpack.c.l.b16 %v368
      %v497 = vunpack.c.l.b16 %v369
      %v498 = vunpack.c.l.b16 %v370
      %v499 = vunpack.c.l.b16 %v371
      %v500 = vunpack.c.l.b16 %v372
      %v501 = vunpack.c.l.b16 %v373
      %v502 = vunpack.c.l.b16 %v374
      %v503 = vunpack.c.l.b16 %v375
      %v504 = vpack.c.b16 %v489, %v488
      %v505 = vpack.c.b16 %v491, %v490
      %v506 = vpack.c.b16 %v493, %v492
      %v507 = vpack.c.b16 %v495, %v494
      %v508 = vpack.c.b16 %v497, %v496
      %v509 = vpack.c.b16 %v499, %v498
      %v510 = vpack.c.b16 %v501, %v500
      %v511 = vpack.c.b16 %v503, %v502
      %520 = vmatprep.subr.bf16.mxu0 0
      %521 = vmatpush1.bf16.msra.mxu0 %v504
      %522 = vmatprep.subr.bf16.mxu0 0
      %523 = vmatpush1.bf16.msra.mxu0 %v505
      %524 = vmatprep.subr.bf16.mxu0 0
      %525 = vmatpush1.bf16.msra.mxu0 %v506
      %526 = vmatprep.subr.bf16.mxu0 0
      %527 = vmatpush1.bf16.msra.mxu0 %v507
      %528 = vmatprep.subr.bf16.mxu0 0
      %529 = vmatpush1.bf16.msra.mxu0 %v508
      %530 = vmatprep.subr.bf16.mxu0 0
      %531 = vmatpush1.bf16.msra.mxu0 %v509
      %532 = vmatprep.subr.bf16.mxu0 0
      %533 = vmatpush1.bf16.msra.mxu0 %v510
      %534 = vmatprep.subr.bf16.mxu0 0
      %535 = vmatpush1.bf16.msra.mxu0 %v511
      %536 = vmatprep.subr.bf16.mxu0 0
      %537 = vmatpush1.bf16.msra.mxu0 0
      %538 = vmatprep.subr.bf16.mxu0 0
      %539 = vmatpush1.bf16.msra.mxu0 0
      %540 = vmatprep.subr.bf16.mxu0 0
      %541 = vmatpush1.bf16.msra.mxu0 0
      %542 = vmatprep.subr.bf16.mxu0 0
      %543 = vmatpush1.bf16.msra.mxu0 0
      %544 = vmatprep.subr.bf16.mxu0 0
      %545 = vmatpush1.bf16.msra.mxu0 0
      %546 = vmatprep.subr.bf16.mxu0 0
      %547 = vmatpush1.bf16.msra.mxu0 0
      %548 = vmatprep.subr.bf16.mxu0 0
      %549 = vmatpush1.bf16.msra.mxu0 0
      %550 = vmatprep.subr.bf16.mxu0 0
      %551 = vmatpush1.bf16.msra.mxu0 0
      %552 = vmatprep.mubr.bf16.mxu0 0
      %553 = vmatmul.mubr.bf16.gmra.mrb[0].mxu0 %v440
      %v554 = vpop.f32.mrb[0].mxu0
      %v555 = vadd.f32 0.0, %v554
      %v556 = vpop.f32.mrb[0].mxu0
      %v557 = vpop.f32.mrb[0].mxu0
      %v558 = vadd.f32 0.0, %v557
      %v559 = vpop.f32.mrb[0].mxu0
      %560 = vmatprep.mubr.bf16.mxu0 0
      %561 = vmatmul.mubr.bf16.gmra.mrb[0].mxu0 %v441
      %v562 = vpop.f32.mrb[0].mxu0
      %v563 = vadd.f32 0.0, %v562
      %v564 = vpop.f32.mrb[0].mxu0
      %v565 = vpop.f32.mrb[0].mxu0
      %v566 = vadd.f32 0.0, %v565
      %v567 = vpop.f32.mrb[0].mxu0
      %568 = vmatprep.mubr.bf16.mxu0 0
      %569 = vmatmul.mubr.bf16.gmra.mrb[0].mxu0 %v442
      %v570 = vpop.f32.mrb[0].mxu0
      %v571 = vadd.f32 0.0, %v570
      %v572 = vpop.f32.mrb[0].mxu0
      %v573 = vpop.f32.mrb[0].mxu0
      %v574 = vadd.f32 0.0, %v573
      %v575 = vpop.f32.mrb[0].mxu0
      %576 = vmatprep.mubr.bf16.mxu0 0
      %577 = vmatmul.mubr.bf16.gmra.mrb[0].mxu0 %v443
      %v578 = vpop.f32.mrb[0].mxu0
      %v579 = vadd.f32 0.0, %v578
      %v580 = vpop.f32.mrb[0].mxu0
      %v581 = vpop.f32.mrb[0].mxu0
      %v582 = vadd.f32 0.0, %v581
      %v583 = vpop.f32.mrb[0].mxu0
      %584 = vmatprep.mubr.bf16.mxu0 0
      %585 = vmatmul.mubr.bf16.gmra.mrb[0].mxu0 %v444
      %v586 = vpop.f32.mrb[0].mxu0
      %v587 = vadd.f32 0.0, %v586
      %v588 = vpop.f32.mrb[0].mxu0
      %v589 = vpop.f32.mrb[0].mxu0
      %v590 = vadd.f32 0.0, %v589
      %v591 = vpop.f32.mrb[0].mxu0
      %592 = vmatprep.mubr.bf16.mxu0 0
      %593 = vmatmul.mubr.bf16.gmra.mrb[0].mxu0 %v445
      %v594 = vpop.f32.mrb[0].mxu0
      %v595 = vadd.f32 0.0, %v594
      %v596 = vpop.f32.mrb[0].mxu0
      %v597 = vpop.f32.mrb[0].mxu0
      %v598 = vadd.f32 0.0, %v597
      %v599 = vpop.f32.mrb[0].mxu0
      %600 = vmatprep.mubr.bf16.mxu0 0
      %601 = vmatmul.mubr.bf16.gmra.mrb[0].mxu0 %v446
      %v602 = vpop.f32.mrb[0].mxu0
      %v603 = vadd.f32 0.0, %v602
      %v604 = vpop.f32.mrb[0].mxu0
      %v605 = vpop.f32.mrb[0].mxu0
      %v606 = vadd.f32 0.0, %v605
      %v607 = vpop.f32.mrb[0].mxu0
      %608 = vmatprep.mubr.bf16.mxu0 0
      %609 = vmatmul.mubr.bf16.gmra.mrb[0].mxu0 %v447
      %v610 = vpop.f32.mrb[0].mxu0
      %v611 = vadd.f32 0.0, %v610
      %v612 = vpop.f32.mrb[0].mxu0
      %v613 = vpop.f32.mrb[0].mxu0
      %v614 = vadd.f32 0.0, %v613
      %v615 = vpop.f32.mrb[0].mxu0
      %616 = vmatprep.mubr.bf16.mxu0 0
      %617 = vmatmul.mubr.bf16.gmra.mrb[0].mxu0 %v448
      %v618 = vpop.f32.mrb[0].mxu0
      %v619 = vadd.f32 0.0, %v618
      %v620 = vpop.f32.mrb[0].mxu0
      %v621 = vpop.f32.mrb[0].mxu0
      %v622 = vadd.f32 0.0, %v621
      %v623 = vpop.f32.mrb[0].mxu0
      %624 = vmatprep.mubr.bf16.mxu0 0
      %625 = vmatmul.mubr.bf16.gmra.mrb[0].mxu0 %v449
      %v626 = vpop.f32.mrb[0].mxu0
      %v627 = vadd.f32 0.0, %v626
      %v628 = vpop.f32.mrb[0].mxu0
      %v629 = vpop.f32.mrb[0].mxu0
      %v630 = vadd.f32 0.0, %v629
      %v631 = vpop.f32.mrb[0].mxu0
      %632 = vmatprep.mubr.bf16.mxu0 0
      %633 = vmatmul.mubr.bf16.gmra.mrb[0].mxu0 %v450
      %v634 = vpop.f32.mrb[0].mxu0
      %v635 = vadd.f32 0.0, %v634
      %v636 = vpop.f32.mrb[0].mxu0
      %v637 = vpop.f32.mrb[0].mxu0
      %v638 = vadd.f32 0.0, %v637
      %v639 = vpop.f32.mrb[0].mxu0
      %640 = vmatprep.mubr.bf16.mxu0 0
      %641 = vmatmul.mubr.bf16.gmra.mrb[0].mxu0 %v451
      %v642 = vpop.f32.mrb[0].mxu0
      %v643 = vadd.f32 0.0, %v642
      %v644 = vpop.f32.mrb[0].mxu0
      %v645 = vpop.f32.mrb[0].mxu0
      %v646 = vadd.f32 0.0, %v645
      %v647 = vpop.f32.mrb[0].mxu0
      %648 = vmatprep.mubr.bf16.mxu0 0
      %649 = vmatmul.mubr.bf16.gmra.mrb[0].mxu0 %v452
      %v650 = vpop.f32.mrb[0].mxu0
      %v651 = vadd.f32 0.0, %v650
      %v652 = vpop.f32.mrb[0].mxu0
      %v653 = vpop.f32.mrb[0].mxu0
      %v654 = vadd.f32 0.0, %v653
      %v655 = vpop.f32.mrb[0].mxu0
      %656 = vmatprep.mubr.bf16.mxu0 0
      %657 = vmatmul.mubr.bf16.gmra.mrb[0].mxu0 %v453
      %v658 = vpop.f32.mrb[0].mxu0
      %v659 = vadd.f32 0.0, %v658
      %v660 = vpop.f32.mrb[0].mxu0
      %v661 = vpop.f32.mrb[0].mxu0
      %v662 = vadd.f32 0.0, %v661
      %v663 = vpop.f32.mrb[0].mxu0
      %664 = vmatprep.mubr.bf16.mxu0 0
      %665 = vmatmul.mubr.bf16.gmra.mrb[0].mxu0 %v454
      %v666 = vpop.f32.mrb[0].mxu0
      %v667 = vadd.f32 0.0, %v666
      %v668 = vpop.f32.mrb[0].mxu0
      %v669 = vpop.f32.mrb[0].mxu0
      %v670 = vadd.f32 0.0, %v669
      %v671 = vpop.f32.mrb[0].mxu0
      %672 = vmatprep.mubr.bf16.mxu0 0
      %673 = vmatmul.mubr.bf16.gmra.mrb[0].mxu0 %v455
      %v674 = vpop.f32.mrb[0].mxu0
      %v675 = vadd.f32 0.0, %v674
      %v676 = vpop.f32.mrb[0].mxu0
      %v677 = vpop.f32.mrb[0].mxu0
      %v678 = vadd.f32 0.0, %v677
      %v679 = vpop.f32.mrb[0].mxu0
      %680 = vdwg.mxu0
      %v681 = vadd.f32 %v296, %v555
      %v682 = vadd.f32 %v297, %v558
      %v683 = vadd.f32 %v298, %v563
      %v684 = vadd.f32 %v299, %v566
      %v685 = vadd.f32 %v300, %v571
      %v686 = vadd.f32 %v301, %v574
      %v687 = vadd.f32 %v302, %v579
      %v688 = vadd.f32 %v303, %v582
      %v689 = vadd.f32 %v304, %v587
      %v690 = vadd.f32 %v305, %v590
      %v691 = vadd.f32 %v306, %v595
      %v692 = vadd.f32 %v307, %v598
      %v693 = vadd.f32 %v308, %v603
      %v694 = vadd.f32 %v309, %v606
      %v695 = vadd.f32 %v310, %v611
      %v696 = vadd.f32 %v311, %v614
      %v697 = vadd.f32 %v312, %v619
      %v698 = vadd.f32 %v313, %v622
      %v699 = vadd.f32 %v314, %v627
      %v700 = vadd.f32 %v315, %v630
      %v701 = vadd.f32 %v316, %v635
      %v702 = vadd.f32 %v317, %v638
      %v703 = vadd.f32 %v318, %v643
      %v704 = vadd.f32 %v319, %v646
      %v705 = vadd.f32 %v320, %v651
      %v706 = vadd.f32 %v321, %v654
      %v707 = vadd.f32 %v322, %v659
      %v708 = vadd.f32 %v323, %v662
      %v709 = vadd.f32 %v324, %v667
      %v710 = vadd.f32 %v325, %v670
      %v711 = vadd.f32 %v326, %v675
      %v712 = vadd.f32 %v327, %v678
      %713 = vst [vmem:[#allocation2] sm:$0xff] %v681
      %714 = vst [vmem:[#allocation2 + $0x8] sm:$0xff] %v682
      %715 = vst [vmem:[#allocation2 + $0x10] sm:$0xff] %v683
      %716 = vst [vmem:[#allocation2 + $0x18] sm:$0xff] %v684
      %717 = vst [vmem:[#allocation2 + $0x20] sm:$0xff] %v685
      %718 = vst [vmem:[#allocation2 + $0x28] sm:$0xff] %v686
      %719 = vst [vmem:[#allocation2 + $0x30] sm:$0xff] %v687
      %720 = vst [vmem:[#allocation2 + $0x38] sm:$0xff] %v688
      %721 = vst [vmem:[#allocation2 + $0x40] sm:$0xff] %v689
      %722 = vst [vmem:[#allocation2 + $0x48] sm:$0xff] %v690
      %723 = vst [vmem:[#allocation2 + $0x50] sm:$0xff] %v691
      %724 = vst [vmem:[#allocation2 + $0x58] sm:$0xff] %v692
      %725 = vst [vmem:[#allocation2 + $0x60] sm:$0xff] %v693
      %726 = vst [vmem:[#allocation2 + $0x68] sm:$0xff] %v694
      %727 = vst [vmem:[#allocation2 + $0x70] sm:$0xff] %v695
      %728 = vst [vmem:[#allocation2 + $0x78] sm:$0xff] %v696
      %729 = vst [vmem:[#allocation2 + $0x80] sm:$0xff] %v697
      %730 = vst [vmem:[#allocation2 + $0x88] sm:$0xff] %v698
      %731 = vst [vmem:[#allocation2 + $0x90] sm:$0xff] %v699
      %732 = vst [vmem:[#allocation2 + $0x98] sm:$0xff] %v700
      %733 = vst [vmem:[#allocation2 + $0xa0] sm:$0xff] %v701
      %734 = vst [vmem:[#allocation2 + $0xa8] sm:$0xff] %v702
      %735 = vst [vmem:[#allocation2 + $0xb0] sm:$0xff] %v703
      %736 = vst [vmem:[#allocation2 + $0xb8] sm:$0xff] %v704
      %737 = vst [vmem:[#allocation2 + $0xc0] sm:$0xff] %v705
      %738 = vst [vmem:[#allocation2 + $0xc8] sm:$0xff] %v706
      %739 = vst [vmem:[#allocation2 + $0xd0] sm:$0xff] %v707
      %740 = vst [vmem:[#allocation2 + $0xd8] sm:$0xff] %v708
      %741 = vst [vmem:[#allocation2 + $0xe0] sm:$0xff] %v709
      %742 = vst [vmem:[#allocation2 + $0xe8] sm:$0xff] %v710
      %743 = vst [vmem:[#allocation2 + $0xf0] sm:$0xff] %v711
      %744 = vst [vmem:[#allocation2 + $0xf8] sm:$0xff] %v712
      // Predicated region
      $region37: #{bart_speech_ner_forward.34} parent=31 // pred_check
        %p745 = pneg %p260
      $region38: #{bart_speech_ner_forward.34} parent=31 // pred_check_branch
        %747 = sbr.rel (%p745) target = $region40
      $region39: #{bart_speech_ner_forward.34} parent=31 // pred_region
        %v748 = vld [vmem:[#allocation2] sm:$0xff]
        %v749 = vld [vmem:[#allocation2 + $0x8] sm:$0xff]
        %v750 = vld [vmem:[#allocation2 + $0x10] sm:$0xff]
        %v751 = vld [vmem:[#allocation2 + $0x18] sm:$0xff]
        %v752 = vld [vmem:[#allocation2 + $0x20] sm:$0xff]
        %v753 = vld [vmem:[#allocation2 + $0x28] sm:$0xff]
        %v754 = vld [vmem:[#allocation2 + $0x30] sm:$0xff]
        %v755 = vld [vmem:[#allocation2 + $0x38] sm:$0xff]
        %v756 = vld [vmem:[#allocation2 + $0x40] sm:$0xff]
        %v757 = vld [vmem:[#allocation2 + $0x48] sm:$0xff]
        %v758 = vld [vmem:[#allocation2 + $0x50] sm:$0xff]
        %v759 = vld [vmem:[#allocation2 + $0x58] sm:$0xff]
        %v760 = vld [vmem:[#allocation2 + $0x60] sm:$0xff]
        %v761 = vld [vmem:[#allocation2 + $0x68] sm:$0xff]
        %v762 = vld [vmem:[#allocation2 + $0x70] sm:$0xff]
        %v763 = vld [vmem:[#allocation2 + $0x78] sm:$0xff]
        %v764 = vld [vmem:[#allocation2 + $0x80] sm:$0xff]
        %v765 = vld [vmem:[#allocation2 + $0x88] sm:$0xff]
        %v766 = vld [vmem:[#allocation2 + $0x90] sm:$0xff]
        %v767 = vld [vmem:[#allocation2 + $0x98] sm:$0xff]
        %v768 = vld [vmem:[#allocation2 + $0xa0] sm:$0xff]
        %v769 = vld [vmem:[#allocation2 + $0xa8] sm:$0xff]
        %v770 = vld [vmem:[#allocation2 + $0xb0] sm:$0xff]
        %v771 = vld [vmem:[#allocation2 + $0xb8] sm:$0xff]
        %v772 = vld [vmem:[#allocation2 + $0xc0] sm:$0xff]
        %v773 = vld [vmem:[#allocation2 + $0xc8] sm:$0xff]
        %v774 = vld [vmem:[#allocation2 + $0xd0] sm:$0xff]
        %v775 = vld [vmem:[#allocation2 + $0xd8] sm:$0xff]
        %v776 = vld [vmem:[#allocation2 + $0xe0] sm:$0xff]
        %v777 = vld [vmem:[#allocation2 + $0xe8] sm:$0xff]
        %v778 = vld [vmem:[#allocation2 + $0xf0] sm:$0xff]
        %v779 = vld [vmem:[#allocation2 + $0xf8] sm:$0xff]
        %v780 = vld [vmem:[%s249] sm:$0x1]
        %v782 = vlaneseq
        %v783 = vshrl.u32 %v782, 7
        %v784 = vsub.s32 0, %v783
        %v785 = vrot.slane %v780, %v784
        %v787 = vadd.f32 %v748, %v785
        %v788 = vadd.f32 %v749, %v785
        %v789 = vadd.f32 %v750, %v785
        %v790 = vadd.f32 %v751, %v785
        %v791 = vadd.f32 %v752, %v785
        %v792 = vadd.f32 %v753, %v785
        %v793 = vadd.f32 %v754, %v785
        %v794 = vadd.f32 %v755, %v785
        %v795 = vadd.f32 %v756, %v785
        %v796 = vadd.f32 %v757, %v785
        %v797 = vadd.f32 %v758, %v785
        %v798 = vadd.f32 %v759, %v785
        %v799 = vadd.f32 %v760, %v785
        %v800 = vadd.f32 %v761, %v785
        %v801 = vadd.f32 %v762, %v785
        %v802 = vadd.f32 %v763, %v785
        %v803 = vadd.f32 %v764, %v785
        %v804 = vadd.f32 %v765, %v785
        %v805 = vadd.f32 %v766, %v785
        %v806 = vadd.f32 %v767, %v785
        %v807 = vadd.f32 %v768, %v785
        %v808 = vadd.f32 %v769, %v785
        %v809 = vadd.f32 %v770, %v785
        %v810 = vadd.f32 %v771, %v785
        %v811 = vadd.f32 %v772, %v785
        %v812 = vadd.f32 %v773, %v785
        %v813 = vadd.f32 %v774, %v785
        %v814 = vadd.f32 %v775, %v785
        %v815 = vadd.f32 %v776, %v785
        %v816 = vadd.f32 %v777, %v785
        %v817 = vadd.f32 %v778, %v785
        %v818 = vadd.f32 %v779, %v785
        %v819 = vmax.f32 %v787, 0.0
        %v820 = vmax.f32 %v788, 0.0
        %v821 = vmax.f32 %v789, 0.0
        %v822 = vmax.f32 %v790, 0.0
        %v823 = vmax.f32 %v791, 0.0
        %v824 = vmax.f32 %v792, 0.0
        %v825 = vmax.f32 %v793, 0.0
        %v826 = vmax.f32 %v794, 0.0
        %v827 = vmax.f32 %v795, 0.0
        %v828 = vmax.f32 %v796, 0.0
        %v829 = vmax.f32 %v797, 0.0
        %v830 = vmax.f32 %v798, 0.0
        %v831 = vmax.f32 %v799, 0.0
        %v832 = vmax.f32 %v800, 0.0
        %v833 = vmax.f32 %v801, 0.0
        %v834 = vmax.f32 %v802, 0.0
        %v835 = vmax.f32 %v803, 0.0
        %v836 = vmax.f32 %v804, 0.0
        %v837 = vmax.f32 %v805, 0.0
        %v838 = vmax.f32 %v806, 0.0
        %v839 = vmax.f32 %v807, 0.0
        %v840 = vmax.f32 %v808, 0.0
        %v841 = vmax.f32 %v809, 0.0
        %v842 = vmax.f32 %v810, 0.0
        %v843 = vmax.f32 %v811, 0.0
        %v844 = vmax.f32 %v812, 0.0
        %v845 = vmax.f32 %v813, 0.0
        %v846 = vmax.f32 %v814, 0.0
        %v847 = vmax.f32 %v815, 0.0
        %v848 = vmax.f32 %v816, 0.0
        %v849 = vmax.f32 %v817, 0.0
        %v850 = vmax.f32 %v818, 0.0
        %851 = vst [vmem:[%s257] sm:$0xff] %v819
        %852 = vst [vmem:[%s257 + $0x8] sm:$0xff] %v820
        %853 = vst [vmem:[%s257 + $0x10] sm:$0xff] %v821
        %854 = vst [vmem:[%s257 + $0x18] sm:$0xff] %v822
        %855 = vst [vmem:[%s257 + $0x20] sm:$0xff] %v823
        %856 = vst [vmem:[%s257 + $0x28] sm:$0xff] %v824
        %857 = vst [vmem:[%s257 + $0x30] sm:$0xff] %v825
        %858 = vst [vmem:[%s257 + $0x38] sm:$0xff] %v826
        %859 = vst [vmem:[%s257 + $0x40] sm:$0xff] %v827
        %860 = vst [vmem:[%s257 + $0x48] sm:$0xff] %v828
        %861 = vst [vmem:[%s257 + $0x50] sm:$0xff] %v829
        %862 = vst [vmem:[%s257 + $0x58] sm:$0xff] %v830
        %863 = vst [vmem:[%s257 + $0x60] sm:$0xff] %v831
        %864 = vst [vmem:[%s257 + $0x68] sm:$0xff] %v832
        %865 = vst [vmem:[%s257 + $0x70] sm:$0xff] %v833
        %866 = vst [vmem:[%s257 + $0x78] sm:$0xff] %v834
        %867 = vst [vmem:[%s257 + $0x80] sm:$0xff] %v835
        %868 = vst [vmem:[%s257 + $0x88] sm:$0xff] %v836
        %869 = vst [vmem:[%s257 + $0x90] sm:$0xff] %v837
        %870 = vst [vmem:[%s257 + $0x98] sm:$0xff] %v838
        %871 = vst [vmem:[%s257 + $0xa0] sm:$0xff] %v839
        %872 = vst [vmem:[%s257 + $0xa8] sm:$0xff] %v840
        %873 = vst [vmem:[%s257 + $0xb0] sm:$0xff] %v841
        %874 = vst [vmem:[%s257 + $0xb8] sm:$0xff] %v842
        %875 = vst [vmem:[%s257 + $0xc0] sm:$0xff] %v843
        %876 = vst [vmem:[%s257 + $0xc8] sm:$0xff] %v844
        %877 = vst [vmem:[%s257 + $0xd0] sm:$0xff] %v845
        %878 = vst [vmem:[%s257 + $0xd8] sm:$0xff] %v846
        %879 = vst [vmem:[%s257 + $0xe0] sm:$0xff] %v847
        %880 = vst [vmem:[%s257 + $0xe8] sm:$0xff] %v848
        %881 = vst [vmem:[%s257 + $0xf0] sm:$0xff] %v849
        %882 = vst [vmem:[%s257 + $0xf8] sm:$0xff] %v850
      $region40: #{bart_speech_ner_forward.34} parent=31 // pred_fallthru
        _
      %s883 = smul.u32 32, %s19
      %p884 = scmp.lt.s32.totalorder %s883, 319
      %s885 = scalar_select %p884, %s883, 319
      %p886 = scmp.lt.s32.totalorder %s20, 0
      %s887 = scalar_select %p886, %s20, 0
      %s888 = sadd.s32 %s887, %s885
      %s889 = smul.addr %s888, 8
      %s890 = scalar_lea.vmem %s3, %s889
      // Predicated region
      $region41: #{bart_speech_ner_forward.34} parent=31 // pred_check
        %p891 = pneg %p135
      $region42: #{bart_speech_ner_forward.34} parent=31 // pred_check_branch
        %893 = sbr.rel (%p891) target = $region44
      $region43: #{bart_speech_ner_forward.34} parent=31 // pred_region
        %s894 = smul.u32 32, %s19
      $region44: #{bart_speech_ner_forward.34} parent=31 // pred_fallthru
        _
    $region32: #{bart_speech_ner_forward.34} parent=5 // pred_fallthru
      _
    %p895 = scmp.le.s32.totalorder 2, %s9
    // Predicated region
    $region45: #{bart_speech_ner_forward.34} parent=5 // pred_check
      %p896 = pneg %p895
    $region46: #{bart_speech_ner_forward.34} parent=5 // pred_check_branch
      %898 = sbr.rel (%p896) target = $region48
    $region47: #{bart_speech_ner_forward.34} parent=5 // pred_region
      %s899 = ssub.s32 %s9, 2
      // Predicated region
      $region49: #{bart_speech_ner_forward.34} parent=47 // pred_check
        %p900 = pneg %p141
      $region50: #{bart_speech_ner_forward.34} parent=47 // pred_check_branch
        %902 = sbr.rel (%p900) target = $region52
      $region51: #{bart_speech_ner_forward.34} parent=47 // pred_region
        %s903 = smul.u32 32, %s22
        %p904 = scmp.lt.s32.totalorder %s903, 319
        %s905 = scalar_select %p904, %s903, 319
        %p906 = scmp.lt.s32.totalorder %s23, 0
        %s907 = scalar_select %p906, %s23, 0
        %s908 = sadd.s32 %s907, %s905
        %s909 = smul.addr %s908, 8
        %s910 = scalar_lea.vmem %s3, %s909
      $region52: #{bart_speech_ner_forward.34} parent=47 // pred_fallthru
        _
    $region48: #{bart_speech_ner_forward.34} parent=5 // pred_fallthru
      _
  $region6: #{bart_speech_ner_forward.34} parent=0 // loop_footer
    %s13 = sadd.s32 1, %s9
  $region7: #{bart_speech_ner_forward.34} parent=0 // loop_footer_branch
    %8 = sbr.rel target = $region3
  $region8: #{bart_speech_ner_forward.34} parent=0 // loop_exit
    _

// kernel: bart_speech_ner_forward.35
$region0: #{bart_speech_ner_forward.35}
  #allocation0 [shape = 'u32[]', space=smem, size = 0x4, offset = 0x4, fixed_abs, tag = 'smem constant byte address 0x4 - core index']
  #allocation1 [shape = 'u32[144,128]{1,0:T(1,128)}', space=vmem, size = 0x12000, scoped, tag = 'internal scratch']
  #allocation2 [shape = 'f32[256,128]{1,0:T(8,128)}', space=vmem, size = 0x20000, scoped, tag = 'scratch operand']
  %s0 = inlined_call_operand.vmem [shape: bf16[768,512], index: 0, kind: input, shape index: {}]
  %s1 = inlined_call_operand.vmem [shape: bf16[512,128], index: 1, kind: input, shape index: {}]
  %s2 = inlined_call_operand.vmem [shape: f32[1,128], index: 2, kind: input, shape index: {}]
  %s3 = inlined_call_operand.vmem [shape: f32[768,128], index: 3, kind: output, shape index: {}]
  %s4 = sld [smem:[#allocation0]]
  $region91: #{bart_speech_ner_forward.35} parent=0
    _
  %s6 = ssub.s32 1, %s4
  %s7 = scalar_select 0, %s6, %s4
  $region1: #{bart_speech_ner_forward.35} parent=0
    #allocation3 [shape = 'u8[262144]{0}', space=vmem, size = 0x40000, scoped, tag = 'input window, operand 0']
    loop: start=0, step=1, limit=8
    $region2: #{bart_speech_ner_forward.35} parent=1 // loop_pre_header
      _
    $region3: #{bart_speech_ner_forward.35} parent=1 // loop_header
      %s9 = sphi 0, %s13
      %p10 = scmp.ge.s32.totalorder %s9, 8
      %s16 = sphi 0, %s35
      %s17 = sphi 0, %s31
      %s18 = sphi 0, %s27
      %s19 = sphi 0, %s16
      %s20 = sphi 0, %s17
      %s21 = sphi 0, %s18
      %s22 = sphi 0, %s19
      %s23 = sphi 0, %s20
      %s24 = sphi 0, %s21
      %s40 = sphi 0, %s42
      %s43 = sphi 0, %s40
      %s44 = sphi 0, %s43
      %s60 = sphi 0, %s44
      %s68 = sphi 0, %s70
      %s71 = sphi 0, %s68
      %s72 = sphi 0, %s71
      %s88 = sphi 0, %s72
      %s94 = sphi 0, %s96
      %s97 = sphi 0, %s94
      %s98 = sphi 0, %s97
      %s114 = sphi 0, %s98
      %s122 = sphi 0, %s124
      %s125 = sphi 0, %s122
      %s126 = sphi 0, %s125
      %s142 = sphi 0, %s126
    $region4: #{bart_speech_ner_forward.35} parent=1 // loop_header_branch
      %12 = sbr.rel (%p10) target = $region8
    $region5: #{bart_speech_ner_forward.35} parent=1 // loop_body
      %s14 = ssub.s32 %s9, 1
      %s15 = ssub.s32 %s9, 2
      %s25 = sadd.s32 1, %s18
      %p26 = scmp.ge.s32.totalorder %s25, 2
      %s27 = scalar_select %p26, 0, %s25
      %s28 = sadd.s32 1, %s17
      %s29 = scalar_select %p26, %s28, %s17
      %p30 = scmp.ge.s32.totalorder %s29, 1
      %s31 = scalar_select %p30, 0, %s29
      %s32 = sadd.s32 1, %s16
      %s33 = scalar_select %p30, %s32, %s16
      %p34 = scmp.ge.s32.totalorder %s33, 3
      %s35 = scalar_select %p34, 0, %s33
      %s36 = ssub.s32 %s16, %s35
      %s37 = ssub.s32 %s18, %s27
      %s38 = sor.u32 %s36, %s37
      %p39 = scmp.eq.s32.totalorder %s38, 0
      %s41 = sadd.s32 %s40, 1
      %s42 = scalar_select %p39, %s40, %s41
      %p45 = pneg %p39
      %p46 = scmp.eq.s32.totalorder %s9, 5
      %p47 = por %p45, %p46
      %p48 = scmp.ne.s32.totalorder %s40, %s43
      %p49 = scmp.eq.s32.totalorder %s9, 0
      %p50 = por %p48, %p49
      %p51 = scmp.ne.s32.totalorder %s40, %s43
      %p52 = scmp.eq.s32.totalorder %s14, 5
      %p53 = por %p51, %p52
      %p54 = scmp.ne.s32.totalorder %s43, %s44
      %p55 = scmp.eq.s32.totalorder %s14, 0
      %p56 = por %p54, %p55
      %p57 = scmp.ne.s32.totalorder %s43, %s44
      %p58 = scmp.eq.s32.totalorder %s15, 5
      %p59 = por %p57, %p58
      %p61 = scmp.ne.s32.totalorder %s44, %s60
      %p62 = scmp.eq.s32.totalorder %s15, 0
      %p63 = por %p61, %p62
      %s64 = ssub.s32 %s18, %s27
      %s65 = ssub.s32 %s17, %s31
      %s66 = sor.u32 %s64, %s65
      %p67 = scmp.eq.s32.totalorder %s66, 0
      %s69 = sadd.s32 %s68, 1
      %s70 = scalar_select %p67, %s68, %s69
      %p73 = pneg %p67
      %p74 = scmp.eq.s32.totalorder %s9, 5
      %p75 = por %p73, %p74
      %p76 = scmp.ne.s32.totalorder %s68, %s71
      %p77 = scmp.eq.s32.totalorder %s9, 0
      %p78 = por %p76, %p77
      %p79 = scmp.ne.s32.totalorder %s68, %s71
      %p80 = scmp.eq.s32.totalorder %s14, 5
      %p81 = por %p79, %p80
      %p82 = scmp.ne.s32.totalorder %s71, %s72
      %p83 = scmp.eq.s32.totalorder %s14, 0
      %p84 = por %p82, %p83
      %p85 = scmp.ne.s32.totalorder %s71, %s72
      %p86 = scmp.eq.s32.totalorder %s15, 5
      %p87 = por %p85, %p86
      %p89 = scmp.ne.s32.totalorder %s72, %s88
      %p90 = scmp.eq.s32.totalorder %s15, 0
      %p91 = por %p89, %p90
      %s92 = ssub.s32 %s17, %s31
      %p93 = scmp.eq.s32.totalorder %s92, 0
      %s95 = sadd.s32 %s94, 1
      %s96 = scalar_select %p93, %s94, %s95
      %p99 = pneg %p93
      %p100 = scmp.eq.s32.totalorder %s9, 5
      %p101 = por %p99, %p100
      %p102 = scmp.ne.s32.totalorder %s94, %s97
      %p103 = scmp.eq.s32.totalorder %s9, 0
      %p104 = por %p102, %p103
      %p105 = scmp.ne.s32.totalorder %s94, %s97
      %p106 = scmp.eq.s32.totalorder %s14, 5
      %p107 = por %p105, %p106
      %p108 = scmp.ne.s32.totalorder %s97, %s98
      %p109 = scmp.eq.s32.totalorder %s14, 0
      %p110 = por %p108, %p109
      %p111 = scmp.ne.s32.totalorder %s97, %s98
      %p112 = scmp.eq.s32.totalorder %s15, 5
      %p113 = por %p111, %p112
      %p115 = scmp.ne.s32.totalorder %s98, %s114
      %p116 = scmp.eq.s32.totalorder %s15, 0
      %p117 = por %p115, %p116
      %s118 = ssub.s32 %s16, %s35
      %s119 = ssub.s32 %s17, %s31
      %s120 = sor.u32 %s118, %s119
      %p121 = scmp.eq.s32.totalorder %s120, 0
      %s123 = sadd.s32 %s122, 1
      %s124 = scalar_select %p121, %s122, %s123
      %p127 = pneg %p121
      %p128 = scmp.eq.s32.totalorder %s9, 5
      %p129 = por %p127, %p128
      %p130 = scmp.ne.s32.totalorder %s122, %s125
      %p131 = scmp.eq.s32.totalorder %s9, 0
      %p132 = por %p130, %p131
      %p133 = scmp.ne.s32.totalorder %s122, %s125
      %p134 = scmp.eq.s32.totalorder %s14, 5
      %p135 = por %p133, %p134
      %p136 = scmp.ne.s32.totalorder %s125, %s126
      %p137 = scmp.eq.s32.totalorder %s14, 0
      %p138 = por %p136, %p137
      %p139 = scmp.ne.s32.totalorder %s125, %s126
      %p140 = scmp.eq.s32.totalorder %s15, 5
      %p141 = por %p139, %p140
      %p143 = scmp.ne.s32.totalorder %s126, %s142
      %p144 = scmp.eq.s32.totalorder %s15, 0
      %p145 = por %p143, %p144
      %p146 = scmp.le.s32.totalorder 1, %s9
      %p147 = scmp.lt.s32.totalorder %s9, 7
      %p148 = pnand %p146, %p147
      %p149 = pneg %p148
      // Predicated region
      $region9: #{bart_speech_ner_forward.35} parent=5 // pred_check
        _
      $region10: #{bart_speech_ner_forward.35} parent=5 // pred_check_branch
        %151 = sbr.rel (%p148) target = $region12
      $region11: #{bart_speech_ner_forward.35} parent=5 // pred_region
        %s152 = ssub.s32 %s9, 1
        // Predicated region
        $region13: #{bart_speech_ner_forward.35} parent=11 // pred_check
          %p153 = pneg %p110
        $region14: #{bart_speech_ner_forward.35} parent=11 // pred_check_branch
          %155 = sbr.rel (%p153) target = $region16
        $region15: #{bart_speech_ner_forward.35} parent=11 // pred_region
          %p156 = scmp.lt.s32.totalorder %s20, 0
          %s157 = scalar_select %p156, %s20, 0
          %s158 = scalar_lea.vmem %s2, %s157
        $region16: #{bart_speech_ner_forward.35} parent=11 // pred_fallthru
          _
      $region12: #{bart_speech_ner_forward.35} parent=5 // pred_fallthru
        _
      %p159 = scmp.lt.s32.totalorder %s9, 6
      // Predicated region
      $region17: #{bart_speech_ner_forward.35} parent=5 // pred_check
        %p160 = pneg %p159
      $region18: #{bart_speech_ner_forward.35} parent=5 // pred_check_branch
        %162 = sbr.rel (%p160) target = $region20
      $region19: #{bart_speech_ner_forward.35} parent=5 // pred_region
        // Predicated region
        $region21: #{bart_speech_ner_forward.35} parent=19 // pred_check
          %p163 = pneg %p50
        $region22: #{bart_speech_ner_forward.35} parent=19 // pred_check_branch
          %165 = sbr.rel (%p163) target = $region24
        $region23: #{bart_speech_ner_forward.35} parent=19 // pred_region
          %s166 = sand.u32 %s40, 1
          %s167 = sand.u32 %s40, 1
          %s168 = smul.addr %s167, 256
          %s169 = scalar_lea.vmem [#allocation3], %s168
          %s170 = smul.u32 32, %s16
          %s171 = smul.u32 2, %s18
          %s172 = smul.addr %s170, 4
          %s173 = sadd.s32 %s171, %s172
          %s174 = smul.addr %s173, 4
          %s175 = scalar_lea.vmem %s0, %s174
          // Predicated region
          $region25: #{bart_speech_ner_forward.35} parent=23 // pred_check
            _
          $region26: #{bart_speech_ner_forward.35} parent=23 // pred_check_branch
            %177 = sbr.rel (0) target = $region28
          $region27: #{bart_speech_ner_forward.35} parent=23 // pred_region
            // Predicated region
            $region29: #{bart_speech_ner_forward.35} parent=27 // pred_check
              _
            $region30: #{bart_speech_ner_forward.35} parent=27 // pred_check_branch
              %179 = sbr.rel (0) target = $region32
            $region31: #{bart_speech_ner_forward.35} parent=27 // pred_region
              // Predicated region
              $region44: #{bart_speech_ner_forward.35} parent=31 // pred_check
                _
              $region45: #{bart_speech_ner_forward.35} parent=31 // pred_check_branch
                %256 = sbr.rel (0) target = $region47
              $region46: #{bart_speech_ner_forward.35} parent=31 // pred_region
                loop: start=0, step=1, limit=1
                $region48: #{bart_speech_ner_forward.35} parent=46 // loop_pre_header
                  _
                $region49: #{bart_speech_ner_forward.35} parent=46 // loop_header
                  %s258 = sphi 0, %s262
                  %p259 = scmp.ge.s32.totalorder %s258, 1
                  %s263 = sphi %s175, %s175
                  %s264 = sphi %s169, %s169
                $region50: #{bart_speech_ner_forward.35} parent=46 // loop_header_branch
                  %261 = sbr.rel (%p259) target = $region54
                $region51: #{bart_speech_ner_forward.35} parent=46 // loop_body
                  %v265 = vld [vmem:[%s263] sm:$0xff]
                  %266 = vst [vmem:[%s264] sm:$0xff] %v265
                  %v267 = vld [vmem:[%s263 + $0x10] sm:$0xff]
                  %268 = vst [vmem:[%s264 + $0x8] sm:$0xff] %v267
                  %v269 = vld [vmem:[%s263 + $0x20] sm:$0xff]
                  %270 = vst [vmem:[%s264 + $0x10] sm:$0xff] %v269
                  %v271 = vld [vmem:[%s263 + $0x30] sm:$0xff]
                  %272 = vst [vmem:[%s264 + $0x18] sm:$0xff] %v271
                  %v273 = vld [vmem:[%s263 + $0x40] sm:$0xff]
                  %274 = vst [vmem:[%s264 + $0x20] sm:$0xff] %v273
                  %v275 = vld [vmem:[%s263 + $0x50] sm:$0xff]
                  %276 = vst [vmem:[%s264 + $0x28] sm:$0xff] %v275
                  %v277 = vld [vmem:[%s263 + $0x60] sm:$0xff]
                  %278 = vst [vmem:[%s264 + $0x30] sm:$0xff] %v277
                  %v279 = vld [vmem:[%s263 + $0x70] sm:$0xff]
                  %280 = vst [vmem:[%s264 + $0x38] sm:$0xff] %v279
                  %v281 = vld [vmem:[%s263 + $0x80] sm:$0xff]
                  %282 = vst [vmem:[%s264 + $0x40] sm:$0xff] %v281
                  %v283 = vld [vmem:[%s263 + $0x90] sm:$0xff]
                  %284 = vst [vmem:[%s264 + $0x48] sm:$0xff] %v283
                  %v285 = vld [vmem:[%s263 + $0xa0] sm:$0xff]
                  %286 = vst [vmem:[%s264 + $0x50] sm:$0xff] %v285
                  %v287 = vld [vmem:[%s263 + $0xb0] sm:$0xff]
                  %288 = vst [vmem:[%s264 + $0x58] sm:$0xff] %v287
                  %v289 = vld [vmem:[%s263 + $0xc0] sm:$0xff]
                  %290 = vst [vmem:[%s264 + $0x60] sm:$0xff] %v289
                  %v291 = vld [vmem:[%s263 + $0xd0] sm:$0xff]
                  %292 = vst [vmem:[%s264 + $0x68] sm:$0xff] %v291
                  %v293 = vld [vmem:[%s263 + $0xe0] sm:$0xff]
                  %294 = vst [vmem:[%s264 + $0x70] sm:$0xff] %v293
                  %v295 = vld [vmem:[%s263 + $0xf0] sm:$0xff]
                  %296 = vst [vmem:[%s264 + $0x78] sm:$0xff] %v295
                  %v297 = vld [vmem:[%s263 + $0x100] sm:$0xff]
                  %298 = vst [vmem:[%s264 + $0x80] sm:$0xff] %v297
                  %v299 = vld [vmem:[%s263 + $0x110] sm:$0xff]
                  %300 = vst [vmem:[%s264 + $0x88] sm:$0xff] %v299
                  %v301 = vld [vmem:[%s263 + $0x120] sm:$0xff]
                  %302 = vst [vmem:[%s264 + $0x90] sm:$0xff] %v301
                  %v303 = vld [vmem:[%s263 + $0x130] sm:$0xff]
                  %304 = vst [vmem:[%s264 + $0x98] sm:$0xff] %v303
                  %v305 = vld [vmem:[%s263 + $0x140] sm:$0xff]
                  %306 = vst [vmem:[%s264 + $0xa0] sm:$0xff] %v305
                  %v307 = vld [vmem:[%s263 + $0x150] sm:$0xff]
                  %308 = vst [vmem:[%s264 + $0xa8] sm:$0xff] %v307
                  %v309 = vld [vmem:[%s263 + $0x160] sm:$0xff]
                  %310 = vst [vmem:[%s264 + $0xb0] sm:$0xff] %v309
                  %v311 = vld [vmem:[%s263 + $0x170] sm:$0xff]
                  %312 = vst [vmem:[%s264 + $0xb8] sm:$0xff] %v311
                  %v313 = vld [vmem:[%s263 + $0x180] sm:$0xff]
                  %314 = vst [vmem:[%s264 + $0xc0] sm:$0xff] %v313
                  %v315 = vld [vmem:[%s263 + $0x190] sm:$0xff]
                  %316 = vst [vmem:[%s264 + $0xc8] sm:$0xff] %v315
                  %v317 = vld [vmem:[%s263 + $0x1a0] sm:$0xff]
                  %318 = vst [vmem:[%s264 + $0xd0] sm:$0xff] %v317
                  %v319 = vld [vmem:[%s263 + $0x1b0] sm:$0xff]
                  %320 = vst [vmem:[%s264 + $0xd8] sm:$0xff] %v319
                  %v321 = vld [vmem:[%s263 + $0x1c0] sm:$0xff]
                  %322 = vst [vmem:[%s264 + $0xe0] sm:$0xff] %v321
                  %v323 = vld [vmem:[%s263 + $0x1d0] sm:$0xff]
                  %324 = vst [vmem:[%s264 + $0xe8] sm:$0xff] %v323
                  %v325 = vld [vmem:[%s263 + $0x1e0] sm:$0xff]
                  %326 = vst [vmem:[%s264 + $0xf0] sm:$0xff] %v325
                  %v327 = vld [vmem:[%s263 + $0x1f0] sm:$0xff]
                  %328 = vst [vmem:[%s264 + $0xf8] sm:$0xff] %v327
                $region52: #{bart_speech_ner_forward.35} parent=46 // loop_footer
                  %s262 = sadd.s32 1, %s258
                $region53: #{bart_speech_ner_forward.35} parent=46 // loop_footer_branch
                  %257 = sbr.rel target = $region49
                $region54: #{bart_speech_ner_forward.35} parent=46 // loop_exit
                  _
              $region47: #{bart_speech_ner_forward.35} parent=31 // pred_fallthru
                _
              // Predicated region
              $region55: #{bart_speech_ner_forward.35} parent=31 // pred_check
                _
              $region56: #{bart_speech_ner_forward.35} parent=31 // pred_check_branch
                %330 = sbr.rel target = $region58
              $region57: #{bart_speech_ner_forward.35} parent=31 // pred_region
                _
              $region58: #{bart_speech_ner_forward.35} parent=31 // pred_fallthru
                _
            $region32: #{bart_speech_ner_forward.35} parent=27 // pred_fallthru
              _
            // Predicated region
            $region33: #{bart_speech_ner_forward.35} parent=27 // pred_check
              _
            $region34: #{bart_speech_ner_forward.35} parent=27 // pred_check_branch
              %181 = sbr.rel target = $region36
            $region35: #{bart_speech_ner_forward.35} parent=27 // pred_region
              loop: start=0, step=1, limit=1
              $region37: #{bart_speech_ner_forward.35} parent=35 // loop_pre_header
                _
              $region38: #{bart_speech_ner_forward.35} parent=35 // loop_header
                %s184 = sphi 0, %s188
                %p185 = scmp.ge.s32.totalorder %s184, 1
                %s189 = sphi %s175, %s175
                %s190 = sphi %s169, %s169
              $region39: #{bart_speech_ner_forward.35} parent=35 // loop_header_branch
                %187 = sbr.rel (%p185) target = $region43
              $region40: #{bart_speech_ner_forward.35} parent=35 // loop_body
                %v191 = vld [vmem:[%s189] sm:$0xff]
                %192 = vst [vmem:[%s190] sm:$0xff] %v191
                %v193 = vld [vmem:[%s189 + $0x10] sm:$0xff]
                %194 = vst [vmem:[%s190 + $0x8] sm:$0xff] %v193
                %v195 = vld [vmem:[%s189 + $0x20] sm:$0xff]
                %196 = vst [vmem:[%s190 + $0x10] sm:$0xff] %v195
                %v197 = vld [vmem:[%s189 + $0x30] sm:$0xff]
                %198 = vst [vmem:[%s190 + $0x18] sm:$0xff] %v197
                %v199 = vld [vmem:[%s189 + $0x40] sm:$0xff]
                %200 = vst [vmem:[%s190 + $0x20] sm:$0xff] %v199
                %v201 = vld [vmem:[%s189 + $0x50] sm:$0xff]
                %202 = vst [vmem:[%s190 + $0x28] sm:$0xff] %v201
                %v203 = vld [vmem:[%s189 + $0x60] sm:$0xff]
                %204 = vst [vmem:[%s190 + $0x30] sm:$0xff] %v203
                %v205 = vld [vmem:[%s189 + $0x70] sm:$0xff]
                %206 = vst [vmem:[%s190 + $0x38] sm:$0xff] %v205
                %v207 = vld [vmem:[%s189 + $0x80] sm:$0xff]
                %208 = vst [vmem:[%s190 + $0x40] sm:$0xff] %v207
                %v209 = vld [vmem:[%s189 + $0x90] sm:$0xff]
                %210 = vst [vmem:[%s190 + $0x48] sm:$0xff] %v209
                %v211 = vld [vmem:[%s189 + $0xa0] sm:$0xff]
                %212 = vst [vmem:[%s190 + $0x50] sm:$0xff] %v211
                %v213 = vld [vmem:[%s189 + $0xb0] sm:$0xff]
                %214 = vst [vmem:[%s190 + $0x58] sm:$0xff] %v213
                %v215 = vld [vmem:[%s189 + $0xc0] sm:$0xff]
                %216 = vst [vmem:[%s190 + $0x60] sm:$0xff] %v215
                %v217 = vld [vmem:[%s189 + $0xd0] sm:$0xff]
                %218 = vst [vmem:[%s190 + $0x68] sm:$0xff] %v217
                %v219 = vld [vmem:[%s189 + $0xe0] sm:$0xff]
                %220 = vst [vmem:[%s190 + $0x70] sm:$0xff] %v219
                %v221 = vld [vmem:[%s189 + $0xf0] sm:$0xff]
                %222 = vst [vmem:[%s190 + $0x78] sm:$0xff] %v221
                %v223 = vld [vmem:[%s189 + $0x100] sm:$0xff]
                %224 = vst [vmem:[%s190 + $0x80] sm:$0xff] %v223
                %v225 = vld [vmem:[%s189 + $0x110] sm:$0xff]
                %226 = vst [vmem:[%s190 + $0x88] sm:$0xff] %v225
                %v227 = vld [vmem:[%s189 + $0x120] sm:$0xff]
                %228 = vst [vmem:[%s190 + $0x90] sm:$0xff] %v227
                %v229 = vld [vmem:[%s189 + $0x130] sm:$0xff]
                %230 = vst [vmem:[%s190 + $0x98] sm:$0xff] %v229
                %v231 = vld [vmem:[%s189 + $0x140] sm:$0xff]
                %232 = vst [vmem:[%s190 + $0xa0] sm:$0xff] %v231
                %v233 = vld [vmem:[%s189 + $0x150] sm:$0xff]
                %234 = vst [vmem:[%s190 + $0xa8] sm:$0xff] %v233
                %v235 = vld [vmem:[%s189 + $0x160] sm:$0xff]
                %236 = vst [vmem:[%s190 + $0xb0] sm:$0xff] %v235
                %v237 = vld [vmem:[%s189 + $0x170] sm:$0xff]
                %238 = vst [vmem:[%s190 + $0xb8] sm:$0xff] %v237
                %v239 = vld [vmem:[%s189 + $0x180] sm:$0xff]
                %240 = vst [vmem:[%s190 + $0xc0] sm:$0xff] %v239
                %v241 = vld [vmem:[%s189 + $0x190] sm:$0xff]
                %242 = vst [vmem:[%s190 + $0xc8] sm:$0xff] %v241
                %v243 = vld [vmem:[%s189 + $0x1a0] sm:$0xff]
                %244 = vst [vmem:[%s190 + $0xd0] sm:$0xff] %v243
                %v245 = vld [vmem:[%s189 + $0x1b0] sm:$0xff]
                %246 = vst [vmem:[%s190 + $0xd8] sm:$0xff] %v245
                %v247 = vld [vmem:[%s189 + $0x1c0] sm:$0xff]
                %248 = vst [vmem:[%s190 + $0xe0] sm:$0xff] %v247
                %v249 = vld [vmem:[%s189 + $0x1d0] sm:$0xff]
                %250 = vst [vmem:[%s190 + $0xe8] sm:$0xff] %v249
                %v251 = vld [vmem:[%s189 + $0x1e0] sm:$0xff]
                %252 = vst [vmem:[%s190 + $0xf0] sm:$0xff] %v251
                %v253 = vld [vmem:[%s189 + $0x1f0] sm:$0xff]
                %254 = vst [vmem:[%s190 + $0xf8] sm:$0xff] %v253
              $region41: #{bart_speech_ner_forward.35} parent=35 // loop_footer
                %s188 = sadd.s32 1, %s184
              $region42: #{bart_speech_ner_forward.35} parent=35 // loop_footer_branch
                %183 = sbr.rel target = $region38
              $region43: #{bart_speech_ner_forward.35} parent=35 // loop_exit
                _
            $region36: #{bart_speech_ner_forward.35} parent=27 // pred_fallthru
              _
          $region28: #{bart_speech_ner_forward.35} parent=23 // pred_fallthru
            _
          %331 = vnop
        $region24: #{bart_speech_ner_forward.35} parent=19 // pred_fallthru
          _
        // Predicated region
        $region59: #{bart_speech_ner_forward.35} parent=19 // pred_check
          %p332 = pneg %p78
        $region60: #{bart_speech_ner_forward.35} parent=19 // pred_check_branch
          %334 = sbr.rel (%p332) target = $region62
        $region61: #{bart_speech_ner_forward.35} parent=19 // pred_region
          %s335 = smul.u32 32, %s18
          %p336 = scmp.lt.s32.totalorder %s335, 63
          %s337 = scalar_select %p336, %s335, 63
          %p338 = scmp.lt.s32.totalorder %s17, 0
          %s339 = scalar_select %p338, %s17, 0
          %s340 = sadd.s32 %s339, %s337
          %s341 = smul.addr %s340, 4
          %s342 = scalar_lea.vmem %s1, %s341
          %s343 = smul.u32 32, %s18
        $region62: #{bart_speech_ner_forward.35} parent=19 // pred_fallthru
          _
      $region20: #{bart_speech_ner_forward.35} parent=5 // pred_fallthru
        _
      %p344 = scmp.le.s32.totalorder 1, %s9
      %p345 = scmp.lt.s32.totalorder %s9, 7
      %p346 = pnand %p344, %p345
      %p347 = pneg %p346
      // Predicated region
      $region63: #{bart_speech_ner_forward.35} parent=5 // pred_check
        _
      $region64: #{bart_speech_ner_forward.35} parent=5 // pred_check_branch
        %349 = sbr.rel (%p346) target = $region66
      $region65: #{bart_speech_ner_forward.35} parent=5 // pred_region
        %s350 = ssub.s32 %s9, 1
        %s351 = sand.u32 %s43, 1
        %s352 = sand.u32 %s43, 1
        %s353 = smul.addr %s352, 256
        %s354 = scalar_lea.vmem [#allocation3], %s353
        // Predicated region
        $region67: #{bart_speech_ner_forward.35} parent=65 // pred_check
          %p355 = pneg %p56
        $region68: #{bart_speech_ner_forward.35} parent=65 // pred_check_branch
          %357 = sbr.rel (%p355) target = $region70
        $region69: #{bart_speech_ner_forward.35} parent=65 // pred_region
          _
        $region70: #{bart_speech_ner_forward.35} parent=65 // pred_fallthru
          _
        %s358 = sand.u32 %s43, 1
        %s359 = sand.u32 %s43, 1
        %s360 = smul.addr %s359, 256
        %s361 = scalar_lea.vmem [#allocation3], %s360
        %p362 = pneg %p56
        %p363 = pneg %p53
        %s364 = smul.u32 32, %s21
        %p365 = scmp.lt.s32.totalorder %s364, 63
        %s366 = scalar_select %p365, %s364, 63
        %p367 = scmp.lt.s32.totalorder %s20, 0
        %s368 = scalar_select %p367, %s20, 0
        %s369 = sadd.s32 %s368, %s366
        %s370 = smul.addr %s369, 4
        %s371 = scalar_lea.vmem %s1, %s370
        %p372 = pneg %p84
        %p373 = pneg %p81
        %p374 = scmp.lt.s32.totalorder %s20, 0
        %s375 = scalar_select %p374, %s20, 0
        %s376 = scalar_lea.vmem %s2, %s375
        %p377 = pneg %p110
        %p378 = pneg %p107
        %p379 = pneg %p138
        %p380 = pneg %p135
        %s381 = smul.u32 32, %s19
        %p382 = scmp.lt.s32.totalorder %s381, 95
        %s383 = scalar_select %p382, %s381, 95
        %p384 = scmp.lt.s32.totalorder %s20, 0
        %s385 = scalar_select %p384, %s20, 0
        %s386 = sadd.s32 %s385, %s383
        %s387 = smul.addr %s386, 8
        %s388 = scalar_lea.vmem %s3, %s387
        %s389 = smul.u32 32, %s19
        %s390 = smul.u32 2, %s21
        %s391 = smul.u32 32, %s21
        %p392 = scmp.lt.s32.totalorder %s391, 63
        %s393 = scalar_select %p392, %s391, 63
        %p394 = scmp.lt.s32.totalorder %s20, 0
        %s395 = scalar_select %p394, %s20, 0
        %s396 = sadd.s32 %s395, %s393
        %s397 = smul.addr %s396, 4
        %s398 = scalar_lea.vmem %s1, %s397
        %s399 = smul.u32 32, %s21
        %p400 = scmp.lt.s32.totalorder %s20, 0
        %s401 = scalar_select %p400, %s20, 0
        %s402 = scalar_lea.vmem %s2, %s401
        %s403 = smul.u32 32, %s19
        %p404 = scmp.lt.s32.totalorder %s403, 95
        %s405 = scalar_select %p404, %s403, 95
        %p406 = scmp.lt.s32.totalorder %s20, 0
        %s407 = scalar_select %p406, %s20, 0
        %s408 = sadd.s32 %s407, %s405
        %s409 = smul.addr %s408, 8
        %s410 = scalar_lea.vmem %s3, %s409
        %s411 = smul.u32 32, %s19
        %p413 = scmp.eq.s32.totalorder %s21, 0
        // Predicated region
        $region71: #{bart_speech_ner_forward.35} parent=65 // pred_check
          %p414 = pneg %p413
        $region72: #{bart_speech_ner_forward.35} parent=65 // pred_check_branch
          %416 = sbr.rel (%p414) target = $region74
        $region73: #{bart_speech_ner_forward.35} parent=65 // pred_region
          %417 = vst [vmem:[#allocation2] sm:$0xff] 0.0
          %418 = vst [vmem:[#allocation2 + $0x8] sm:$0xff] 0.0
          %419 = vst [vmem:[#allocation2 + $0x10] sm:$0xff] 0.0
          %420 = vst [vmem:[#allocation2 + $0x18] sm:$0xff] 0.0
          %421 = vst [vmem:[#allocation2 + $0x20] sm:$0xff] 0.0
          %422 = vst [vmem:[#allocation2 + $0x28] sm:$0xff] 0.0
          %423 = vst [vmem:[#allocation2 + $0x30] sm:$0xff] 0.0
          %424 = vst [vmem:[#allocation2 + $0x38] sm:$0xff] 0.0
          %425 = vst [vmem:[#allocation2 + $0x40] sm:$0xff] 0.0
          %426 = vst [vmem:[#allocation2 + $0x48] sm:$0xff] 0.0
          %427 = vst [vmem:[#allocation2 + $0x50] sm:$0xff] 0.0
          %428 = vst [vmem:[#allocation2 + $0x58] sm:$0xff] 0.0
          %429 = vst [vmem:[#allocation2 + $0x60] sm:$0xff] 0.0
          %430 = vst [vmem:[#allocation2 + $0x68] sm:$0xff] 0.0
          %431 = vst [vmem:[#allocation2 + $0x70] sm:$0xff] 0.0
          %432 = vst [vmem:[#allocation2 + $0x78] sm:$0xff] 0.0
          %433 = vst [vmem:[#allocation2 + $0x80] sm:$0xff] 0.0
          %434 = vst [vmem:[#allocation2 + $0x88] sm:$0xff] 0.0
          %435 = vst [vmem:[#allocation2 + $0x90] sm:$0xff] 0.0
          %436 = vst [vmem:[#allocation2 + $0x98] sm:$0xff] 0.0
          %437 = vst [vmem:[#allocation2 + $0xa0] sm:$0xff] 0.0
          %438 = vst [vmem:[#allocation2 + $0xa8] sm:$0xff] 0.0
          %439 = vst [vmem:[#allocation2 + $0xb0] sm:$0xff] 0.0
          %440 = vst [vmem:[#allocation2 + $0xb8] sm:$0xff] 0.0
          %441 = vst [vmem:[#allocation2 + $0xc0] sm:$0xff] 0.0
          %442 = vst [vmem:[#allocation2 + $0xc8] sm:$0xff] 0.0
          %443 = vst [vmem:[#allocation2 + $0xd0] sm:$0xff] 0.0
          %444 = vst [vmem:[#allocation2 + $0xd8] sm:$0xff] 0.0
          %445 = vst [vmem:[#allocation2 + $0xe0] sm:$0xff] 0.0
          %446 = vst [vmem:[#allocation2 + $0xe8] sm:$0xff] 0.0
          %447 = vst [vmem:[#allocation2 + $0xf0] sm:$0xff] 0.0
          %448 = vst [vmem:[#allocation2 + $0xf8] sm:$0xff] 0.0
        $region74: #{bart_speech_ner_forward.35} parent=65 // pred_fallthru
          _
        %v449 = vld [vmem:[#allocation2] sm:$0xff]
        %v450 = vld [vmem:[#allocation2 + $0x8] sm:$0xff]
        %v451 = vld [vmem:[#allocation2 + $0x10] sm:$0xff]
        %v452 = vld [vmem:[#allocation2 + $0x18] sm:$0xff]
        %v453 = vld [vmem:[#allocation2 + $0x20] sm:$0xff]
        %v454 = vld [vmem:[#allocation2 + $0x28] sm:$0xff]
        %v455 = vld [vmem:[#allocation2 + $0x30] sm:$0xff]
        %v456 = vld [vmem:[#allocation2 + $0x38] sm:$0xff]
        %v457 = vld [vmem:[#allocation2 + $0x40] sm:$0xff]
        %v458 = vld [vmem:[#allocation2 + $0x48] sm:$0xff]
        %v459 = vld [vmem:[#allocation2 + $0x50] sm:$0xff]
        %v460 = vld [vmem:[#allocation2 + $0x58] sm:$0xff]
        %v461 = vld [vmem:[#allocation2 + $0x60] sm:$0xff]
        %v462 = vld [vmem:[#allocation2 + $0x68] sm:$0xff]
        %v463 = vld [vmem:[#allocation2 + $0x70] sm:$0xff]
        %v464 = vld [vmem:[#allocation2 + $0x78] sm:$0xff]
        %v465 = vld [vmem:[#allocation2 + $0x80] sm:$0xff]
        %v466 = vld [vmem:[#allocation2 + $0x88] sm:$0xff]
        %v467 = vld [vmem:[#allocation2 + $0x90] sm:$0xff]
        %v468 = vld [vmem:[#allocation2 + $0x98] sm:$0xff]
        %v469 = vld [vmem:[#allocation2 + $0xa0] sm:$0xff]
        %v470 = vld [vmem:[#allocation2 + $0xa8] sm:$0xff]
        %v471 = vld [vmem:[#allocation2 + $0xb0] sm:$0xff]
        %v472 = vld [vmem:[#allocation2 + $0xb8] sm:$0xff]
        %v473 = vld [vmem:[#allocation2 + $0xc0] sm:$0xff]
        %v474 = vld [vmem:[#allocation2 + $0xc8] sm:$0xff]
        %v475 = vld [vmem:[#allocation2 + $0xd0] sm:$0xff]
        %v476 = vld [vmem:[#allocation2 + $0xd8] sm:$0xff]
        %v477 = vld [vmem:[#allocation2 + $0xe0] sm:$0xff]
        %v478 = vld [vmem:[#allocation2 + $0xe8] sm:$0xff]
        %v479 = vld [vmem:[#allocation2 + $0xf0] sm:$0xff]
        %v480 = vld [vmem:[#allocation2 + $0xf8] sm:$0xff]
        %v481 = vld [vmem:[%s354] sm:$0xff]
        %v482 = vld [vmem:[%s354 + $0x8] sm:$0xff]
        %v483 = vld [vmem:[%s354 + $0x10] sm:$0xff]
        %v484 = vld [vmem:[%s354 + $0x18] sm:$0xff]
        %v485 = vld [vmem:[%s354 + $0x20] sm:$0xff]
        %v486 = vld [vmem:[%s354 + $0x28] sm:$0xff]
        %v487 = vld [vmem:[%s354 + $0x30] sm:$0xff]
        %v488 = vld [vmem:[%s354 + $0x38] sm:$0xff]
        %v489 = vld [vmem:[%s354 + $0x40] sm:$0xff]
        %v490 = vld [vmem:[%s354 + $0x48] sm:$0xff]
        %v491 = vld [vmem:[%s354 + $0x50] sm:$0xff]
        %v492 = vld [vmem:[%s354 + $0x58] sm:$0xff]
        %v493 = vld [vmem:[%s354 + $0x60] sm:$0xff]
        %v494 = vld [vmem:[%s354 + $0x68] sm:$0xff]
        %v495 = vld [vmem:[%s354 + $0x70] sm:$0xff]
        %v496 = vld [vmem:[%s354 + $0x78] sm:$0xff]
        %v497 = vld [vmem:[%s354 + $0x80] sm:$0xff]
        %v498 = vld [vmem:[%s354 + $0x88] sm:$0xff]
        %v499 = vld [vmem:[%s354 + $0x90] sm:$0xff]
        %v500 = vld [vmem:[%s354 + $0x98] sm:$0xff]
        %v501 = vld [vmem:[%s354 + $0xa0] sm:$0xff]
        %v502 = vld [vmem:[%s354 + $0xa8] sm:$0xff]
        %v503 = vld [vmem:[%s354 + $0xb0] sm:$0xff]
        %v504 = vld [vmem:[%s354 + $0xb8] sm:$0xff]
        %v505 = vld [vmem:[%s354 + $0xc0] sm:$0xff]
        %v506 = vld [vmem:[%s354 + $0xc8] sm:$0xff]
        %v507 = vld [vmem:[%s354 + $0xd0] sm:$0xff]
        %v508 = vld [vmem:[%s354 + $0xd8] sm:$0xff]
        %v509 = vld [vmem:[%s354 + $0xe0] sm:$0xff]
        %v510 = vld [vmem:[%s354 + $0xe8] sm:$0xff]
        %v511 = vld [vmem:[%s354 + $0xf0] sm:$0xff]
        %v512 = vld [vmem:[%s354 + $0xf8] sm:$0xff]
        %v513 = vld [vmem:[%s398] sm:$0xf]
        %v514 = vld [vmem:[%s398 + $0x4] sm:$0xf]
        %v515 = vld [vmem:[%s398 + $0x8] sm:$0xf]
        %v516 = vld [vmem:[%s398 + $0xc] sm:$0xf]
        %v517 = vld [vmem:[%s398 + $0x10] sm:$0xf]
        %v518 = vld [vmem:[%s398 + $0x14] sm:$0xf]
        %v519 = vld [vmem:[%s398 + $0x18] sm:$0xf]
        %v520 = vld [vmem:[%s398 + $0x1c] sm:$0xf]
        %v521 = vld [vmem:[%s398 + $0x20] sm:$0xf]
        %v522 = vld [vmem:[%s398 + $0x24] sm:$0xf]
        %v523 = vld [vmem:[%s398 + $0x28] sm:$0xf]
        %v524 = vld [vmem:[%s398 + $0x2c] sm:$0xf]
        %v525 = vld [vmem:[%s398 + $0x30] sm:$0xf]
        %v526 = vld [vmem:[%s398 + $0x34] sm:$0xf]
        %v527 = vld [vmem:[%s398 + $0x38] sm:$0xf]
        %v528 = vld [vmem:[%s398 + $0x3c] sm:$0xf]
        %v529 = vld [vmem:[%s398 + $0x40] sm:$0xf]
        %v530 = vld [vmem:[%s398 + $0x44] sm:$0xf]
        %v531 = vld [vmem:[%s398 + $0x48] sm:$0xf]
        %v532 = vld [vmem:[%s398 + $0x4c] sm:$0xf]
        %v533 = vld [vmem:[%s398 + $0x50] sm:$0xf]
        %v534 = vld [vmem:[%s398 + $0x54] sm:$0xf]
        %v535 = vld [vmem:[%s398 + $0x58] sm:$0xf]
        %v536 = vld [vmem:[%s398 + $0x5c] sm:$0xf]
        %v537 = vld [vmem:[%s398 + $0x60] sm:$0xf]
        %v538 = vld [vmem:[%s398 + $0x64] sm:$0xf]
        %v539 = vld [vmem:[%s398 + $0x68] sm:$0xf]
        %v540 = vld [vmem:[%s398 + $0x6c] sm:$0xf]
        %v541 = vld [vmem:[%s398 + $0x70] sm:$0xf]
        %v542 = vld [vmem:[%s398 + $0x74] sm:$0xf]
        %v543 = vld [vmem:[%s398 + $0x78] sm:$0xf]
        %v544 = vld [vmem:[%s398 + $0x7c] sm:$0xf]
        %v577 = vunpack.c.l.b16 %v481
        %v578 = vunpack.c.h.b16 %v481
        %v579 = vunpack.c.l.b16 %v482
        %v580 = vunpack.c.h.b16 %v482
        %v581 = vunpack.c.l.b16 %v483
        %v582 = vunpack.c.h.b16 %v483
        %v583 = vunpack.c.l.b16 %v484
        %v584 = vunpack.c.h.b16 %v484
        %v585 = vunpack.c.l.b16 %v485
        %v586 = vunpack.c.h.b16 %v485
        %v587 = vunpack.c.l.b16 %v486
        %v588 = vunpack.c.h.b16 %v486
        %v589 = vunpack.c.l.b16 %v487
        %v590 = vunpack.c.h.b16 %v487
        %v591 = vunpack.c.l.b16 %v488
        %v592 = vunpack.c.h.b16 %v488
        %v593 = vunpack.c.l.b16 %v489
        %v594 = vunpack.c.h.b16 %v489
        %v595 = vunpack.c.l.b16 %v490
        %v596 = vunpack.c.h.b16 %v490
        %v597 = vunpack.c.l.b16 %v491
        %v598 = vunpack.c.h.b16 %v491
        %v599 = vunpack.c.l.b16 %v492
        %v600 = vunpack.c.h.b16 %v492
        %v601 = vunpack.c.l.b16 %v493
        %v602 = vunpack.c.h.b16 %v493
        %v603 = vunpack.c.l.b16 %v494
        %v604 = vunpack.c.h.b16 %v494
        %v605 = vunpack.c.l.b16 %v495
        %v606 = vunpack.c.h.b16 %v495
        %v607 = vunpack.c.l.b16 %v496
        %v608 = vunpack.c.h.b16 %v496
        %v609 = vunpack.c.l.b16 %v497
        %v610 = vunpack.c.h.b16 %v497
        %v611 = vunpack.c.l.b16 %v498
        %v612 = vunpack.c.h.b16 %v498
        %v613 = vunpack.c.l.b16 %v499
        %v614 = vunpack.c.h.b16 %v499
        %v615 = vunpack.c.l.b16 %v500
        %v616 = vunpack.c.h.b16 %v500
        %v617 = vunpack.c.l.b16 %v501
        %v618 = vunpack.c.h.b16 %v501
        %v619 = vunpack.c.l.b16 %v502
        %v620 = vunpack.c.h.b16 %v502
        %v621 = vunpack.c.l.b16 %v503
        %v622 = vunpack.c.h.b16 %v503
        %v623 = vunpack.c.l.b16 %v504
        %v624 = vunpack.c.h.b16 %v504
        %v625 = vunpack.c.l.b16 %v505
        %v626 = vunpack.c.h.b16 %v505
        %v627 = vunpack.c.l.b16 %v506
        %v628 = vunpack.c.h.b16 %v506
        %v629 = vunpack.c.l.b16 %v507
        %v630 = vunpack.c.h.b16 %v507
        %v631 = vunpack.c.l.b16 %v508
        %v632 = vunpack.c.h.b16 %v508
        %v633 = vunpack.c.l.b16 %v509
        %v634 = vunpack.c.h.b16 %v509
        %v635 = vunpack.c.l.b16 %v510
        %v636 = vunpack.c.h.b16 %v510
        %v637 = vunpack.c.l.b16 %v511
        %v638 = vunpack.c.h.b16 %v511
        %v639 = vunpack.c.l.b16 %v512
        %v640 = vunpack.c.h.b16 %v512
        %v641 = vpack.c.b16 %v579, %v577
        %v642 = vpack.c.b16 %v580, %v578
        %v643 = vpack.c.b16 %v583, %v581
        %v644 = vpack.c.b16 %v584, %v582
        %v645 = vpack.c.b16 %v587, %v585
        %v646 = vpack.c.b16 %v588, %v586
        %v647 = vpack.c.b16 %v591, %v589
        %v648 = vpack.c.b16 %v592, %v590
        %v649 = vpack.c.b16 %v595, %v593
        %v650 = vpack.c.b16 %v596, %v594
        %v651 = vpack.c.b16 %v599, %v597
        %v652 = vpack.c.b16 %v600, %v598
        %v653 = vpack.c.b16 %v603, %v601
        %v654 = vpack.c.b16 %v604, %v602
        %v655 = vpack.c.b16 %v607, %v605
        %v656 = vpack.c.b16 %v608, %v606
        %v657 = vpack.c.b16 %v611, %v609
        %v658 = vpack.c.b16 %v612, %v610
        %v659 = vpack.c.b16 %v615, %v613
        %v660 = vpack.c.b16 %v616, %v614
        %v661 = vpack.c.b16 %v619, %v617
        %v662 = vpack.c.b16 %v620, %v618
        %v663 = vpack.c.b16 %v623, %v621
        %v664 = vpack.c.b16 %v624, %v622
        %v665 = vpack.c.b16 %v627, %v625
        %v666 = vpack.c.b16 %v628, %v626
        %v667 = vpack.c.b16 %v631, %v629
        %v668 = vpack.c.b16 %v632, %v630
        %v669 = vpack.c.b16 %v635, %v633
        %v670 = vpack.c.b16 %v636, %v634
        %v671 = vpack.c.b16 %v639, %v637
        %v672 = vpack.c.b16 %v640, %v638
        %v737 = vunpack.c.l.b16 %v513
        %v738 = vunpack.c.l.b16 %v514
        %v739 = vunpack.c.l.b16 %v515
        %v740 = vunpack.c.l.b16 %v516
        %v741 = vunpack.c.l.b16 %v517
        %v742 = vunpack.c.l.b16 %v518
        %v743 = vunpack.c.l.b16 %v519
        %v744 = vunpack.c.l.b16 %v520
        %v745 = vunpack.c.l.b16 %v521
        %v746 = vunpack.c.l.b16 %v522
        %v747 = vunpack.c.l.b16 %v523
        %v748 = vunpack.c.l.b16 %v524
        %v749 = vunpack.c.l.b16 %v525
        %v750 = vunpack.c.l.b16 %v526
        %v751 = vunpack.c.l.b16 %v527
        %v752 = vunpack.c.l.b16 %v528
        %v753 = vunpack.c.l.b16 %v529
        %v754 = vunpack.c.l.b16 %v530
        %v755 = vunpack.c.l.b16 %v531
        %v756 = vunpack.c.l.b16 %v532
        %v757 = vunpack.c.l.b16 %v533
        %v758 = vunpack.c.l.b16 %v534
        %v759 = vunpack.c.l.b16 %v535
        %v760 = vunpack.c.l.b16 %v536
        %v761 = vunpack.c.l.b16 %v537
        %v762 = vunpack.c.l.b16 %v538
        %v763 = vunpack.c.l.b16 %v539
        %v764 = vunpack.c.l.b16 %v540
        %v765 = vunpack.c.l.b16 %v541
        %v766 = vunpack.c.l.b16 %v542
        %v767 = vunpack.c.l.b16 %v543
        %v768 = vunpack.c.l.b16 %v544
        %v769 = vpack.c.b16 %v738, %v737
        %v770 = vpack.c.b16 %v740, %v739
        %v771 = vpack.c.b16 %v742, %v741
        %v772 = vpack.c.b16 %v744, %v743
        %v773 = vpack.c.b16 %v746, %v745
        %v774 = vpack.c.b16 %v748, %v747
        %v775 = vpack.c.b16 %v750, %v749
        %v776 = vpack.c.b16 %v752, %v751
        %v777 = vpack.c.b16 %v754, %v753
        %v778 = vpack.c.b16 %v756, %v755
        %v779 = vpack.c.b16 %v758, %v757
        %v780 = vpack.c.b16 %v760, %v759
        %v781 = vpack.c.b16 %v762, %v761
        %v782 = vpack.c.b16 %v764, %v763
        %v783 = vpack.c.b16 %v766, %v765
        %v784 = vpack.c.b16 %v768, %v767
        %801 = vmatprep.subr.bf16.mxu0 0
        %802 = vmatpush1.bf16.msra.mxu0 %v769
        %803 = vmatprep.subr.bf16.mxu0 0
        %804 = vmatpush1.bf16.msra.mxu0 %v770
        %805 = vmatprep.subr.bf16.mxu0 0
        %806 = vmatpush1.bf16.msra.mxu0 %v771
        %807 = vmatprep.subr.bf16.mxu0 0
        %808 = vmatpush1.bf16.msra.mxu0 %v772
        %809 = vmatprep.subr.bf16.mxu0 0
        %810 = vmatpush1.bf16.msra.mxu0 %v773
        %811 = vmatprep.subr.bf16.mxu0 0
        %812 = vmatpush1.bf16.msra.mxu0 %v774
        %813 = vmatprep.subr.bf16.mxu0 0
        %814 = vmatpush1.bf16.msra.mxu0 %v775
        %815 = vmatprep.subr.bf16.mxu0 0
        %816 = vmatpush1.bf16.msra.mxu0 %v776
        %817 = vmatprep.subr.bf16.mxu0 0
        %818 = vmatpush1.bf16.msra.mxu0 %v777
        %819 = vmatprep.subr.bf16.mxu0 0
        %820 = vmatpush1.bf16.msra.mxu0 %v778
        %821 = vmatprep.subr.bf16.mxu0 0
        %822 = vmatpush1.bf16.msra.mxu0 %v779
        %823 = vmatprep.subr.bf16.mxu0 0
        %824 = vmatpush1.bf16.msra.mxu0 %v780
        %825 = vmatprep.subr.bf16.mxu0 0
        %826 = vmatpush1.bf16.msra.mxu0 %v781
        %827 = vmatprep.subr.bf16.mxu0 0
        %828 = vmatpush1.bf16.msra.mxu0 %v782
        %829 = vmatprep.subr.bf16.mxu0 0
        %830 = vmatpush1.bf16.msra.mxu0 %v783
        %831 = vmatprep.subr.bf16.mxu0 0
        %832 = vmatpush1.bf16.msra.mxu0 %v784
        %833 = vmatprep.mubr.bf16.mxu0 %v642
        %834 = vmatmul.mubr.bf16.gmra.mrb[0].mxu0 %v641
        %v835 = vpop.f32.mrb[0].mxu0
        %v836 = vadd.f32 0.0, %v835
        %v837 = vpop.f32.mrb[0].mxu0
        %v838 = vpop.f32.mrb[0].mxu0
        %v839 = vadd.f32 0.0, %v838
        %v840 = vpop.f32.mrb[0].mxu0
        %841 = vmatprep.mubr.bf16.mxu0 %v644
        %842 = vmatmul.mubr.bf16.gmra.mrb[0].mxu0 %v643
        %v843 = vpop.f32.mrb[0].mxu0
        %v844 = vadd.f32 0.0, %v843
        %v845 = vpop.f32.mrb[0].mxu0
        %v846 = vpop.f32.mrb[0].mxu0
        %v847 = vadd.f32 0.0, %v846
        %v848 = vpop.f32.mrb[0].mxu0
        %849 = vmatprep.mubr.bf16.mxu0 %v646
        %850 = vmatmul.mubr.bf16.gmra.mrb[0].mxu0 %v645
        %v851 = vpop.f32.mrb[0].mxu0
        %v852 = vadd.f32 0.0, %v851
        %v853 = vpop.f32.mrb[0].mxu0
        %v854 = vpop.f32.mrb[0].mxu0
        %v855 = vadd.f32 0.0, %v854
        %v856 = vpop.f32.mrb[0].mxu0
        %857 = vmatprep.mubr.bf16.mxu0 %v648
        %858 = vmatmul.mubr.bf16.gmra.mrb[0].mxu0 %v647
        %v859 = vpop.f32.mrb[0].mxu0
        %v860 = vadd.f32 0.0, %v859
        %v861 = vpop.f32.mrb[0].mxu0
        %v862 = vpop.f32.mrb[0].mxu0
        %v863 = vadd.f32 0.0, %v862
        %v864 = vpop.f32.mrb[0].mxu0
        %865 = vmatprep.mubr.bf16.mxu0 %v650
        %866 = vmatmul.mubr.bf16.gmra.mrb[0].mxu0 %v649
        %v867 = vpop.f32.mrb[0].mxu0
        %v868 = vadd.f32 0.0, %v867
        %v869 = vpop.f32.mrb[0].mxu0
        %v870 = vpop.f32.mrb[0].mxu0
        %v871 = vadd.f32 0.0, %v870
        %v872 = vpop.f32.mrb[0].mxu0
        %873 = vmatprep.mubr.bf16.mxu0 %v652
        %874 = vmatmul.mubr.bf16.gmra.mrb[0].mxu0 %v651
        %v875 = vpop.f32.mrb[0].mxu0
        %v876 = vadd.f32 0.0, %v875
        %v877 = vpop.f32.mrb[0].mxu0
        %v878 = vpop.f32.mrb[0].mxu0
        %v879 = vadd.f32 0.0, %v878
        %v880 = vpop.f32.mrb[0].mxu0
        %881 = vmatprep.mubr.bf16.mxu0 %v654
        %882 = vmatmul.mubr.bf16.gmra.mrb[0].mxu0 %v653
        %v883 = vpop.f32.mrb[0].mxu0
        %v884 = vadd.f32 0.0, %v883
        %v885 = vpop.f32.mrb[0].mxu0
        %v886 = vpop.f32.mrb[0].mxu0
        %v887 = vadd.f32 0.0, %v886
        %v888 = vpop.f32.mrb[0].mxu0
        %889 = vmatprep.mubr.bf16.mxu0 %v656
        %890 = vmatmul.mubr.bf16.gmra.mrb[0].mxu0 %v655
        %v891 = vpop.f32.mrb[0].mxu0
        %v892 = vadd.f32 0.0, %v891
        %v893 = vpop.f32.mrb[0].mxu0
        %v894 = vpop.f32.mrb[0].mxu0
        %v895 = vadd.f32 0.0, %v894
        %v896 = vpop.f32.mrb[0].mxu0
        %897 = vmatprep.mubr.bf16.mxu0 %v658
        %898 = vmatmul.mubr.bf16.gmra.mrb[0].mxu0 %v657
        %v899 = vpop.f32.mrb[0].mxu0
        %v900 = vadd.f32 0.0, %v899
        %v901 = vpop.f32.mrb[0].mxu0
        %v902 = vpop.f32.mrb[0].mxu0
        %v903 = vadd.f32 0.0, %v902
        %v904 = vpop.f32.mrb[0].mxu0
        %905 = vmatprep.mubr.bf16.mxu0 %v660
        %906 = vmatmul.mubr.bf16.gmra.mrb[0].mxu0 %v659
        %v907 = vpop.f32.mrb[0].mxu0
        %v908 = vadd.f32 0.0, %v907
        %v909 = vpop.f32.mrb[0].mxu0
        %v910 = vpop.f32.mrb[0].mxu0
        %v911 = vadd.f32 0.0, %v910
        %v912 = vpop.f32.mrb[0].mxu0
        %913 = vmatprep.mubr.bf16.mxu0 %v662
        %914 = vmatmul.mubr.bf16.gmra.mrb[0].mxu0 %v661
        %v915 = vpop.f32.mrb[0].mxu0
        %v916 = vadd.f32 0.0, %v915
        %v917 = vpop.f32.mrb[0].mxu0
        %v918 = vpop.f32.mrb[0].mxu0
        %v919 = vadd.f32 0.0, %v918
        %v920 = vpop.f32.mrb[0].mxu0
        %921 = vmatprep.mubr.bf16.mxu0 %v664
        %922 = vmatmul.mubr.bf16.gmra.mrb[0].mxu0 %v663
        %v923 = vpop.f32.mrb[0].mxu0
        %v924 = vadd.f32 0.0, %v923
        %v925 = vpop.f32.mrb[0].mxu0
        %v926 = vpop.f32.mrb[0].mxu0
        %v927 = vadd.f32 0.0, %v926
        %v928 = vpop.f32.mrb[0].mxu0
        %929 = vmatprep.mubr.bf16.mxu0 %v666
        %930 = vmatmul.mubr.bf16.gmra.mrb[0].mxu0 %v665
        %v931 = vpop.f32.mrb[0].mxu0
        %v932 = vadd.f32 0.0, %v931
        %v933 = vpop.f32.mrb[0].mxu0
        %v934 = vpop.f32.mrb[0].mxu0
        %v935 = vadd.f32 0.0, %v934
        %v936 = vpop.f32.mrb[0].mxu0
        %937 = vmatprep.mubr.bf16.mxu0 %v668
        %938 = vmatmul.mubr.bf16.gmra.mrb[0].mxu0 %v667
        %v939 = vpop.f32.mrb[0].mxu0
        %v940 = vadd.f32 0.0, %v939
        %v941 = vpop.f32.mrb[0].mxu0
        %v942 = vpop.f32.mrb[0].mxu0
        %v943 = vadd.f32 0.0, %v942
        %v944 = vpop.f32.mrb[0].mxu0
        %945 = vmatprep.mubr.bf16.mxu0 %v670
        %946 = vmatmul.mubr.bf16.gmra.mrb[0].mxu0 %v669
        %v947 = vpop.f32.mrb[0].mxu0
        %v948 = vadd.f32 0.0, %v947
        %v949 = vpop.f32.mrb[0].mxu0
        %v950 = vpop.f32.mrb[0].mxu0
        %v951 = vadd.f32 0.0, %v950
        %v952 = vpop.f32.mrb[0].mxu0
        %953 = vmatprep.mubr.bf16.mxu0 %v672
        %954 = vmatmul.mubr.bf16.gmra.mrb[0].mxu0 %v671
        %v955 = vpop.f32.mrb[0].mxu0
        %v956 = vadd.f32 0.0, %v955
        %v957 = vpop.f32.mrb[0].mxu0
        %v958 = vpop.f32.mrb[0].mxu0
        %v959 = vadd.f32 0.0, %v958
        %v960 = vpop.f32.mrb[0].mxu0
        %961 = vdwg.mxu0
        %v962 = vadd.f32 %v449, %v836
        %v963 = vadd.f32 %v450, %v839
        %v964 = vadd.f32 %v451, %v844
        %v965 = vadd.f32 %v452, %v847
        %v966 = vadd.f32 %v453, %v852
        %v967 = vadd.f32 %v454, %v855
        %v968 = vadd.f32 %v455, %v860
        %v969 = vadd.f32 %v456, %v863
        %v970 = vadd.f32 %v457, %v868
        %v971 = vadd.f32 %v458, %v871
        %v972 = vadd.f32 %v459, %v876
        %v973 = vadd.f32 %v460, %v879
        %v974 = vadd.f32 %v461, %v884
        %v975 = vadd.f32 %v462, %v887
        %v976 = vadd.f32 %v463, %v892
        %v977 = vadd.f32 %v464, %v895
        %v978 = vadd.f32 %v465, %v900
        %v979 = vadd.f32 %v466, %v903
        %v980 = vadd.f32 %v467, %v908
        %v981 = vadd.f32 %v468, %v911
        %v982 = vadd.f32 %v469, %v916
        %v983 = vadd.f32 %v470, %v919
        %v984 = vadd.f32 %v471, %v924
        %v985 = vadd.f32 %v472, %v927
        %v986 = vadd.f32 %v473, %v932
        %v987 = vadd.f32 %v474, %v935
        %v988 = vadd.f32 %v475, %v940
        %v989 = vadd.f32 %v476, %v943
        %v990 = vadd.f32 %v477, %v948
        %v991 = vadd.f32 %v478, %v951
        %v992 = vadd.f32 %v479, %v956
        %v993 = vadd.f32 %v480, %v959
        %994 = vst [vmem:[#allocation2] sm:$0xff] %v962
        %995 = vst [vmem:[#allocation2 + $0x8] sm:$0xff] %v963
        %996 = vst [vmem:[#allocation2 + $0x10] sm:$0xff] %v964
        %997 = vst [vmem:[#allocation2 + $0x18] sm:$0xff] %v965
        %998 = vst [vmem:[#allocation2 + $0x20] sm:$0xff] %v966
        %999 = vst [vmem:[#allocation2 + $0x28] sm:$0xff] %v967
        %1000 = vst [vmem:[#allocation2 + $0x30] sm:$0xff] %v968
        %1001 = vst [vmem:[#allocation2 + $0x38] sm:$0xff] %v969
        %1002 = vst [vmem:[#allocation2 + $0x40] sm:$0xff] %v970
        %1003 = vst [vmem:[#allocation2 + $0x48] sm:$0xff] %v971
        %1004 = vst [vmem:[#allocation2 + $0x50] sm:$0xff] %v972
        %1005 = vst [vmem:[#allocation2 + $0x58] sm:$0xff] %v973
        %1006 = vst [vmem:[#allocation2 + $0x60] sm:$0xff] %v974
        %1007 = vst [vmem:[#allocation2 + $0x68] sm:$0xff] %v975
        %1008 = vst [vmem:[#allocation2 + $0x70] sm:$0xff] %v976
        %1009 = vst [vmem:[#allocation2 + $0x78] sm:$0xff] %v977
        %1010 = vst [vmem:[#allocation2 + $0x80] sm:$0xff] %v978
        %1011 = vst [vmem:[#allocation2 + $0x88] sm:$0xff] %v979
        %1012 = vst [vmem:[#allocation2 + $0x90] sm:$0xff] %v980
        %1013 = vst [vmem:[#allocation2 + $0x98] sm:$0xff] %v981
        %1014 = vst [vmem:[#allocation2 + $0xa0] sm:$0xff] %v982
        %1015 = vst [vmem:[#allocation2 + $0xa8] sm:$0xff] %v983
        %1016 = vst [vmem:[#allocation2 + $0xb0] sm:$0xff] %v984
        %1017 = vst [vmem:[#allocation2 + $0xb8] sm:$0xff] %v985
        %1018 = vst [vmem:[#allocation2 + $0xc0] sm:$0xff] %v986
        %1019 = vst [vmem:[#allocation2 + $0xc8] sm:$0xff] %v987
        %1020 = vst [vmem:[#allocation2 + $0xd0] sm:$0xff] %v988
        %1021 = vst [vmem:[#allocation2 + $0xd8] sm:$0xff] %v989
        %1022 = vst [vmem:[#allocation2 + $0xe0] sm:$0xff] %v990
        %1023 = vst [vmem:[#allocation2 + $0xe8] sm:$0xff] %v991
        %1024 = vst [vmem:[#allocation2 + $0xf0] sm:$0xff] %v992
        %1025 = vst [vmem:[#allocation2 + $0xf8] sm:$0xff] %v993
        %p1026 = scmp.eq.s32.totalorder %s21, 1
        // Predicated region
        $region75: #{bart_speech_ner_forward.35} parent=65 // pred_check
          %p1027 = pneg %p1026
        $region76: #{bart_speech_ner_forward.35} parent=65 // pred_check_branch
          %1029 = sbr.rel (%p1027) target = $region78
        $region77: #{bart_speech_ner_forward.35} parent=65 // pred_region
          %v1030 = vld [vmem:[#allocation2] sm:$0xff]
          %v1031 = vld [vmem:[#allocation2 + $0x8] sm:$0xff]
          %v1032 = vld [vmem:[#allocation2 + $0x10] sm:$0xff]
          %v1033 = vld [vmem:[#allocation2 + $0x18] sm:$0xff]
          %v1034 = vld [vmem:[#allocation2 + $0x20] sm:$0xff]
          %v1035 = vld [vmem:[#allocation2 + $0x28] sm:$0xff]
          %v1036 = vld [vmem:[#allocation2 + $0x30] sm:$0xff]
          %v1037 = vld [vmem:[#allocation2 + $0x38] sm:$0xff]
          %v1038 = vld [vmem:[#allocation2 + $0x40] sm:$0xff]
          %v1039 = vld [vmem:[#allocation2 + $0x48] sm:$0xff]
          %v1040 = vld [vmem:[#allocation2 + $0x50] sm:$0xff]
          %v1041 = vld [vmem:[#allocation2 + $0x58] sm:$0xff]
          %v1042 = vld [vmem:[#allocation2 + $0x60] sm:$0xff]
          %v1043 = vld [vmem:[#allocation2 + $0x68] sm:$0xff]
          %v1044 = vld [vmem:[#allocation2 + $0x70] sm:$0xff]
          %v1045 = vld [vmem:[#allocation2 + $0x78] sm:$0xff]
          %v1046 = vld [vmem:[#allocation2 + $0x80] sm:$0xff]
          %v1047 = vld [vmem:[#allocation2 + $0x88] sm:$0xff]
          %v1048 = vld [vmem:[#allocation2 + $0x90] sm:$0xff]
          %v1049 = vld [vmem:[#allocation2 + $0x98] sm:$0xff]
          %v1050 = vld [vmem:[#allocation2 + $0xa0] sm:$0xff]
          %v1051 = vld [vmem:[#allocation2 + $0xa8] sm:$0xff]
          %v1052 = vld [vmem:[#allocation2 + $0xb0] sm:$0xff]
          %v1053 = vld [vmem:[#allocation2 + $0xb8] sm:$0xff]
          %v1054 = vld [vmem:[#allocation2 + $0xc0] sm:$0xff]
          %v1055 = vld [vmem:[#allocation2 + $0xc8] sm:$0xff]
          %v1056 = vld [vmem:[#allocation2 + $0xd0] sm:$0xff]
          %v1057 = vld [vmem:[#allocation2 + $0xd8] sm:$0xff]
          %v1058 = vld [vmem:[#allocation2 + $0xe0] sm:$0xff]
          %v1059 = vld [vmem:[#allocation2 + $0xe8] sm:$0xff]
          %v1060 = vld [vmem:[#allocation2 + $0xf0] sm:$0xff]
          %v1061 = vld [vmem:[#allocation2 + $0xf8] sm:$0xff]
          %v1062 = vld [vmem:[%s402] sm:$0x1]
          %v1064 = vlaneseq
          %v1065 = vshrl.u32 %v1064, 7
          %v1066 = vsub.s32 0, %v1065
          %v1067 = vrot.slane %v1062, %v1066
          %v1069 = vadd.f32 %v1030, %v1067
          %v1070 = vadd.f32 %v1031, %v1067
          %v1071 = vadd.f32 %v1032, %v1067
          %v1072 = vadd.f32 %v1033, %v1067
          %v1073 = vadd.f32 %v1034, %v1067
          %v1074 = vadd.f32 %v1035, %v1067
          %v1075 = vadd.f32 %v1036, %v1067
          %v1076 = vadd.f32 %v1037, %v1067
          %v1077 = vadd.f32 %v1038, %v1067
          %v1078 = vadd.f32 %v1039, %v1067
          %v1079 = vadd.f32 %v1040, %v1067
          %v1080 = vadd.f32 %v1041, %v1067
          %v1081 = vadd.f32 %v1042, %v1067
          %v1082 = vadd.f32 %v1043, %v1067
          %v1083 = vadd.f32 %v1044, %v1067
          %v1084 = vadd.f32 %v1045, %v1067
          %v1085 = vadd.f32 %v1046, %v1067
          %v1086 = vadd.f32 %v1047, %v1067
          %v1087 = vadd.f32 %v1048, %v1067
          %v1088 = vadd.f32 %v1049, %v1067
          %v1089 = vadd.f32 %v1050, %v1067
          %v1090 = vadd.f32 %v1051, %v1067
          %v1091 = vadd.f32 %v1052, %v1067
          %v1092 = vadd.f32 %v1053, %v1067
          %v1093 = vadd.f32 %v1054, %v1067
          %v1094 = vadd.f32 %v1055, %v1067
          %v1095 = vadd.f32 %v1056, %v1067
          %v1096 = vadd.f32 %v1057, %v1067
          %v1097 = vadd.f32 %v1058, %v1067
          %v1098 = vadd.f32 %v1059, %v1067
          %v1099 = vadd.f32 %v1060, %v1067
          %v1100 = vadd.f32 %v1061, %v1067
          %v1101 = vmax.f32 %v1069, 0.0
          %v1102 = vmax.f32 %v1070, 0.0
          %v1103 = vmax.f32 %v1071, 0.0
          %v1104 = vmax.f32 %v1072, 0.0
          %v1105 = vmax.f32 %v1073, 0.0
          %v1106 = vmax.f32 %v1074, 0.0
          %v1107 = vmax.f32 %v1075, 0.0
          %v1108 = vmax.f32 %v1076, 0.0
          %v1109 = vmax.f32 %v1077, 0.0
          %v1110 = vmax.f32 %v1078, 0.0
          %v1111 = vmax.f32 %v1079, 0.0
          %v1112 = vmax.f32 %v1080, 0.0
          %v1113 = vmax.f32 %v1081, 0.0
          %v1114 = vmax.f32 %v1082, 0.0
          %v1115 = vmax.f32 %v1083, 0.0
          %v1116 = vmax.f32 %v1084, 0.0
          %v1117 = vmax.f32 %v1085, 0.0
          %v1118 = vmax.f32 %v1086, 0.0
          %v1119 = vmax.f32 %v1087, 0.0
          %v1120 = vmax.f32 %v1088, 0.0
          %v1121 = vmax.f32 %v1089, 0.0
          %v1122 = vmax.f32 %v1090, 0.0
          %v1123 = vmax.f32 %v1091, 0.0
          %v1124 = vmax.f32 %v1092, 0.0
          %v1125 = vmax.f32 %v1093, 0.0
          %v1126 = vmax.f32 %v1094, 0.0
          %v1127 = vmax.f32 %v1095, 0.0
          %v1128 = vmax.f32 %v1096, 0.0
          %v1129 = vmax.f32 %v1097, 0.0
          %v1130 = vmax.f32 %v1098, 0.0
          %v1131 = vmax.f32 %v1099, 0.0
          %v1132 = vmax.f32 %v1100, 0.0
          %1133 = vst [vmem:[%s410] sm:$0xff] %v1101
          %1134 = vst [vmem:[%s410 + $0x8] sm:$0xff] %v1102
          %1135 = vst [vmem:[%s410 + $0x10] sm:$0xff] %v1103
          %1136 = vst [vmem:[%s410 + $0x18] sm:$0xff] %v1104
          %1137 = vst [vmem:[%s410 + $0x20] sm:$0xff] %v1105
          %1138 = vst [vmem:[%s410 + $0x28] sm:$0xff] %v1106
          %1139 = vst [vmem:[%s410 + $0x30] sm:$0xff] %v1107
          %1140 = vst [vmem:[%s410 + $0x38] sm:$0xff] %v1108
          %1141 = vst [vmem:[%s410 + $0x40] sm:$0xff] %v1109
          %1142 = vst [vmem:[%s410 + $0x48] sm:$0xff] %v1110
          %1143 = vst [vmem:[%s410 + $0x50] sm:$0xff] %v1111
          %1144 = vst [vmem:[%s410 + $0x58] sm:$0xff] %v1112
          %1145 = vst [vmem:[%s410 + $0x60] sm:$0xff] %v1113
          %1146 = vst [vmem:[%s410 + $0x68] sm:$0xff] %v1114
          %1147 = vst [vmem:[%s410 + $0x70] sm:$0xff] %v1115
          %1148 = vst [vmem:[%s410 + $0x78] sm:$0xff] %v1116
          %1149 = vst [vmem:[%s410 + $0x80] sm:$0xff] %v1117
          %1150 = vst [vmem:[%s410 + $0x88] sm:$0xff] %v1118
          %1151 = vst [vmem:[%s410 + $0x90] sm:$0xff] %v1119
          %1152 = vst [vmem:[%s410 + $0x98] sm:$0xff] %v1120
          %1153 = vst [vmem:[%s410 + $0xa0] sm:$0xff] %v1121
          %1154 = vst [vmem:[%s410 + $0xa8] sm:$0xff] %v1122
          %1155 = vst [vmem:[%s410 + $0xb0] sm:$0xff] %v1123
          %1156 = vst [vmem:[%s410 + $0xb8] sm:$0xff] %v1124
          %1157 = vst [vmem:[%s410 + $0xc0] sm:$0xff] %v1125
          %1158 = vst [vmem:[%s410 + $0xc8] sm:$0xff] %v1126
          %1159 = vst [vmem:[%s410 + $0xd0] sm:$0xff] %v1127
          %1160 = vst [vmem:[%s410 + $0xd8] sm:$0xff] %v1128
          %1161 = vst [vmem:[%s410 + $0xe0] sm:$0xff] %v1129
          %1162 = vst [vmem:[%s410 + $0xe8] sm:$0xff] %v1130
          %1163 = vst [vmem:[%s410 + $0xf0] sm:$0xff] %v1131
          %1164 = vst [vmem:[%s410 + $0xf8] sm:$0xff] %v1132
        $region78: #{bart_speech_ner_forward.35} parent=65 // pred_fallthru
          _
        %s1165 = smul.u32 32, %s19
        %p1166 = scmp.lt.s32.totalorder %s1165, 95
        %s1167 = scalar_select %p1166, %s1165, 95
        %p1168 = scmp.lt.s32.totalorder %s20, 0
        %s1169 = scalar_select %p1168, %s20, 0
        %s1170 = sadd.s32 %s1169, %s1167
        %s1171 = smul.addr %s1170, 8
        %s1172 = scalar_lea.vmem %s3, %s1171
        // Predicated region
        $region79: #{bart_speech_ner_forward.35} parent=65 // pred_check
          %p1173 = pneg %p135
        $region80: #{bart_speech_ner_forward.35} parent=65 // pred_check_branch
          %1175 = sbr.rel (%p1173) target = $region82
        $region81: #{bart_speech_ner_forward.35} parent=65 // pred_region
          %s1176 = smul.u32 32, %s19
        $region82: #{bart_speech_ner_forward.35} parent=65 // pred_fallthru
          _
      $region66: #{bart_speech_ner_forward.35} parent=5 // pred_fallthru
        _
      %p1177 = scmp.le.s32.totalorder 2, %s9
      // Predicated region
      $region83: #{bart_speech_ner_forward.35} parent=5 // pred_check
        %p1178 = pneg %p1177
      $region84: #{bart_speech_ner_forward.35} parent=5 // pred_check_branch
        %1180 = sbr.rel (%p1178) target = $region86
      $region85: #{bart_speech_ner_forward.35} parent=5 // pred_region
        %s1181 = ssub.s32 %s9, 2
        // Predicated region
        $region87: #{bart_speech_ner_forward.35} parent=85 // pred_check
          %p1182 = pneg %p141
        $region88: #{bart_speech_ner_forward.35} parent=85 // pred_check_branch
          %1184 = sbr.rel (%p1182) target = $region90
        $region89: #{bart_speech_ner_forward.35} parent=85 // pred_region
          %s1185 = smul.u32 32, %s22
          %p1186 = scmp.lt.s32.totalorder %s1185, 95
          %s1187 = scalar_select %p1186, %s1185, 95
          %p1188 = scmp.lt.s32.totalorder %s23, 0
          %s1189 = scalar_select %p1188, %s23, 0
          %s1190 = sadd.s32 %s1189, %s1187
          %s1191 = smul.addr %s1190, 8
          %s1192 = scalar_lea.vmem %s3, %s1191
        $region90: #{bart_speech_ner_forward.35} parent=85 // pred_fallthru
          _
      $region86: #{bart_speech_ner_forward.35} parent=5 // pred_fallthru
        _
    $region6: #{bart_speech_ner_forward.35} parent=1 // loop_footer
      %s13 = sadd.s32 1, %s9
    $region7: #{bart_speech_ner_forward.35} parent=1 // loop_footer_branch
      %8 = sbr.rel target = $region3
    $region8: #{bart_speech_ner_forward.35} parent=1 // loop_exit
      _

// kernel: bart_speech_ner_forward.36
$region0: #{bart_speech_ner_forward.36}
  #allocation0 [shape = 'u32[]', space=smem, size = 0x4, offset = 0x4, fixed_abs, tag = 'smem constant byte address 0x4 - core index']
  #allocation1 [shape = 'u32[144,128]{1,0:T(1,128)}', space=vmem, size = 0x12000, scoped, tag = 'internal scratch']
  #allocation2 [shape = 'f32[32,128]{1,0:T(8,128)}', space=vmem, size = 0x4000, scoped, tag = 'scratch operand']
  %s0 = inlined_call_operand.vmem [shape: bf16[32,768], index: 0, kind: input, shape index: {}]
  %s1 = inlined_call_operand.vmem [shape: bf16[768,128], index: 1, kind: input, shape index: {}]
  %s2 = inlined_call_operand.vmem [shape: f32[1,128], index: 2, kind: input, shape index: {}]
  %s3 = inlined_call_operand.vmem [shape: f32[32,128], index: 3, kind: output, shape index: {}]
  %s4 = sld [smem:[#allocation0]]
  $region91: #{bart_speech_ner_forward.36} parent=0
    _
  %s6 = ssub.s32 1, %s4
  %s7 = scalar_select 0, %s6, %s4
  $region1: #{bart_speech_ner_forward.36} parent=0
    #allocation3 [shape = 'u8[32768]{0}', space=vmem, size = 0x8000, scoped, tag = 'input window, operand 0']
    loop: start=0, step=1, limit=5
    $region2: #{bart_speech_ner_forward.36} parent=1 // loop_pre_header
      _
    $region3: #{bart_speech_ner_forward.36} parent=1 // loop_header
      %s9 = sphi 0, %s13
      %p10 = scmp.ge.s32.totalorder %s9, 5
      %s16 = sphi 0, %s35
      %s17 = sphi 0, %s31
      %s18 = sphi 0, %s27
      %s19 = sphi 0, %s16
      %s20 = sphi 0, %s17
      %s21 = sphi 0, %s18
      %s22 = sphi 0, %s19
      %s23 = sphi 0, %s20
      %s24 = sphi 0, %s21
      %s40 = sphi 0, %s42
      %s43 = sphi 0, %s40
      %s44 = sphi 0, %s43
      %s60 = sphi 0, %s44
      %s68 = sphi 0, %s70
      %s71 = sphi 0, %s68
      %s72 = sphi 0, %s71
      %s88 = sphi 0, %s72
      %s94 = sphi 0, %s96
      %s97 = sphi 0, %s94
      %s98 = sphi 0, %s97
      %s114 = sphi 0, %s98
      %s122 = sphi 0, %s124
      %s125 = sphi 0, %s122
      %s126 = sphi 0, %s125
      %s142 = sphi 0, %s126
    $region4: #{bart_speech_ner_forward.36} parent=1 // loop_header_branch
      %12 = sbr.rel (%p10) target = $region8
    $region5: #{bart_speech_ner_forward.36} parent=1 // loop_body
      %s14 = ssub.s32 %s9, 1
      %s15 = ssub.s32 %s9, 2
      %s25 = sadd.s32 1, %s18
      %p26 = scmp.ge.s32.totalorder %s25, 3
      %s27 = scalar_select %p26, 0, %s25
      %s28 = sadd.s32 1, %s17
      %s29 = scalar_select %p26, %s28, %s17
      %p30 = scmp.ge.s32.totalorder %s29, 1
      %s31 = scalar_select %p30, 0, %s29
      %s32 = sadd.s32 1, %s16
      %s33 = scalar_select %p30, %s32, %s16
      %p34 = scmp.ge.s32.totalorder %s33, 1
      %s35 = scalar_select %p34, 0, %s33
      %s36 = ssub.s32 %s16, %s35
      %s37 = ssub.s32 %s18, %s27
      %s38 = sor.u32 %s36, %s37
      %p39 = scmp.eq.s32.totalorder %s38, 0
      %s41 = sadd.s32 %s40, 1
      %s42 = scalar_select %p39, %s40, %s41
      %p45 = pneg %p39
      %p46 = scmp.eq.s32.totalorder %s9, 2
      %p47 = por %p45, %p46
      %p48 = scmp.ne.s32.totalorder %s40, %s43
      %p49 = scmp.eq.s32.totalorder %s9, 0
      %p50 = por %p48, %p49
      %p51 = scmp.ne.s32.totalorder %s40, %s43
      %p52 = scmp.eq.s32.totalorder %s14, 2
      %p53 = por %p51, %p52
      %p54 = scmp.ne.s32.totalorder %s43, %s44
      %p55 = scmp.eq.s32.totalorder %s14, 0
      %p56 = por %p54, %p55
      %p57 = scmp.ne.s32.totalorder %s43, %s44
      %p58 = scmp.eq.s32.totalorder %s15, 2
      %p59 = por %p57, %p58
      %p61 = scmp.ne.s32.totalorder %s44, %s60
      %p62 = scmp.eq.s32.totalorder %s15, 0
      %p63 = por %p61, %p62
      %s64 = ssub.s32 %s18, %s27
      %s65 = ssub.s32 %s17, %s31
      %s66 = sor.u32 %s64, %s65
      %p67 = scmp.eq.s32.totalorder %s66, 0
      %s69 = sadd.s32 %s68, 1
      %s70 = scalar_select %p67, %s68, %s69
      %p73 = pneg %p67
      %p74 = scmp.eq.s32.totalorder %s9, 2
      %p75 = por %p73, %p74
      %p76 = scmp.ne.s32.totalorder %s68, %s71
      %p77 = scmp.eq.s32.totalorder %s9, 0
      %p78 = por %p76, %p77
      %p79 = scmp.ne.s32.totalorder %s68, %s71
      %p80 = scmp.eq.s32.totalorder %s14, 2
      %p81 = por %p79, %p80
      %p82 = scmp.ne.s32.totalorder %s71, %s72
      %p83 = scmp.eq.s32.totalorder %s14, 0
      %p84 = por %p82, %p83
      %p85 = scmp.ne.s32.totalorder %s71, %s72
      %p86 = scmp.eq.s32.totalorder %s15, 2
      %p87 = por %p85, %p86
      %p89 = scmp.ne.s32.totalorder %s72, %s88
      %p90 = scmp.eq.s32.totalorder %s15, 0
      %p91 = por %p89, %p90
      %s92 = ssub.s32 %s17, %s31
      %p93 = scmp.eq.s32.totalorder %s92, 0
      %s95 = sadd.s32 %s94, 1
      %s96 = scalar_select %p93, %s94, %s95
      %p99 = pneg %p93
      %p100 = scmp.eq.s32.totalorder %s9, 2
      %p101 = por %p99, %p100
      %p102 = scmp.ne.s32.totalorder %s94, %s97
      %p103 = scmp.eq.s32.totalorder %s9, 0
      %p104 = por %p102, %p103
      %p105 = scmp.ne.s32.totalorder %s94, %s97
      %p106 = scmp.eq.s32.totalorder %s14, 2
      %p107 = por %p105, %p106
      %p108 = scmp.ne.s32.totalorder %s97, %s98
      %p109 = scmp.eq.s32.totalorder %s14, 0
      %p110 = por %p108, %p109
      %p111 = scmp.ne.s32.totalorder %s97, %s98
      %p112 = scmp.eq.s32.totalorder %s15, 2
      %p113 = por %p111, %p112
      %p115 = scmp.ne.s32.totalorder %s98, %s114
      %p116 = scmp.eq.s32.totalorder %s15, 0
      %p117 = por %p115, %p116
      %s118 = ssub.s32 %s16, %s35
      %s119 = ssub.s32 %s17, %s31
      %s120 = sor.u32 %s118, %s119
      %p121 = scmp.eq.s32.totalorder %s120, 0
      %s123 = sadd.s32 %s122, 1
      %s124 = scalar_select %p121, %s122, %s123
      %p127 = pneg %p121
      %p128 = scmp.eq.s32.totalorder %s9, 2
      %p129 = por %p127, %p128
      %p130 = scmp.ne.s32.totalorder %s122, %s125
      %p131 = scmp.eq.s32.totalorder %s9, 0
      %p132 = por %p130, %p131
      %p133 = scmp.ne.s32.totalorder %s122, %s125
      %p134 = scmp.eq.s32.totalorder %s14, 2
      %p135 = por %p133, %p134
      %p136 = scmp.ne.s32.totalorder %s125, %s126
      %p137 = scmp.eq.s32.totalorder %s14, 0
      %p138 = por %p136, %p137
      %p139 = scmp.ne.s32.totalorder %s125, %s126
      %p140 = scmp.eq.s32.totalorder %s15, 2
      %p141 = por %p139, %p140
      %p143 = scmp.ne.s32.totalorder %s126, %s142
      %p144 = scmp.eq.s32.totalorder %s15, 0
      %p145 = por %p143, %p144
      %p146 = scmp.le.s32.totalorder 1, %s9
      %p147 = scmp.lt.s32.totalorder %s9, 4
      %p148 = pnand %p146, %p147
      %p149 = pneg %p148
      // Predicated region
      $region9: #{bart_speech_ner_forward.36} parent=5 // pred_check
        _
      $region10: #{bart_speech_ner_forward.36} parent=5 // pred_check_branch
        %151 = sbr.rel (%p148) target = $region12
      $region11: #{bart_speech_ner_forward.36} parent=5 // pred_region
        %s152 = ssub.s32 %s9, 1
        // Predicated region
        $region13: #{bart_speech_ner_forward.36} parent=11 // pred_check
          %p153 = pneg %p110
        $region14: #{bart_speech_ner_forward.36} parent=11 // pred_check_branch
          %155 = sbr.rel (%p153) target = $region16
        $region15: #{bart_speech_ner_forward.36} parent=11 // pred_region
          %p156 = scmp.lt.s32.totalorder %s20, 0
          %s157 = scalar_select %p156, %s20, 0
          %s158 = scalar_lea.vmem %s2, %s157
        $region16: #{bart_speech_ner_forward.36} parent=11 // pred_fallthru
          _
      $region12: #{bart_speech_ner_forward.36} parent=5 // pred_fallthru
        _
      %p159 = scmp.lt.s32.totalorder %s9, 3
      // Predicated region
      $region17: #{bart_speech_ner_forward.36} parent=5 // pred_check
        %p160 = pneg %p159
      $region18: #{bart_speech_ner_forward.36} parent=5 // pred_check_branch
        %162 = sbr.rel (%p160) target = $region20
      $region19: #{bart_speech_ner_forward.36} parent=5 // pred_region
        // Predicated region
        $region21: #{bart_speech_ner_forward.36} parent=19 // pred_check
          %p163 = pneg %p50
        $region22: #{bart_speech_ner_forward.36} parent=19 // pred_check_branch
          %165 = sbr.rel (%p163) target = $region24
        $region23: #{bart_speech_ner_forward.36} parent=19 // pred_region
          %s166 = sand.u32 %s40, 1
          %s167 = sand.u32 %s40, 1
          %s168 = smul.addr %s167, 32
          %s169 = scalar_lea.vmem [#allocation3], %s168
          %s170 = smul.u32 4, %s16
          %s171 = smul.u32 2, %s18
          %s172 = smul.addr %s170, 6
          %s173 = sadd.s32 %s171, %s172
          %s174 = smul.addr %s173, 4
          %s175 = scalar_lea.vmem %s0, %s174
          // Predicated region
          $region25: #{bart_speech_ner_forward.36} parent=23 // pred_check
            _
          $region26: #{bart_speech_ner_forward.36} parent=23 // pred_check_branch
            %177 = sbr.rel (0) target = $region28
          $region27: #{bart_speech_ner_forward.36} parent=23 // pred_region
            // Predicated region
            $region29: #{bart_speech_ner_forward.36} parent=27 // pred_check
              _
            $region30: #{bart_speech_ner_forward.36} parent=27 // pred_check_branch
              %179 = sbr.rel (0) target = $region32
            $region31: #{bart_speech_ner_forward.36} parent=27 // pred_region
              // Predicated region
              $region44: #{bart_speech_ner_forward.36} parent=31 // pred_check
                _
              $region45: #{bart_speech_ner_forward.36} parent=31 // pred_check_branch
                %200 = sbr.rel (0) target = $region47
              $region46: #{bart_speech_ner_forward.36} parent=31 // pred_region
                loop: start=0, step=1, limit=1
                $region48: #{bart_speech_ner_forward.36} parent=46 // loop_pre_header
                  _
                $region49: #{bart_speech_ner_forward.36} parent=46 // loop_header
                  %s202 = sphi 0, %s206
                  %p203 = scmp.ge.s32.totalorder %s202, 1
                  %s207 = sphi %s175, %s175
                  %s208 = sphi %s169, %s169
                $region50: #{bart_speech_ner_forward.36} parent=46 // loop_header_branch
                  %205 = sbr.rel (%p203) target = $region54
                $region51: #{bart_speech_ner_forward.36} parent=46 // loop_body
                  %v209 = vld [vmem:[%s207] sm:$0xff]
                  %210 = vst [vmem:[%s208] sm:$0xff] %v209
                  %v211 = vld [vmem:[%s207 + $0x18] sm:$0xff]
                  %212 = vst [vmem:[%s208 + $0x8] sm:$0xff] %v211
                  %v213 = vld [vmem:[%s207 + $0x30] sm:$0xff]
                  %214 = vst [vmem:[%s208 + $0x10] sm:$0xff] %v213
                  %v215 = vld [vmem:[%s207 + $0x48] sm:$0xff]
                  %216 = vst [vmem:[%s208 + $0x18] sm:$0xff] %v215
                $region52: #{bart_speech_ner_forward.36} parent=46 // loop_footer
                  %s206 = sadd.s32 1, %s202
                $region53: #{bart_speech_ner_forward.36} parent=46 // loop_footer_branch
                  %201 = sbr.rel target = $region49
                $region54: #{bart_speech_ner_forward.36} parent=46 // loop_exit
                  _
              $region47: #{bart_speech_ner_forward.36} parent=31 // pred_fallthru
                _
              // Predicated region
              $region55: #{bart_speech_ner_forward.36} parent=31 // pred_check
                _
              $region56: #{bart_speech_ner_forward.36} parent=31 // pred_check_branch
                %218 = sbr.rel target = $region58
              $region57: #{bart_speech_ner_forward.36} parent=31 // pred_region
                _
              $region58: #{bart_speech_ner_forward.36} parent=31 // pred_fallthru
                _
            $region32: #{bart_speech_ner_forward.36} parent=27 // pred_fallthru
              _
            // Predicated region
            $region33: #{bart_speech_ner_forward.36} parent=27 // pred_check
              _
            $region34: #{bart_speech_ner_forward.36} parent=27 // pred_check_branch
              %181 = sbr.rel target = $region36
            $region35: #{bart_speech_ner_forward.36} parent=27 // pred_region
              loop: start=0, step=1, limit=1
              $region37: #{bart_speech_ner_forward.36} parent=35 // loop_pre_header
                _
              $region38: #{bart_speech_ner_forward.36} parent=35 // loop_header
                %s184 = sphi 0, %s188
                %p185 = scmp.ge.s32.totalorder %s184, 1
                %s189 = sphi %s175, %s175
                %s190 = sphi %s169, %s169
              $region39: #{bart_speech_ner_forward.36} parent=35 // loop_header_branch
                %187 = sbr.rel (%p185) target = $region43
              $region40: #{bart_speech_ner_forward.36} parent=35 // loop_body
                %v191 = vld [vmem:[%s189] sm:$0xff]
                %192 = vst [vmem:[%s190] sm:$0xff] %v191
                %v193 = vld [vmem:[%s189 + $0x18] sm:$0xff]
                %194 = vst [vmem:[%s190 + $0x8] sm:$0xff] %v193
                %v195 = vld [vmem:[%s189 + $0x30] sm:$0xff]
                %196 = vst [vmem:[%s190 + $0x10] sm:$0xff] %v195
                %v197 = vld [vmem:[%s189 + $0x48] sm:$0xff]
                %198 = vst [vmem:[%s190 + $0x18] sm:$0xff] %v197
              $region41: #{bart_speech_ner_forward.36} parent=35 // loop_footer
                %s188 = sadd.s32 1, %s184
              $region42: #{bart_speech_ner_forward.36} parent=35 // loop_footer_branch
                %183 = sbr.rel target = $region38
              $region43: #{bart_speech_ner_forward.36} parent=35 // loop_exit
                _
            $region36: #{bart_speech_ner_forward.36} parent=27 // pred_fallthru
              _
          $region28: #{bart_speech_ner_forward.36} parent=23 // pred_fallthru
            _
          %219 = vnop
        $region24: #{bart_speech_ner_forward.36} parent=19 // pred_fallthru
          _
        // Predicated region
        $region59: #{bart_speech_ner_forward.36} parent=19 // pred_check
          %p220 = pneg %p78
        $region60: #{bart_speech_ner_forward.36} parent=19 // pred_check_branch
          %222 = sbr.rel (%p220) target = $region62
        $region61: #{bart_speech_ner_forward.36} parent=19 // pred_region
          %s223 = smul.u32 32, %s18
          %p224 = scmp.lt.s32.totalorder %s223, 95
          %s225 = scalar_select %p224, %s223, 95
          %p226 = scmp.lt.s32.totalorder %s17, 0
          %s227 = scalar_select %p226, %s17, 0
          %s228 = sadd.s32 %s227, %s225
          %s229 = smul.addr %s228, 4
          %s230 = scalar_lea.vmem %s1, %s229
          %s231 = smul.u32 32, %s18
        $region62: #{bart_speech_ner_forward.36} parent=19 // pred_fallthru
          _
      $region20: #{bart_speech_ner_forward.36} parent=5 // pred_fallthru
        _
      %p232 = scmp.le.s32.totalorder 1, %s9
      %p233 = scmp.lt.s32.totalorder %s9, 4
      %p234 = pnand %p232, %p233
      %p235 = pneg %p234
      // Predicated region
      $region63: #{bart_speech_ner_forward.36} parent=5 // pred_check
        _
      $region64: #{bart_speech_ner_forward.36} parent=5 // pred_check_branch
        %237 = sbr.rel (%p234) target = $region66
      $region65: #{bart_speech_ner_forward.36} parent=5 // pred_region
        %s238 = ssub.s32 %s9, 1
        %s239 = sand.u32 %s43, 1
        %s240 = sand.u32 %s43, 1
        %s241 = smul.addr %s240, 32
        %s242 = scalar_lea.vmem [#allocation3], %s241
        // Predicated region
        $region67: #{bart_speech_ner_forward.36} parent=65 // pred_check
          %p243 = pneg %p56
        $region68: #{bart_speech_ner_forward.36} parent=65 // pred_check_branch
          %245 = sbr.rel (%p243) target = $region70
        $region69: #{bart_speech_ner_forward.36} parent=65 // pred_region
          _
        $region70: #{bart_speech_ner_forward.36} parent=65 // pred_fallthru
          _
        %s246 = sand.u32 %s43, 1
        %s247 = sand.u32 %s43, 1
        %s248 = smul.addr %s247, 32
        %s249 = scalar_lea.vmem [#allocation3], %s248
        %p250 = pneg %p56
        %p251 = pneg %p53
        %s252 = smul.u32 32, %s21
        %p253 = scmp.lt.s32.totalorder %s252, 95
        %s254 = scalar_select %p253, %s252, 95
        %p255 = scmp.lt.s32.totalorder %s20, 0
        %s256 = scalar_select %p255, %s20, 0
        %s257 = sadd.s32 %s256, %s254
        %s258 = smul.addr %s257, 4
        %s259 = scalar_lea.vmem %s1, %s258
        %p260 = pneg %p84
        %p261 = pneg %p81
        %p262 = scmp.lt.s32.totalorder %s20, 0
        %s263 = scalar_select %p262, %s20, 0
        %s264 = scalar_lea.vmem %s2, %s263
        %p265 = pneg %p110
        %p266 = pneg %p107
        %p267 = pneg %p138
        %p268 = pneg %p135
        %s269 = smul.u32 4, %s19
        %p270 = scmp.lt.s32.totalorder %s269, 3
        %s271 = scalar_select %p270, %s269, 3
        %p272 = scmp.lt.s32.totalorder %s20, 0
        %s273 = scalar_select %p272, %s20, 0
        %s274 = sadd.s32 %s273, %s271
        %s275 = smul.addr %s274, 8
        %s276 = scalar_lea.vmem %s3, %s275
        %s277 = smul.u32 4, %s19
        %s278 = smul.u32 2, %s21
        %s279 = smul.u32 32, %s21
        %p280 = scmp.lt.s32.totalorder %s279, 95
        %s281 = scalar_select %p280, %s279, 95
        %p282 = scmp.lt.s32.totalorder %s20, 0
        %s283 = scalar_select %p282, %s20, 0
        %s284 = sadd.s32 %s283, %s281
        %s285 = smul.addr %s284, 4
        %s286 = scalar_lea.vmem %s1, %s285
        %s287 = smul.u32 32, %s21
        %p288 = scmp.lt.s32.totalorder %s20, 0
        %s289 = scalar_select %p288, %s20, 0
        %s290 = scalar_lea.vmem %s2, %s289
        %s291 = smul.u32 4, %s19
        %p292 = scmp.lt.s32.totalorder %s291, 3
        %s293 = scalar_select %p292, %s291, 3
        %p294 = scmp.lt.s32.totalorder %s20, 0
        %s295 = scalar_select %p294, %s20, 0
        %s296 = sadd.s32 %s295, %s293
        %s297 = smul.addr %s296, 8
        %s298 = scalar_lea.vmem %s3, %s297
        %s299 = smul.u32 4, %s19
        %p301 = scmp.eq.s32.totalorder %s21, 0
        // Predicated region
        $region71: #{bart_speech_ner_forward.36} parent=65 // pred_check
          %p302 = pneg %p301
        $region72: #{bart_speech_ner_forward.36} parent=65 // pred_check_branch
          %304 = sbr.rel (%p302) target = $region74
        $region73: #{bart_speech_ner_forward.36} parent=65 // pred_region
          %305 = vst [vmem:[#allocation2] sm:$0xff] 0.0
          %306 = vst [vmem:[#allocation2 + $0x8] sm:$0xff] 0.0
          %307 = vst [vmem:[#allocation2 + $0x10] sm:$0xff] 0.0
          %308 = vst [vmem:[#allocation2 + $0x18] sm:$0xff] 0.0
        $region74: #{bart_speech_ner_forward.36} parent=65 // pred_fallthru
          _
        %v309 = vld [vmem:[#allocation2] sm:$0xff]
        %v310 = vld [vmem:[#allocation2 + $0x8] sm:$0xff]
        %v311 = vld [vmem:[#allocation2 + $0x10] sm:$0xff]
        %v312 = vld [vmem:[#allocation2 + $0x18] sm:$0xff]
        %v313 = vld [vmem:[%s242] sm:$0xff]
        %v314 = vld [vmem:[%s242 + $0x8] sm:$0xff]
        %v315 = vld [vmem:[%s242 + $0x10] sm:$0xff]
        %v316 = vld [vmem:[%s242 + $0x18] sm:$0xff]
        %v317 = vld [vmem:[%s286] sm:$0xf]
        %v318 = vld [vmem:[%s286 + $0x4] sm:$0xf]
        %v319 = vld [vmem:[%s286 + $0x8] sm:$0xf]
        %v320 = vld [vmem:[%s286 + $0xc] sm:$0xf]
        %v321 = vld [vmem:[%s286 + $0x10] sm:$0xf]
        %v322 = vld [vmem:[%s286 + $0x14] sm:$0xf]
        %v323 = vld [vmem:[%s286 + $0x18] sm:$0xf]
        %v324 = vld [vmem:[%s286 + $0x1c] sm:$0xf]
        %v325 = vld [vmem:[%s286 + $0x20] sm:$0xf]
        %v326 = vld [vmem:[%s286 + $0x24] sm:$0xf]
        %v327 = vld [vmem:[%s286 + $0x28] sm:$0xf]
        %v328 = vld [vmem:[%s286 + $0x2c] sm:$0xf]
        %v329 = vld [vmem:[%s286 + $0x30] sm:$0xf]
        %v330 = vld [vmem:[%s286 + $0x34] sm:$0xf]
        %v331 = vld [vmem:[%s286 + $0x38] sm:$0xf]
        %v332 = vld [vmem:[%s286 + $0x3c] sm:$0xf]
        %v333 = vld [vmem:[%s286 + $0x40] sm:$0xf]
        %v334 = vld [vmem:[%s286 + $0x44] sm:$0xf]
        %v335 = vld [vmem:[%s286 + $0x48] sm:$0xf]
        %v336 = vld [vmem:[%s286 + $0x4c] sm:$0xf]
        %v337 = vld [vmem:[%s286 + $0x50] sm:$0xf]
        %v338 = vld [vmem:[%s286 + $0x54] sm:$0xf]
        %v339 = vld [vmem:[%s286 + $0x58] sm:$0xf]
        %v340 = vld [vmem:[%s286 + $0x5c] sm:$0xf]
        %v341 = vld [vmem:[%s286 + $0x60] sm:$0xf]
        %v342 = vld [vmem:[%s286 + $0x64] sm:$0xf]
        %v343 = vld [vmem:[%s286 + $0x68] sm:$0xf]
        %v344 = vld [vmem:[%s286 + $0x6c] sm:$0xf]
        %v345 = vld [vmem:[%s286 + $0x70] sm:$0xf]
        %v346 = vld [vmem:[%s286 + $0x74] sm:$0xf]
        %v347 = vld [vmem:[%s286 + $0x78] sm:$0xf]
        %v348 = vld [vmem:[%s286 + $0x7c] sm:$0xf]
        %v353 = vunpack.c.l.b16 %v313
        %v354 = vunpack.c.h.b16 %v313
        %v355 = vunpack.c.l.b16 %v314
        %v356 = vunpack.c.h.b16 %v314
        %v357 = vunpack.c.l.b16 %v315
        %v358 = vunpack.c.h.b16 %v315
        %v359 = vunpack.c.l.b16 %v316
        %v360 = vunpack.c.h.b16 %v316
        %v361 = vpack.c.b16 %v355, %v353
        %v362 = vpack.c.b16 %v356, %v354
        %v363 = vpack.c.b16 %v359, %v357
        %v364 = vpack.c.b16 %v360, %v358
        %v401 = vunpack.c.l.b16 %v317
        %v402 = vunpack.c.l.b16 %v318
        %v403 = vunpack.c.l.b16 %v319
        %v404 = vunpack.c.l.b16 %v320
        %v405 = vunpack.c.l.b16 %v321
        %v406 = vunpack.c.l.b16 %v322
        %v407 = vunpack.c.l.b16 %v323
        %v408 = vunpack.c.l.b16 %v324
        %v409 = vunpack.c.l.b16 %v325
        %v410 = vunpack.c.l.b16 %v326
        %v411 = vunpack.c.l.b16 %v327
        %v412 = vunpack.c.l.b16 %v328
        %v413 = vunpack.c.l.b16 %v329
        %v414 = vunpack.c.l.b16 %v330
        %v415 = vunpack.c.l.b16 %v331
        %v416 = vunpack.c.l.b16 %v332
        %v417 = vunpack.c.l.b16 %v333
        %v418 = vunpack.c.l.b16 %v334
        %v419 = vunpack.c.l.b16 %v335
        %v420 = vunpack.c.l.b16 %v336
        %v421 = vunpack.c.l.b16 %v337
        %v422 = vunpack.c.l.b16 %v338
        %v423 = vunpack.c.l.b16 %v339
        %v424 = vunpack.c.l.b16 %v340
        %v425 = vunpack.c.l.b16 %v341
        %v426 = vunpack.c.l.b16 %v342
        %v427 = vunpack.c.l.b16 %v343
        %v428 = vunpack.c.l.b16 %v344
        %v429 = vunpack.c.l.b16 %v345
        %v430 = vunpack.c.l.b16 %v346
        %v431 = vunpack.c.l.b16 %v347
        %v432 = vunpack.c.l.b16 %v348
        %v433 = vpack.c.b16 %v402, %v401
        %v434 = vpack.c.b16 %v404, %v403
        %v435 = vpack.c.b16 %v406, %v405
        %v436 = vpack.c.b16 %v408, %v407
        %v437 = vpack.c.b16 %v410, %v409
        %v438 = vpack.c.b16 %v412, %v411
        %v439 = vpack.c.b16 %v414, %v413
        %v440 = vpack.c.b16 %v416, %v415
        %v441 = vpack.c.b16 %v418, %v417
        %v442 = vpack.c.b16 %v420, %v419
        %v443 = vpack.c.b16 %v422, %v421
        %v444 = vpack.c.b16 %v424, %v423
        %v445 = vpack.c.b16 %v426, %v425
        %v446 = vpack.c.b16 %v428, %v427
        %v447 = vpack.c.b16 %v430, %v429
        %v448 = vpack.c.b16 %v432, %v431
        %465 = vmatprep.subr.bf16.mxu0 0
        %466 = vmatpush1.bf16.msra.mxu0 %v433
        %467 = vmatprep.subr.bf16.mxu0 0
        %468 = vmatpush1.bf16.msra.mxu0 %v434
        %469 = vmatprep.subr.bf16.mxu0 0
        %470 = vmatpush1.bf16.msra.mxu0 %v435
        %471 = vmatprep.subr.bf16.mxu0 0
        %472 = vmatpush1.bf16.msra.mxu0 %v436
        %473 = vmatprep.subr.bf16.mxu0 0
        %474 = vmatpush1.bf16.msra.mxu0 %v437
        %475 = vmatprep.subr.bf16.mxu0 0
        %476 = vmatpush1.bf16.msra.mxu0 %v438
        %477 = vmatprep.subr.bf16.mxu0 0
        %478 = vmatpush1.bf16.msra.mxu0 %v439
        %479 = vmatprep.subr.bf16.mxu0 0
        %480 = vmatpush1.bf16.msra.mxu0 %v440
        %481 = vmatprep.subr.bf16.mxu0 0
        %482 = vmatpush1.bf16.msra.mxu0 %v441
        %483 = vmatprep.subr.bf16.mxu0 0
        %484 = vmatpush1.bf16.msra.mxu0 %v442
        %485 = vmatprep.subr.bf16.mxu0 0
        %486 = vmatpush1.bf16.msra.mxu0 %v443
        %487 = vmatprep.subr.bf16.mxu0 0
        %488 = vmatpush1.bf16.msra.mxu0 %v444
        %489 = vmatprep.subr.bf16.mxu0 0
        %490 = vmatpush1.bf16.msra.mxu0 %v445
        %491 = vmatprep.subr.bf16.mxu0 0
        %492 = vmatpush1.bf16.msra.mxu0 %v446
        %493 = vmatprep.subr.bf16.mxu0 0
        %494 = vmatpush1.bf16.msra.mxu0 %v447
        %495 = vmatprep.subr.bf16.mxu0 0
        %496 = vmatpush1.bf16.msra.mxu0 %v448
        %497 = vmatprep.mubr.bf16.mxu0 %v362
        %498 = vmatmul.mubr.bf16.gmra.mrb[0].mxu0 %v361
        %v499 = vpop.f32.mrb[0].mxu0
        %v500 = vadd.f32 0.0, %v499
        %v501 = vpop.f32.mrb[0].mxu0
        %v502 = vpop.f32.mrb[0].mxu0
        %v503 = vadd.f32 0.0, %v502
        %v504 = vpop.f32.mrb[0].mxu0
        %505 = vmatprep.mubr.bf16.mxu0 %v364
        %506 = vmatmul.mubr.bf16.gmra.mrb[0].mxu0 %v363
        %v507 = vpop.f32.mrb[0].mxu0
        %v508 = vadd.f32 0.0, %v507
        %v509 = vpop.f32.mrb[0].mxu0
        %v510 = vpop.f32.mrb[0].mxu0
        %v511 = vadd.f32 0.0, %v510
        %v512 = vpop.f32.mrb[0].mxu0
        %513 = vdwg.mxu0
        %v514 = vadd.f32 %v309, %v500
        %v515 = vadd.f32 %v310, %v503
        %v516 = vadd.f32 %v311, %v508
        %v517 = vadd.f32 %v312, %v511
        %518 = vst [vmem:[#allocation2] sm:$0xff] %v514
        %519 = vst [vmem:[#allocation2 + $0x8] sm:$0xff] %v515
        %520 = vst [vmem:[#allocation2 + $0x10] sm:$0xff] %v516
        %521 = vst [vmem:[#allocation2 + $0x18] sm:$0xff] %v517
        %p522 = scmp.eq.s32.totalorder %s21, 2
        // Predicated region
        $region75: #{bart_speech_ner_forward.36} parent=65 // pred_check
          %p523 = pneg %p522
        $region76: #{bart_speech_ner_forward.36} parent=65 // pred_check_branch
          %525 = sbr.rel (%p523) target = $region78
        $region77: #{bart_speech_ner_forward.36} parent=65 // pred_region
          %v526 = vld [vmem:[#allocation2] sm:$0xff]
          %v527 = vld [vmem:[#allocation2 + $0x8] sm:$0xff]
          %v528 = vld [vmem:[#allocation2 + $0x10] sm:$0xff]
          %v529 = vld [vmem:[#allocation2 + $0x18] sm:$0xff]
          %v530 = vld [vmem:[%s290] sm:$0x1]
          %v532 = vlaneseq
          %v533 = vshrl.u32 %v532, 7
          %v534 = vsub.s32 0, %v533
          %v535 = vrot.slane %v530, %v534
          %v537 = vadd.f32 %v526, %v535
          %v538 = vadd.f32 %v527, %v535
          %v539 = vadd.f32 %v528, %v535
          %v540 = vadd.f32 %v529, %v535
          %541 = vst [vmem:[%s298] sm:$0xff] %v537
          %542 = vst [vmem:[%s298 + $0x8] sm:$0xff] %v538
          %543 = vst [vmem:[%s298 + $0x10] sm:$0xff] %v539
          %544 = vst [vmem:[%s298 + $0x18] sm:$0xff] %v540
        $region78: #{bart_speech_ner_forward.36} parent=65 // pred_fallthru
          _
        %s545 = smul.u32 4, %s19
        %p546 = scmp.lt.s32.totalorder %s545, 3
        %s547 = scalar_select %p546, %s545, 3
        %p548 = scmp.lt.s32.totalorder %s20, 0
        %s549 = scalar_select %p548, %s20, 0
        %s550 = sadd.s32 %s549, %s547
        %s551 = smul.addr %s550, 8
        %s552 = scalar_lea.vmem %s3, %s551
        // Predicated region
        $region79: #{bart_speech_ner_forward.36} parent=65 // pred_check
          %p553 = pneg %p135
        $region80: #{bart_speech_ner_forward.36} parent=65 // pred_check_branch
          %555 = sbr.rel (%p553) target = $region82
        $region81: #{bart_speech_ner_forward.36} parent=65 // pred_region
          %s556 = smul.u32 4, %s19
        $region82: #{bart_speech_ner_forward.36} parent=65 // pred_fallthru
          _
        // Predicated region
        $region83: #{bart_speech_ner_forward.36} parent=65 // pred_check
          %p557 = pneg %p135
        $region84: #{bart_speech_ner_forward.36} parent=65 // pred_check_branch
          %559 = sbr.rel (%p557) target = $region86
        $region85: #{bart_speech_ner_forward.36} parent=65 // pred_region
          %s560 = smul.u32 4, %s19
          %p561 = scmp.lt.s32.totalorder %s560, 3
          %s562 = scalar_select %p561, %s560, 3
          %p563 = scmp.lt.s32.totalorder %s20, 0
          %s564 = scalar_select %p563, %s20, 0
          %s565 = sadd.s32 %s564, %s562
          %s566 = smul.addr %s565, 8
          %s567 = scalar_lea.vmem %s3, %s566
        $region86: #{bart_speech_ner_forward.36} parent=65 // pred_fallthru
          _
      $region66: #{bart_speech_ner_forward.36} parent=5 // pred_fallthru
        _
      %p568 = scmp.le.s32.totalorder 2, %s9
      // Predicated region
      $region87: #{bart_speech_ner_forward.36} parent=5 // pred_check
        %p569 = pneg %p568
      $region88: #{bart_speech_ner_forward.36} parent=5 // pred_check_branch
        %571 = sbr.rel (%p569) target = $region90
      $region89: #{bart_speech_ner_forward.36} parent=5 // pred_region
        %s572 = ssub.s32 %s9, 2
      $region90: #{bart_speech_ner_forward.36} parent=5 // pred_fallthru
        _
    $region6: #{bart_speech_ner_forward.36} parent=1 // loop_footer
      %s13 = sadd.s32 1, %s9
    $region7: #{bart_speech_ner_forward.36} parent=1 // loop_footer_branch
      %8 = sbr.rel target = $region3
    $region8: #{bart_speech_ner_forward.36} parent=1 // loop_exit
      _

// kernel: bart_speech_ner_forward.37
$region0: #{bart_speech_ner_forward.37}
  #allocation0 [shape = 'u32[]', space=smem, size = 0x4, offset = 0x4, fixed_abs, tag = 'smem constant byte address 0x4 - core index']
  #allocation1 [shape = 'u32[144,128]{1,0:T(1,128)}', space=vmem, size = 0x12000, scoped, tag = 'internal scratch']
  %s0 = inlined_call_operand.vmem [shape: f32[32,32], index: 0, kind: input, shape index: {}]
  %s1 = inlined_call_operand.vmem [shape: f32[1,32], index: 1, kind: input, shape index: {}]
  %s2 = inlined_call_operand.vmem [shape: f32[1,32], index: 2, kind: input, shape index: {}]
  %s3 = inlined_call_operand.vmem [shape: f32[32,32], index: 3, kind: output, shape index: {}]
  %s4 = sld [smem:[#allocation0]]
  $region22: #{bart_speech_ner_forward.37} parent=0
    _
  %s6 = ssub.s32 1, %s4
  %s7 = scalar_select 0, %s6, %s4
  // Predicated region
  $region2: #{bart_speech_ner_forward.37} parent=0 // pred_check
    _
  $region3: #{bart_speech_ner_forward.37} parent=0 // pred_check_branch
    %9 = sbr.rel (0) target = $region5
  $region4: #{bart_speech_ner_forward.37} parent=0 // pred_region
    _
  $region5: #{bart_speech_ner_forward.37} parent=0 // pred_fallthru
    _
  // Predicated region
  $region6: #{bart_speech_ner_forward.37} parent=0 // pred_check
    _
  $region7: #{bart_speech_ner_forward.37} parent=0 // pred_check_branch
    %11 = sbr.rel (0) target = $region9
  $region8: #{bart_speech_ner_forward.37} parent=0 // pred_region
    _
  $region9: #{bart_speech_ner_forward.37} parent=0 // pred_fallthru
    _
  // Predicated region
  $region10: #{bart_speech_ner_forward.37} parent=0 // pred_check
    _
  $region11: #{bart_speech_ner_forward.37} parent=0 // pred_check_branch
    %13 = sbr.rel (0) target = $region13
  $region12: #{bart_speech_ner_forward.37} parent=0 // pred_region
    _
  $region13: #{bart_speech_ner_forward.37} parent=0 // pred_fallthru
    _
  %v14 = vld [vmem:[%s0] sm:$0xff]
  %v15 = vld [vmem:[%s0 + $0x8] sm:$0xff]
  %v16 = vld [vmem:[%s0 + $0x10] sm:$0xff]
  %v17 = vld [vmem:[%s0 + $0x18] sm:$0xff]
  %vm18 = vcmask 261120
  %v19 = vsel %vm18, %v14, 0.0
  %20 = vadd.xlane.f32.xlu0 %v19
  %v21 = vpop.xlane.xlu0 %20
  %v22 = vsel %vm18, %v15, 0.0
  %23 = vadd.xlane.f32.xlu0 %v22
  %v24 = vpop.xlane.xlu0 %23
  %v25 = vsel %vm18, %v16, 0.0
  %26 = vadd.xlane.f32.xlu0 %v25
  %v27 = vpop.xlane.xlu0 %26
  %v28 = vsel %vm18, %v17, 0.0
  %29 = vadd.xlane.f32.xlu0 %v28
  %v30 = vpop.xlane.xlu0 %29
  %v31 = vrcp.pop 32.0
  %v32 = vmul.f32 %v21, %v31
  %v33 = vmul.f32 %v24, %v31
  %v34 = vmul.f32 %v27, %v31
  %v35 = vmul.f32 %v30, %v31
  %v36 = vsub.f32 %v14, %v32
  %v37 = vsub.f32 %v15, %v33
  %v38 = vsub.f32 %v16, %v34
  %v39 = vsub.f32 %v17, %v35
  %v40 = vmul.f32 %v36, %v36
  %v41 = vmul.f32 %v37, %v37
  %v42 = vmul.f32 %v38, %v38
  %v43 = vmul.f32 %v39, %v39
  %v44 = vsel %vm18, %v40, 0.0
  %45 = vadd.xlane.f32.xlu0 %v44
  %v46 = vpop.xlane.xlu0 %45
  %v47 = vsel %vm18, %v41, 0.0
  %48 = vadd.xlane.f32.xlu0 %v47
  %v49 = vpop.xlane.xlu0 %48
  %v50 = vsel %vm18, %v42, 0.0
  %51 = vadd.xlane.f32.xlu0 %v50
  %v52 = vpop.xlane.xlu0 %51
  %v53 = vsel %vm18, %v43, 0.0
  %54 = vadd.xlane.f32.xlu0 %v53
  %v55 = vpop.xlane.xlu0 %54
  %v56 = vmul.f32 %v46, %v31
  %v57 = vmul.f32 %v49, %v31
  %v58 = vmul.f32 %v52, %v31
  %v59 = vmul.f32 %v55, %v31
  %v60 = vadd.f32 %v56, 1e-12
  %v61 = vadd.f32 %v57, 1e-12
  %v62 = vadd.f32 %v58, 1e-12
  %v63 = vadd.f32 %v59, 1e-12
  %v64 = vrsqrt.pop %v60
  %v65 = vrsqrt.pop %v61
  %v66 = vrsqrt.pop %v62
  %v67 = vrsqrt.pop %v63
  %v68 = vmul.f32 %v36, %v64
  %v69 = vmul.f32 %v37, %v65
  %v70 = vmul.f32 %v38, %v66
  %v71 = vmul.f32 %v39, %v67
  %v72 = vld [vmem:[%s1] sm:$0x1]
  %v74 = vlaneseq
  %v75 = vshrl.u32 %v74, 7
  %v76 = vsub.s32 0, %v75
  %v77 = vrot.slane %v72, %v76
  %v79 = vmul.f32 %v68, %v77
  %v80 = vmul.f32 %v69, %v77
  %v81 = vmul.f32 %v70, %v77
  %v82 = vmul.f32 %v71, %v77
  %v83 = vld [vmem:[%s2] sm:$0x1]
  %v85 = vlaneseq
  %v86 = vshrl.u32 %v85, 7
  %v87 = vsub.s32 0, %v86
  %v88 = vrot.slane %v83, %v87
  %v90 = vadd.f32 %v79, %v88
  %v91 = vadd.f32 %v80, %v88
  %v92 = vadd.f32 %v81, %v88
  %v93 = vadd.f32 %v82, %v88
  %94 = vst.msk [vmem:[%s3] sm:$0xff] %vm18, %v90
  %95 = vst.msk [vmem:[%s3 + $0x8] sm:$0xff] %vm18, %v91
  %96 = vst.msk [vmem:[%s3 + $0x10] sm:$0xff] %vm18, %v92
  %97 = vst.msk [vmem:[%s3 + $0x18] sm:$0xff] %vm18, %v93
  // Predicated region
  $region14: #{bart_speech_ner_forward.37} parent=0 // pred_check
    _
  $region15: #{bart_speech_ner_forward.37} parent=0 // pred_check_branch
    %99 = sbr.rel (0) target = $region17
  $region16: #{bart_speech_ner_forward.37} parent=0 // pred_region
    _
  $region17: #{bart_speech_ner_forward.37} parent=0 // pred_fallthru
    _
  // Predicated region
  $region18: #{bart_speech_ner_forward.37} parent=0 // pred_check
    _
  $region19: #{bart_speech_ner_forward.37} parent=0 // pred_check_branch
    %101 = sbr.rel (0) target = $region21
  $region20: #{bart_speech_ner_forward.37} parent=0 // pred_region
    _
  $region21: #{bart_speech_ner_forward.37} parent=0 // pred_fallthru
    _

// kernel: bart_speech_ner_forward.38
$region0: #{bart_speech_ner_forward.38}
  #allocation0 [shape = 'u32[]', space=smem, size = 0x4, offset = 0x4, fixed_abs, tag = 'smem constant byte address 0x4 - core index']
  #allocation1 [shape = 'u32[144,128]{1,0:T(1,128)}', space=vmem, size = 0x12000, scoped, tag = 'internal scratch']
  #allocation2 [shape = 'f32[32,128]{1,0:T(8,128)}', space=vmem, size = 0x4000, scoped, tag = 'scratch operand']
  %s0 = inlined_call_operand.vmem [shape: bf16[32,128], index: 0, kind: input, shape index: {}]
  %s1 = inlined_call_operand.vmem [shape: bf16[128,128], index: 1, kind: input, shape index: {}]
  %s2 = inlined_call_operand.vmem [shape: f32[1,128], index: 2, kind: input, shape index: {}]
  %s3 = inlined_call_operand.vmem [shape: f32[32,128], index: 3, kind: output, shape index: {}]
  %s4 = sld [smem:[#allocation0]]
  $region30: #{bart_speech_ner_forward.38} parent=0
    _
  %s6 = ssub.s32 1, %s4
  %s7 = scalar_select 0, %s6, %s4
  // Predicated region
  $region2: #{bart_speech_ner_forward.38} parent=0 // pred_check
    _
  $region3: #{bart_speech_ner_forward.38} parent=0 // pred_check_branch
    %9 = sbr.rel (0) target = $region5
  $region4: #{bart_speech_ner_forward.38} parent=0 // pred_region
    _
  $region5: #{bart_speech_ner_forward.38} parent=0 // pred_fallthru
    _
  // Predicated region
  $region6: #{bart_speech_ner_forward.38} parent=0 // pred_check
    _
  $region7: #{bart_speech_ner_forward.38} parent=0 // pred_check_branch
    %11 = sbr.rel (0) target = $region9
  $region8: #{bart_speech_ner_forward.38} parent=0 // pred_region
    _
  $region9: #{bart_speech_ner_forward.38} parent=0 // pred_fallthru
    _
  // Predicated region
  $region10: #{bart_speech_ner_forward.38} parent=0 // pred_check
    _
  $region11: #{bart_speech_ner_forward.38} parent=0 // pred_check_branch
    %13 = sbr.rel (0) target = $region13
  $region12: #{bart_speech_ner_forward.38} parent=0 // pred_region
    _
  $region13: #{bart_speech_ner_forward.38} parent=0 // pred_fallthru
    _
  %p15 = scmp.eq.s32.totalorder 0, 0
  // Predicated region
  $region14: #{bart_speech_ner_forward.38} parent=0 // pred_check
    %p16 = pneg %p15
  $region15: #{bart_speech_ner_forward.38} parent=0 // pred_check_branch
    %18 = sbr.rel (%p16) target = $region17
  $region16: #{bart_speech_ner_forward.38} parent=0 // pred_region
    %19 = vst [vmem:[#allocation2] sm:$0xff] 0.0
    %20 = vst [vmem:[#allocation2 + $0x8] sm:$0xff] 0.0
    %21 = vst [vmem:[#allocation2 + $0x10] sm:$0xff] 0.0
    %22 = vst [vmem:[#allocation2 + $0x18] sm:$0xff] 0.0
  $region17: #{bart_speech_ner_forward.38} parent=0 // pred_fallthru
    _
  %v23 = vld [vmem:[#allocation2] sm:$0xff]
  %v24 = vld [vmem:[#allocation2 + $0x8] sm:$0xff]
  %v25 = vld [vmem:[#allocation2 + $0x10] sm:$0xff]
  %v26 = vld [vmem:[#allocation2 + $0x18] sm:$0xff]
  %v27 = vld [vmem:[%s0] sm:$0xf]
  %v28 = vld [vmem:[%s0 + $0x4] sm:$0xf]
  %v29 = vld [vmem:[%s0 + $0x8] sm:$0xf]
  %v30 = vld [vmem:[%s0 + $0xc] sm:$0xf]
  %v31 = vld [vmem:[%s1] sm:$0xf]
  %v32 = vld [vmem:[%s1 + $0x4] sm:$0xf]
  %v33 = vld [vmem:[%s1 + $0x8] sm:$0xf]
  %v34 = vld [vmem:[%s1 + $0xc] sm:$0xf]
  %v35 = vld [vmem:[%s1 + $0x10] sm:$0xf]
  %v36 = vld [vmem:[%s1 + $0x14] sm:$0xf]
  %v37 = vld [vmem:[%s1 + $0x18] sm:$0xf]
  %v38 = vld [vmem:[%s1 + $0x1c] sm:$0xf]
  %v39 = vld [vmem:[%s1 + $0x20] sm:$0xf]
  %v40 = vld [vmem:[%s1 + $0x24] sm:$0xf]
  %v41 = vld [vmem:[%s1 + $0x28] sm:$0xf]
  %v42 = vld [vmem:[%s1 + $0x2c] sm:$0xf]
  %v43 = vld [vmem:[%s1 + $0x30] sm:$0xf]
  %v44 = vld [vmem:[%s1 + $0x34] sm:$0xf]
  %v45 = vld [vmem:[%s1 + $0x38] sm:$0xf]
  %v46 = vld [vmem:[%s1 + $0x3c] sm:$0xf]
  %v51 = vunpack.c.l.b16 %v27
  %v52 = vunpack.c.l.b16 %v28
  %v53 = vunpack.c.l.b16 %v29
  %v54 = vunpack.c.l.b16 %v30
  %v55 = vpack.c.b16 %v52, %v51
  %v56 = vpack.c.b16 %v54, %v53
  %v75 = vunpack.c.l.b16 %v31
  %v76 = vunpack.c.l.b16 %v32
  %v77 = vunpack.c.l.b16 %v33
  %v78 = vunpack.c.l.b16 %v34
  %v79 = vunpack.c.l.b16 %v35
  %v80 = vunpack.c.l.b16 %v36
  %v81 = vunpack.c.l.b16 %v37
  %v82 = vunpack.c.l.b16 %v38
  %v83 = vunpack.c.l.b16 %v39
  %v84 = vunpack.c.l.b16 %v40
  %v85 = vunpack.c.l.b16 %v41
  %v86 = vunpack.c.l.b16 %v42
  %v87 = vunpack.c.l.b16 %v43
  %v88 = vunpack.c.l.b16 %v44
  %v89 = vunpack.c.l.b16 %v45
  %v90 = vunpack.c.l.b16 %v46
  %v91 = vpack.c.b16 %v76, %v75
  %v92 = vpack.c.b16 %v78, %v77
  %v93 = vpack.c.b16 %v80, %v79
  %v94 = vpack.c.b16 %v82, %v81
  %v95 = vpack.c.b16 %v84, %v83
  %v96 = vpack.c.b16 %v86, %v85
  %v97 = vpack.c.b16 %v88, %v87
  %v98 = vpack.c.b16 %v90, %v89
  %107 = vmatprep.subr.bf16.mxu0 0
  %108 = vmatpush1.bf16.msra.mxu0 %v91
  %109 = vmatprep.subr.bf16.mxu0 0
  %110 = vmatpush1.bf16.msra.mxu0 %v92
  %111 = vmatprep.subr.bf16.mxu0 0
  %112 = vmatpush1.bf16.msra.mxu0 %v93
  %113 = vmatprep.subr.bf16.mxu0 0
  %114 = vmatpush1.bf16.msra.mxu0 %v94
  %115 = vmatprep.subr.bf16.mxu0 0
  %116 = vmatpush1.bf16.msra.mxu0 %v95
  %117 = vmatprep.subr.bf16.mxu0 0
  %118 = vmatpush1.bf16.msra.mxu0 %v96
  %119 = vmatprep.subr.bf16.mxu0 0
  %120 = vmatpush1.bf16.msra.mxu0 %v97
  %121 = vmatprep.subr.bf16.mxu0 0
  %122 = vmatpush1.bf16.msra.mxu0 %v98
  %123 = vmatprep.subr.bf16.mxu0 0
  %124 = vmatpush1.bf16.msra.mxu0 0
  %125 = vmatprep.subr.bf16.mxu0 0
  %126 = vmatpush1.bf16.msra.mxu0 0
  %127 = vmatprep.subr.bf16.mxu0 0
  %128 = vmatpush1.bf16.msra.mxu0 0
  %129 = vmatprep.subr.bf16.mxu0 0
  %130 = vmatpush1.bf16.msra.mxu0 0
  %131 = vmatprep.subr.bf16.mxu0 0
  %132 = vmatpush1.bf16.msra.mxu0 0
  %133 = vmatprep.subr.bf16.mxu0 0
  %134 = vmatpush1.bf16.msra.mxu0 0
  %135 = vmatprep.subr.bf16.mxu0 0
  %136 = vmatpush1.bf16.msra.mxu0 0
  %137 = vmatprep.subr.bf16.mxu0 0
  %138 = vmatpush1.bf16.msra.mxu0 0
  %139 = vmatprep.mubr.bf16.mxu0 0
  %140 = vmatmul.mubr.bf16.gmra.mrb[0].mxu0 %v55
  %v141 = vpop.f32.mrb[0].mxu0
  %v142 = vadd.f32 0.0, %v141
  %v143 = vpop.f32.mrb[0].mxu0
  %v144 = vpop.f32.mrb[0].mxu0
  %v145 = vadd.f32 0.0, %v144
  %v146 = vpop.f32.mrb[0].mxu0
  %147 = vmatprep.mubr.bf16.mxu0 0
  %148 = vmatmul.mubr.bf16.gmra.mrb[0].mxu0 %v56
  %v149 = vpop.f32.mrb[0].mxu0
  %v150 = vadd.f32 0.0, %v149
  %v151 = vpop.f32.mrb[0].mxu0
  %v152 = vpop.f32.mrb[0].mxu0
  %v153 = vadd.f32 0.0, %v152
  %v154 = vpop.f32.mrb[0].mxu0
  %155 = vdwg.mxu0
  %v156 = vadd.f32 %v23, %v142
  %v157 = vadd.f32 %v24, %v145
  %v158 = vadd.f32 %v25, %v150
  %v159 = vadd.f32 %v26, %v153
  %160 = vst [vmem:[#allocation2] sm:$0xff] %v156
  %161 = vst [vmem:[#allocation2 + $0x8] sm:$0xff] %v157
  %162 = vst [vmem:[#allocation2 + $0x10] sm:$0xff] %v158
  %163 = vst [vmem:[#allocation2 + $0x18] sm:$0xff] %v159
  // Predicated region
  $region18: #{bart_speech_ner_forward.38} parent=0 // pred_check
    %p164 = pneg %p15
  $region19: #{bart_speech_ner_forward.38} parent=0 // pred_check_branch
    %166 = sbr.rel (%p164) target = $region21
  $region20: #{bart_speech_ner_forward.38} parent=0 // pred_region
    %v167 = vld [vmem:[#allocation2] sm:$0xff]
    %v168 = vld [vmem:[#allocation2 + $0x8] sm:$0xff]
    %v169 = vld [vmem:[#allocation2 + $0x10] sm:$0xff]
    %v170 = vld [vmem:[#allocation2 + $0x18] sm:$0xff]
    %v171 = vld [vmem:[%s2] sm:$0x1]
    %v173 = vlaneseq
    %v174 = vshrl.u32 %v173, 7
    %v175 = vsub.s32 0, %v174
    %v176 = vrot.slane %v171, %v175
    %v178 = vadd.f32 %v167, %v176
    %v179 = vadd.f32 %v168, %v176
    %v180 = vadd.f32 %v169, %v176
    %v181 = vadd.f32 %v170, %v176
    %182 = vst [vmem:[%s3] sm:$0xff] %v178
    %183 = vst [vmem:[%s3 + $0x8] sm:$0xff] %v179
    %184 = vst [vmem:[%s3 + $0x10] sm:$0xff] %v180
    %185 = vst [vmem:[%s3 + $0x18] sm:$0xff] %v181
  $region21: #{bart_speech_ner_forward.38} parent=0 // pred_fallthru
    _
  // Predicated region
  $region22: #{bart_speech_ner_forward.38} parent=0 // pred_check
    _
  $region23: #{bart_speech_ner_forward.38} parent=0 // pred_check_branch
    %187 = sbr.rel (0) target = $region25
  $region24: #{bart_speech_ner_forward.38} parent=0 // pred_region
    _
  $region25: #{bart_speech_ner_forward.38} parent=0 // pred_fallthru
    _
  // Predicated region
  $region26: #{bart_speech_ner_forward.38} parent=0 // pred_check
    _
  $region27: #{bart_speech_ner_forward.38} parent=0 // pred_check_branch
    %189 = sbr.rel (0) target = $region29
  $region28: #{bart_speech_ner_forward.38} parent=0 // pred_region
    _
  $region29: #{bart_speech_ner_forward.38} parent=0 // pred_fallthru
    _

// kernel: bart_speech_ner_forward.39
$region0: #{bart_speech_ner_forward.39}
  #allocation0 [shape = 'u32[]', space=smem, size = 0x4, offset = 0x4, fixed_abs, tag = 'smem constant byte address 0x4 - core index']
  #allocation1 [shape = 'u32[144,128]{1,0:T(1,128)}', space=vmem, size = 0x12000, scoped, tag = 'internal scratch']
  %s0 = inlined_call_operand.vmem [shape: f32[2,1,15], index: 0, kind: input, shape index: {}]
  %s1 = inlined_call_operand.vmem [shape: f32[2,15,96], index: 1, kind: input, shape index: {}]
  %s2 = inlined_call_operand.vmem [shape: f32[2,15,32], index: 2, kind: output, shape index: {}]
  %s3 = sld [smem:[#allocation0]]
  $region41: #{bart_speech_ner_forward.39} parent=0
    _
  %s5 = ssub.s32 1, %s3
  %s6 = scalar_select 0, %s5, %s3
  loop: start=0, step=1, limit=4
  $region2: #{bart_speech_ner_forward.39} parent=0 // loop_pre_header
    _
  $region3: #{bart_speech_ner_forward.39} parent=0 // loop_header
    %s8 = sphi 0, %s12
    %p9 = scmp.ge.s32.totalorder %s8, 4
    %s18 = sphi 0, %s20
    %s21 = sphi 0, %s18
    %s22 = sphi 0, %s21
    %s38 = sphi 0, %s22
    %s44 = sphi 0, %s46
    %s47 = sphi 0, %s44
    %s48 = sphi 0, %s47
    %s64 = sphi 0, %s48
    %s70 = sphi 0, %s72
    %s73 = sphi 0, %s70
    %s74 = sphi 0, %s73
    %s90 = sphi 0, %s74
  $region4: #{bart_speech_ner_forward.39} parent=0 // loop_header_branch
    %11 = sbr.rel (%p9) target = $region8
  $region5: #{bart_speech_ner_forward.39} parent=0 // loop_body
    %s13 = ssub.s32 %s8, 1
    %s14 = ssub.s32 %s8, 2
    %s15 = sadd.s32 %s8, 1
    %s16 = ssub.s32 %s8, %s15
    %p17 = scmp.eq.s32.totalorder %s16, 0
    %s19 = sadd.s32 %s18, 1
    %s20 = scalar_select %p17, %s18, %s19
    %p23 = pneg %p17
    %p24 = scmp.eq.s32.totalorder %s8, 1
    %p25 = por %p23, %p24
    %p26 = scmp.ne.s32.totalorder %s18, %s21
    %p27 = scmp.eq.s32.totalorder %s8, 0
    %p28 = por %p26, %p27
    %p29 = scmp.ne.s32.totalorder %s18, %s21
    %p30 = scmp.eq.s32.totalorder %s13, 1
    %p31 = por %p29, %p30
    %p32 = scmp.ne.s32.totalorder %s21, %s22
    %p33 = scmp.eq.s32.totalorder %s13, 0
    %p34 = por %p32, %p33
    %p35 = scmp.ne.s32.totalorder %s21, %s22
    %p36 = scmp.eq.s32.totalorder %s14, 1
    %p37 = por %p35, %p36
    %p39 = scmp.ne.s32.totalorder %s22, %s38
    %p40 = scmp.eq.s32.totalorder %s14, 0
    %p41 = por %p39, %p40
    %s42 = ssub.s32 %s8, %s15
    %p43 = scmp.eq.s32.totalorder %s42, 0
    %s45 = sadd.s32 %s44, 1
    %s46 = scalar_select %p43, %s44, %s45
    %p49 = pneg %p43
    %p50 = scmp.eq.s32.totalorder %s8, 1
    %p51 = por %p49, %p50
    %p52 = scmp.ne.s32.totalorder %s44, %s47
    %p53 = scmp.eq.s32.totalorder %s8, 0
    %p54 = por %p52, %p53
    %p55 = scmp.ne.s32.totalorder %s44, %s47
    %p56 = scmp.eq.s32.totalorder %s13, 1
    %p57 = por %p55, %p56
    %p58 = scmp.ne.s32.totalorder %s47, %s48
    %p59 = scmp.eq.s32.totalorder %s13, 0
    %p60 = por %p58, %p59
    %p61 = scmp.ne.s32.totalorder %s47, %s48
    %p62 = scmp.eq.s32.totalorder %s14, 1
    %p63 = por %p61, %p62
    %p65 = scmp.ne.s32.totalorder %s48, %s64
    %p66 = scmp.eq.s32.totalorder %s14, 0
    %p67 = por %p65, %p66
    %s68 = ssub.s32 %s8, %s15
    %p69 = scmp.eq.s32.totalorder %s68, 0
    %s71 = sadd.s32 %s70, 1
    %s72 = scalar_select %p69, %s70, %s71
    %p75 = pneg %p69
    %p76 = scmp.eq.s32.totalorder %s8, 1
    %p77 = por %p75, %p76
    %p78 = scmp.ne.s32.totalorder %s70, %s73
    %p79 = scmp.eq.s32.totalorder %s8, 0
    %p80 = por %p78, %p79
    %p81 = scmp.ne.s32.totalorder %s70, %s73
    %p82 = scmp.eq.s32.totalorder %s13, 1
    %p83 = por %p81, %p82
    %p84 = scmp.ne.s32.totalorder %s73, %s74
    %p85 = scmp.eq.s32.totalorder %s13, 0
    %p86 = por %p84, %p85
    %p87 = scmp.ne.s32.totalorder %s73, %s74
    %p88 = scmp.eq.s32.totalorder %s14, 1
    %p89 = por %p87, %p88
    %p91 = scmp.ne.s32.totalorder %s74, %s90
    %p92 = scmp.eq.s32.totalorder %s14, 0
    %p93 = por %p91, %p92
    %p94 = scmp.le.s32.totalorder 1, %s8
    %p95 = scmp.lt.s32.totalorder %s8, 3
    %p96 = pnand %p94, %p95
    %p97 = pneg %p96
    // Predicated region
    $region9: #{bart_speech_ner_forward.39} parent=5 // pred_check
      _
    $region10: #{bart_speech_ner_forward.39} parent=5 // pred_check_branch
      %99 = sbr.rel (%p96) target = $region12
    $region11: #{bart_speech_ner_forward.39} parent=5 // pred_region
      %s100 = ssub.s32 %s8, 1
    $region12: #{bart_speech_ner_forward.39} parent=5 // pred_fallthru
      _
    %p101 = scmp.lt.s32.totalorder %s8, 2
    // Predicated region
    $region13: #{bart_speech_ner_forward.39} parent=5 // pred_check
      %p102 = pneg %p101
    $region14: #{bart_speech_ner_forward.39} parent=5 // pred_check_branch
      %104 = sbr.rel (%p102) target = $region16
    $region15: #{bart_speech_ner_forward.39} parent=5 // pred_region
      // Predicated region
      $region17: #{bart_speech_ner_forward.39} parent=15 // pred_check
        %p105 = pneg %p28
      $region18: #{bart_speech_ner_forward.39} parent=15 // pred_check_branch
        %107 = sbr.rel (%p105) target = $region20
      $region19: #{bart_speech_ner_forward.39} parent=15 // pred_region
        %p108 = scmp.lt.s32.totalorder %s8, 1
        %s109 = scalar_select %p108, %s8, 1
        %s110 = scalar_lea.vmem %s0, %s109
      $region20: #{bart_speech_ner_forward.39} parent=15 // pred_fallthru
        _
      // Predicated region
      $region21: #{bart_speech_ner_forward.39} parent=15 // pred_check
        %p111 = pneg %p54
      $region22: #{bart_speech_ner_forward.39} parent=15 // pred_check_branch
        %113 = sbr.rel (%p111) target = $region24
      $region23: #{bart_speech_ner_forward.39} parent=15 // pred_region
        %p114 = scmp.lt.s32.totalorder %s8, 1
        %s115 = scalar_select %p114, %s8, 1
        %s116 = smul.addr %s115, 2
        %s117 = smul.addr %s116, 8
        %s118 = scalar_lea.vmem %s1, %s117
      $region24: #{bart_speech_ner_forward.39} parent=15 // pred_fallthru
        _
    $region16: #{bart_speech_ner_forward.39} parent=5 // pred_fallthru
      _
    %p119 = scmp.le.s32.totalorder 1, %s8
    %p120 = scmp.lt.s32.totalorder %s8, 3
    %p121 = pnand %p119, %p120
    %p122 = pneg %p121
    // Predicated region
    $region25: #{bart_speech_ner_forward.39} parent=5 // pred_check
      _
    $region26: #{bart_speech_ner_forward.39} parent=5 // pred_check_branch
      %124 = sbr.rel (%p121) target = $region28
    $region27: #{bart_speech_ner_forward.39} parent=5 // pred_region
      %s125 = ssub.s32 %s8, 1
      %p126 = scmp.lt.s32.totalorder %s13, 1
      %s127 = scalar_select %p126, %s13, 1
      %s128 = scalar_lea.vmem %s0, %s127
      %p129 = pneg %p34
      %p130 = pneg %p31
      %p131 = scmp.lt.s32.totalorder %s13, 1
      %s132 = scalar_select %p131, %s13, 1
      %s133 = smul.addr %s132, 2
      %s134 = smul.addr %s133, 8
      %s135 = scalar_lea.vmem %s1, %s134
      %p136 = pneg %p60
      %p137 = pneg %p57
      %p138 = pneg %p86
      %p139 = pneg %p83
      %p140 = scmp.lt.s32.totalorder %s13, 1
      %s141 = scalar_select %p140, %s13, 1
      %s142 = smul.addr %s141, 2
      %s143 = smul.addr %s142, 8
      %s144 = scalar_lea.vmem %s2, %s143
      %p145 = scmp.lt.s32.totalorder %s13, 1
      %s146 = scalar_select %p145, %s13, 1
      %s147 = scalar_lea.vmem %s0, %s146
      %p148 = scmp.lt.s32.totalorder %s13, 1
      %s149 = scalar_select %p148, %s13, 1
      %s150 = smul.addr %s149, 2
      %s151 = smul.addr %s150, 8
      %s152 = scalar_lea.vmem %s1, %s151
      %p153 = scmp.lt.s32.totalorder %s13, 1
      %s154 = scalar_select %p153, %s13, 1
      %s155 = smul.addr %s154, 2
      %s156 = smul.addr %s155, 8
      %s157 = scalar_lea.vmem %s2, %s156
      %v159 = vld [vmem:[%s152] sm:$0xff]
      %v160 = vld [vmem:[%s152 + $0x8] sm:$0x7f]
      %v161 = vld [vmem:[%s147] sm:$0x1]
      %vm162 = vcmp.gt.f32.partialorder %v161, 0.5
      %v163 = vsel %vm162, 0.0, -3.4028235e+38
      %v164 = vpack.c.bf16 %v160, %v159
      %166 = vrot.lane.b32.xlu0 %v164, 96
      %v167 = vpop.permute.xlu0 %166
      %vm168 = vcmask 64512
      %v170 = vsel %vm168, %v164, 0
      %v173 = vsel %vm168, %v167, 0
      %175 = vmatprep.subr.bf16.mxu0 0
      %176 = vmatpush1.bf16.xpose.msra.mxu0 %v173
      %177 = vmatprep.subr.bf16.mxu0 0
      %178 = vmatpush1.bf16.xpose.msra.mxu0 0
      %179 = vmatprep.subr.bf16.mxu0 0
      %180 = vmatpush1.bf16.xpose.msra.mxu0 0
      %181 = vmatprep.subr.bf16.mxu0 0
      %182 = vmatpush1.bf16.xpose.msra.mxu0 0
      %183 = vmatprep.subr.bf16.mxu0 0
      %184 = vmatpush1.bf16.xpose.msra.mxu0 0
      %185 = vmatprep.subr.bf16.mxu0 0
      %186 = vmatpush1.bf16.xpose.msra.mxu0 0
      %187 = vmatprep.subr.bf16.mxu0 0
      %188 = vmatpush1.bf16.xpose.msra.mxu0 0
      %189 = vmatprep.subr.bf16.mxu0 0
      %190 = vmatpush1.bf16.xpose.msra.mxu0 0
      %191 = vmatprep.subr.bf16.mxu0 0
      %192 = vmatpush1.bf16.xpose.msra.mxu0 0
      %193 = vmatprep.subr.bf16.mxu0 0
      %194 = vmatpush1.bf16.xpose.msra.mxu0 0
      %195 = vmatprep.subr.bf16.mxu0 0
      %196 = vmatpush1.bf16.xpose.msra.mxu0 0
      %197 = vmatprep.subr.bf16.mxu0 0
      %198 = vmatpush1.bf16.xpose.msra.mxu0 0
      %199 = vmatprep.subr.bf16.mxu0 0
      %200 = vmatpush1.bf16.xpose.msra.mxu0 0
      %201 = vmatprep.subr.bf16.mxu0 0
      %202 = vmatpush1.bf16.xpose.msra.mxu0 0
      %203 = vmatprep.subr.bf16.mxu0 0
      %204 = vmatpush1.bf16.xpose.msra.mxu0 0
      %205 = vmatprep.subr.bf16.mxu0 0
      %206 = vmatpush1.bf16.xpose.msra.mxu0 0
      %207 = vmatprep.mubr.bf16.mxu0 0
      %208 = vmatmul.mubr.bf16.gmra.mrb[0].mxu0 %v170
      %v209 = vpop.f32.mrb[0].mxu0
      %v210 = vadd.f32 0.0, %v209
      %v211 = vpop.f32.mrb[0].mxu0
      %v212 = vpop.f32.mrb[0].mxu0
      %v213 = vadd.f32 0.0, %v212
      %v214 = vpop.f32.mrb[0].mxu0
      %215 = vdwg.mxu0
      %v216 = vmul.f32 %v210, 0.35355338
      %v217 = vmul.f32 %v213, 0.35355338
      %v219 = vlaneseq
      %v220 = vshrl.u32 %v219, 7
      %v221 = vsub.s32 0, %v220
      %v222 = vrot.slane %v163, %v221
      %v224 = vadd.f32 %v216, %v222
      %v225 = vadd.f32 %v217, %v222
      %vm226 = vcmask 121856
      %v227 = vsel %vm226, %v224, -inf
      %228 = vmax.xlane.f32.xlu0 %v227
      %v229 = vpop.xlane.xlu0 %228
      %vm230 = vcmask 120832
      %v231 = vsel %vm230, %v225, -inf
      %232 = vmax.xlane.f32.xlu0 %v231
      %v233 = vpop.xlane.xlu0 %232
      %v234 = vsub.f32 %v224, %v229
      %v235 = vsub.f32 %v225, %v233
      %v236 = vmul.f32 %v234, 1.442695
      %v237 = vpow.pop %v236
      %v238 = vmul.f32 %v235, 1.442695
      %v239 = vpow.pop %v238
      %v240 = vsel %vm226, %v237, 0.0
      %241 = vadd.xlane.f32.xlu0 %v240
      %v242 = vpop.xlane.xlu0 %241
      %v243 = vsel %vm230, %v239, 0.0
      %244 = vadd.xlane.f32.xlu0 %v243
      %v245 = vpop.xlane.xlu0 %244
      %v246 = vrcp.pop %v242
      %v247 = vrcp.pop %v245
      %v248 = vmul.f32 %v237, %v246
      %v249 = vmul.f32 %v239, %v247
      %v250 = vpack.c.bf16 %v249, %v248
      %251 = vrot.lane.b32.xlu0 %v164, 64
      %v252 = vpop.permute.xlu0 %251
      %v254 = vsel %vm226, %v250, 0
      %vm256 = vcmask 1046528
      %vm257 = vcmask 1047552
      %v258 = vsel %vm256, 4294967295, 65535
      %v259 = vsel %vm257, %v258, 0
      %v261 = vand.u32 %v252, %v259
      %263 = vmatprep.subr.bf16.mxu0 0
      %264 = vmatpush1.bf16.msra.mxu0 %v261
      %265 = vmatprep.subr.bf16.mxu0 0
      %266 = vmatpush1.bf16.msra.mxu0 0
      %267 = vmatprep.subr.bf16.mxu0 0
      %268 = vmatpush1.bf16.msra.mxu0 0
      %269 = vmatprep.subr.bf16.mxu0 0
      %270 = vmatpush1.bf16.msra.mxu0 0
      %271 = vmatprep.subr.bf16.mxu0 0
      %272 = vmatpush1.bf16.msra.mxu0 0
      %273 = vmatprep.subr.bf16.mxu0 0
      %274 = vmatpush1.bf16.msra.mxu0 0
      %275 = vmatprep.subr.bf16.mxu0 0
      %276 = vmatpush1.bf16.msra.mxu0 0
      %277 = vmatprep.subr.bf16.mxu0 0
      %278 = vmatpush1.bf16.msra.mxu0 0
      %279 = vmatprep.subr.bf16.mxu0 0
      %280 = vmatpush1.bf16.msra.mxu0 0
      %281 = vmatprep.subr.bf16.mxu0 0
      %282 = vmatpush1.bf16.msra.mxu0 0
      %283 = vmatprep.subr.bf16.mxu0 0
      %284 = vmatpush1.bf16.msra.mxu0 0
      %285 = vmatprep.subr.bf16.mxu0 0
      %286 = vmatpush1.bf16.msra.mxu0 0
      %287 = vmatprep.subr.bf16.mxu0 0
      %288 = vmatpush1.bf16.msra.mxu0 0
      %289 = vmatprep.subr.bf16.mxu0 0
      %290 = vmatpush1.bf16.msra.mxu0 0
      %291 = vmatprep.subr.bf16.mxu0 0
      %292 = vmatpush1.bf16.msra.mxu0 0
      %293 = vmatprep.subr.bf16.mxu0 0
      %294 = vmatpush1.bf16.msra.mxu0 0
      %295 = vmatprep.mubr.bf16.mxu0 0
      %296 = vmatmul.mubr.bf16.gmra.mrb[0].mxu0 %v254
      %v297 = vpop.f32.mrb[0].mxu0
      %v298 = vadd.f32 0.0, %v297
      %v299 = vpop.f32.mrb[0].mxu0
      %v300 = vpop.f32.mrb[0].mxu0
      %v301 = vadd.f32 0.0, %v300
      %v302 = vpop.f32.mrb[0].mxu0
      %303 = vdwg.mxu0
      %304 = vrot.lane.b32.xlu0 %v164, 120
      %v305 = vpop.permute.xlu0 %304
      %306 = vrot.lane.b32.xlu0 %v164, 88
      %v307 = vpop.permute.xlu0 %306
      %v309 = vsel %vm168, %v305, 0
      %v312 = vsel %vm168, %v307, 0
      %314 = vmatprep.subr.bf16.mxu0 0
      %315 = vmatpush1.bf16.xpose.msra.mxu0 %v312
      %316 = vmatprep.subr.bf16.mxu0 0
      %317 = vmatpush1.bf16.xpose.msra.mxu0 0
      %318 = vmatprep.subr.bf16.mxu0 0
      %319 = vmatpush1.bf16.xpose.msra.mxu0 0
      %320 = vmatprep.subr.bf16.mxu0 0
      %321 = vmatpush1.bf16.xpose.msra.mxu0 0
      %322 = vmatprep.subr.bf16.mxu0 0
      %323 = vmatpush1.bf16.xpose.msra.mxu0 0
      %324 = vmatprep.subr.bf16.mxu0 0
      %325 = vmatpush1.bf16.xpose.msra.mxu0 0
      %326 = vmatprep.subr.bf16.mxu0 0
      %327 = vmatpush1.bf16.xpose.msra.mxu0 0
      %328 = vmatprep.subr.bf16.mxu0 0
      %329 = vmatpush1.bf16.xpose.msra.mxu0 0
      %330 = vmatprep.subr.bf16.mxu0 0
      %331 = vmatpush1.bf16.xpose.msra.mxu0 0
      %332 = vmatprep.subr.bf16.mxu0 0
      %333 = vmatpush1.bf16.xpose.msra.mxu0 0
      %334 = vmatprep.subr.bf16.mxu0 0
      %335 = vmatpush1.bf16.xpose.msra.mxu0 0
      %336 = vmatprep.subr.bf16.mxu0 0
      %337 = vmatpush1.bf16.xpose.msra.mxu0 0
      %338 = vmatprep.subr.bf16.mxu0 0
      %339 = vmatpush1.bf16.xpose.msra.mxu0 0
      %340 = vmatprep.subr.bf16.mxu0 0
      %341 = vmatpush1.bf16.xpose.msra.mxu0 0
      %342 = vmatprep.subr.bf16.mxu0 0
      %343 = vmatpush1.bf16.xpose.msra.mxu0 0
      %344 = vmatprep.subr.bf16.mxu0 0
      %345 = vmatpush1.bf16.xpose.msra.mxu0 0
      %346 = vmatprep.mubr.bf16.mxu0 0
      %347 = vmatmul.mubr.bf16.gmra.mrb[0].mxu0 %v309
      %v348 = vpop.f32.mrb[0].mxu0
      %v349 = vadd.f32 0.0, %v348
      %v350 = vpop.f32.mrb[0].mxu0
      %v351 = vpop.f32.mrb[0].mxu0
      %v352 = vadd.f32 0.0, %v351
      %v353 = vpop.f32.mrb[0].mxu0
      %354 = vdwg.mxu0
      %v355 = vmul.f32 %v349, 0.35355338
      %v356 = vmul.f32 %v352, 0.35355338
      %v357 = vadd.f32 %v355, %v222
      %v358 = vadd.f32 %v356, %v222
      %v359 = vsel %vm226, %v357, -inf
      %360 = vmax.xlane.f32.xlu0 %v359
      %v361 = vpop.xlane.xlu0 %360
      %v362 = vsel %vm230, %v358, -inf
      %363 = vmax.xlane.f32.xlu0 %v362
      %v364 = vpop.xlane.xlu0 %363
      %v365 = vsub.f32 %v357, %v361
      %v366 = vsub.f32 %v358, %v364
      %v367 = vmul.f32 %v365, 1.442695
      %v368 = vpow.pop %v367
      %v369 = vmul.f32 %v366, 1.442695
      %v370 = vpow.pop %v369
      %v371 = vsel %vm226, %v368, 0.0
      %372 = vadd.xlane.f32.xlu0 %v371
      %v373 = vpop.xlane.xlu0 %372
      %v374 = vsel %vm230, %v370, 0.0
      %375 = vadd.xlane.f32.xlu0 %v374
      %v376 = vpop.xlane.xlu0 %375
      %v377 = vrcp.pop %v373
      %v378 = vrcp.pop %v376
      %v379 = vmul.f32 %v368, %v377
      %v380 = vmul.f32 %v370, %v378
      %v381 = vpack.c.bf16 %v380, %v379
      %382 = vrot.lane.b32.xlu0 %v164, 56
      %v383 = vpop.permute.xlu0 %382
      %v385 = vsel %vm226, %v381, 0
      %v388 = vand.u32 %v383, %v259
      %390 = vmatprep.subr.bf16.mxu0 0
      %391 = vmatpush1.bf16.msra.mxu0 %v388
      %392 = vmatprep.subr.bf16.mxu0 0
      %393 = vmatpush1.bf16.msra.mxu0 0
      %394 = vmatprep.subr.bf16.mxu0 0
      %395 = vmatpush1.bf16.msra.mxu0 0
      %396 = vmatprep.subr.bf16.mxu0 0
      %397 = vmatpush1.bf16.msra.mxu0 0
      %398 = vmatprep.subr.bf16.mxu0 0
      %399 = vmatpush1.bf16.msra.mxu0 0
      %400 = vmatprep.subr.bf16.mxu0 0
      %401 = vmatpush1.bf16.msra.mxu0 0
      %402 = vmatprep.subr.bf16.mxu0 0
      %403 = vmatpush1.bf16.msra.mxu0 0
      %404 = vmatprep.subr.bf16.mxu0 0
      %405 = vmatpush1.bf16.msra.mxu0 0
      %406 = vmatprep.subr.bf16.mxu0 0
      %407 = vmatpush1.bf16.msra.mxu0 0
      %408 = vmatprep.subr.bf16.mxu0 0
      %409 = vmatpush1.bf16.msra.mxu0 0
      %410 = vmatprep.subr.bf16.mxu0 0
      %411 = vmatpush1.bf16.msra.mxu0 0
      %412 = vmatprep.subr.bf16.mxu0 0
      %413 = vmatpush1.bf16.msra.mxu0 0
      %414 = vmatprep.subr.bf16.mxu0 0
      %415 = vmatpush1.bf16.msra.mxu0 0
      %416 = vmatprep.subr.bf16.mxu0 0
      %417 = vmatpush1.bf16.msra.mxu0 0
      %418 = vmatprep.subr.bf16.mxu0 0
      %419 = vmatpush1.bf16.msra.mxu0 0
      %420 = vmatprep.subr.bf16.mxu0 0
      %421 = vmatpush1.bf16.msra.mxu0 0
      %422 = vmatprep.mubr.bf16.mxu0 0
      %423 = vmatmul.mubr.bf16.gmra.mrb[0].mxu0 %v385
      %v424 = vpop.f32.mrb[0].mxu0
      %v425 = vadd.f32 0.0, %v424
      %v426 = vpop.f32.mrb[0].mxu0
      %v427 = vpop.f32.mrb[0].mxu0
      %v428 = vadd.f32 0.0, %v427
      %v429 = vpop.f32.mrb[0].mxu0
      %430 = vdwg.mxu0
      %431 = vrot.lane.b32.xlu0 %v164, 112
      %v432 = vpop.permute.xlu0 %431
      %433 = vrot.lane.b32.xlu0 %v164, 80
      %v434 = vpop.permute.xlu0 %433
      %v436 = vsel %vm168, %v432, 0
      %v439 = vsel %vm168, %v434, 0
      %441 = vmatprep.subr.bf16.mxu0 0
      %442 = vmatpush1.bf16.xpose.msra.mxu0 %v439
      %443 = vmatprep.subr.bf16.mxu0 0
      %444 = vmatpush1.bf16.xpose.msra.mxu0 0
      %445 = vmatprep.subr.bf16.mxu0 0
      %446 = vmatpush1.bf16.xpose.msra.mxu0 0
      %447 = vmatprep.subr.bf16.mxu0 0
      %448 = vmatpush1.bf16.xpose.msra.mxu0 0
      %449 = vmatprep.subr.bf16.mxu0 0
      %450 = vmatpush1.bf16.xpose.msra.mxu0 0
      %451 = vmatprep.subr.bf16.mxu0 0
      %452 = vmatpush1.bf16.xpose.msra.mxu0 0
      %453 = vmatprep.subr.bf16.mxu0 0
      %454 = vmatpush1.bf16.xpose.msra.mxu0 0
      %455 = vmatprep.subr.bf16.mxu0 0
      %456 = vmatpush1.bf16.xpose.msra.mxu0 0
      %457 = vmatprep.subr.bf16.mxu0 0
      %458 = vmatpush1.bf16.xpose.msra.mxu0 0
      %459 = vmatprep.subr.bf16.mxu0 0
      %460 = vmatpush1.bf16.xpose.msra.mxu0 0
      %461 = vmatprep.subr.bf16.mxu0 0
      %462 = vmatpush1.bf16.xpose.msra.mxu0 0
      %463 = vmatprep.subr.bf16.mxu0 0
      %464 = vmatpush1.bf16.xpose.msra.mxu0 0
      %465 = vmatprep.subr.bf16.mxu0 0
      %466 = vmatpush1.bf16.xpose.msra.mxu0 0
      %467 = vmatprep.subr.bf16.mxu0 0
      %468 = vmatpush1.bf16.xpose.msra.mxu0 0
      %469 = vmatprep.subr.bf16.mxu0 0
      %470 = vmatpush1.bf16.xpose.msra.mxu0 0
      %471 = vmatprep.subr.bf16.mxu0 0
      %472 = vmatpush1.bf16.xpose.msra.mxu0 0
      %473 = vmatprep.mubr.bf16.mxu0 0
      %474 = vmatmul.mubr.bf16.gmra.mrb[0].mxu0 %v436
      %v475 = vpop.f32.mrb[0].mxu0
      %v476 = vadd.f32 0.0, %v475
      %v477 = vpop.f32.mrb[0].mxu0
      %v478 = vpop.f32.mrb[0].mxu0
      %v479 = vadd.f32 0.0, %v478
      %v480 = vpop.f32.mrb[0].mxu0
      %481 = vdwg.mxu0
      %v482 = vmul.f32 %v476, 0.35355338
      %v483 = vmul.f32 %v479, 0.35355338
      %v484 = vadd.f32 %v482, %v222
      %v485 = vadd.f32 %v483, %v222
      %v486 = vsel %vm226, %v484, -inf
      %487 = vmax.xlane.f32.xlu0 %v486
      %v488 = vpop.xlane.xlu0 %487
      %v489 = vsel %vm230, %v485, -inf
      %490 = vmax.xlane.f32.xlu0 %v489
      %v491 = vpop.xlane.xlu0 %490
      %v492 = vsub.f32 %v484, %v488
      %v493 = vsub.f32 %v485, %v491
      %v494 = vmul.f32 %v492, 1.442695
      %v495 = vpow.pop %v494
      %v496 = vmul.f32 %v493, 1.442695
      %v497 = vpow.pop %v496
      %v498 = vsel %vm226, %v495, 0.0
      %499 = vadd.xlane.f32.xlu0 %v498
      %v500 = vpop.xlane.xlu0 %499
      %v501 = vsel %vm230, %v497, 0.0
      %502 = vadd.xlane.f32.xlu0 %v501
      %v503 = vpop.xlane.xlu0 %502
      %v504 = vrcp.pop %v500
      %v505 = vrcp.pop %v503
      %v506 = vmul.f32 %v495, %v504
      %v507 = vmul.f32 %v497, %v505
      %v508 = vpack.c.bf16 %v507, %v506
      %509 = vrot.lane.b32.xlu0 %v164, 48
      %v510 = vpop.permute.xlu0 %509
      %v512 = vsel %vm226, %v508, 0
      %v515 = vand.u32 %v510, %v259
      %517 = vmatprep.subr.bf16.mxu0 0
      %518 = vmatpush1.bf16.msra.mxu0 %v515
      %519 = vmatprep.subr.bf16.mxu0 0
      %520 = vmatpush1.bf16.msra.mxu0 0
      %521 = vmatprep.subr.bf16.mxu0 0
      %522 = vmatpush1.bf16.msra.mxu0 0
      %523 = vmatprep.subr.bf16.mxu0 0
      %524 = vmatpush1.bf16.msra.mxu0 0
      %525 = vmatprep.subr.bf16.mxu0 0
      %526 = vmatpush1.bf16.msra.mxu0 0
      %527 = vmatprep.subr.bf16.mxu0 0
      %528 = vmatpush1.bf16.msra.mxu0 0
      %529 = vmatprep.subr.bf16.mxu0 0
      %530 = vmatpush1.bf16.msra.mxu0 0
      %531 = vmatprep.subr.bf16.mxu0 0
      %532 = vmatpush1.bf16.msra.mxu0 0
      %533 = vmatprep.subr.bf16.mxu0 0
      %534 = vmatpush1.bf16.msra.mxu0 0
      %535 = vmatprep.subr.bf16.mxu0 0
      %536 = vmatpush1.bf16.msra.mxu0 0
      %537 = vmatprep.subr.bf16.mxu0 0
      %538 = vmatpush1.bf16.msra.mxu0 0
      %539 = vmatprep.subr.bf16.mxu0 0
      %540 = vmatpush1.bf16.msra.mxu0 0
      %541 = vmatprep.subr.bf16.mxu0 0
      %542 = vmatpush1.bf16.msra.mxu0 0
      %543 = vmatprep.subr.bf16.mxu0 0
      %544 = vmatpush1.bf16.msra.mxu0 0
      %545 = vmatprep.subr.bf16.mxu0 0
      %546 = vmatpush1.bf16.msra.mxu0 0
      %547 = vmatprep.subr.bf16.mxu0 0
      %548 = vmatpush1.bf16.msra.mxu0 0
      %549 = vmatprep.mubr.bf16.mxu0 0
      %550 = vmatmul.mubr.bf16.gmra.mrb[0].mxu0 %v512
      %v551 = vpop.f32.mrb[0].mxu0
      %v552 = vadd.f32 0.0, %v551
      %v553 = vpop.f32.mrb[0].mxu0
      %v554 = vpop.f32.mrb[0].mxu0
      %v555 = vadd.f32 0.0, %v554
      %v556 = vpop.f32.mrb[0].mxu0
      %557 = vdwg.mxu0
      %558 = vrot.lane.b32.xlu0 %v164, 104
      %v559 = vpop.permute.xlu0 %558
      %560 = vrot.lane.b32.xlu0 %v164, 72
      %v561 = vpop.permute.xlu0 %560
      %v563 = vsel %vm168, %v559, 0
      %v566 = vsel %vm168, %v561, 0
      %568 = vmatprep.subr.bf16.mxu0 0
      %569 = vmatpush1.bf16.xpose.msra.mxu0 %v566
      %570 = vmatprep.subr.bf16.mxu0 0
      %571 = vmatpush1.bf16.xpose.msra.mxu0 0
      %572 = vmatprep.subr.bf16.mxu0 0
      %573 = vmatpush1.bf16.xpose.msra.mxu0 0
      %574 = vmatprep.subr.bf16.mxu0 0
      %575 = vmatpush1.bf16.xpose.msra.mxu0 0
      %576 = vmatprep.subr.bf16.mxu0 0
      %577 = vmatpush1.bf16.xpose.msra.mxu0 0
      %578 = vmatprep.subr.bf16.mxu0 0
      %579 = vmatpush1.bf16.xpose.msra.mxu0 0
      %580 = vmatprep.subr.bf16.mxu0 0
      %581 = vmatpush1.bf16.xpose.msra.mxu0 0
      %582 = vmatprep.subr.bf16.mxu0 0
      %583 = vmatpush1.bf16.xpose.msra.mxu0 0
      %584 = vmatprep.subr.bf16.mxu0 0
      %585 = vmatpush1.bf16.xpose.msra.mxu0 0
      %586 = vmatprep.subr.bf16.mxu0 0
      %587 = vmatpush1.bf16.xpose.msra.mxu0 0
      %588 = vmatprep.subr.bf16.mxu0 0
      %589 = vmatpush1.bf16.xpose.msra.mxu0 0
      %590 = vmatprep.subr.bf16.mxu0 0
      %591 = vmatpush1.bf16.xpose.msra.mxu0 0
      %592 = vmatprep.subr.bf16.mxu0 0
      %593 = vmatpush1.bf16.xpose.msra.mxu0 0
      %594 = vmatprep.subr.bf16.mxu0 0
      %595 = vmatpush1.bf16.xpose.msra.mxu0 0
      %596 = vmatprep.subr.bf16.mxu0 0
      %597 = vmatpush1.bf16.xpose.msra.mxu0 0
      %598 = vmatprep.subr.bf16.mxu0 0
      %599 = vmatpush1.bf16.xpose.msra.mxu0 0
      %600 = vmatprep.mubr.bf16.mxu0 0
      %601 = vmatmul.mubr.bf16.gmra.mrb[0].mxu0 %v563
      %v602 = vpop.f32.mrb[0].mxu0
      %v603 = vadd.f32 0.0, %v602
      %v604 = vpop.f32.mrb[0].mxu0
      %v605 = vpop.f32.mrb[0].mxu0
      %v606 = vadd.f32 0.0, %v605
      %v607 = vpop.f32.mrb[0].mxu0
      %608 = vdwg.mxu0
      %v609 = vmul.f32 %v603, 0.35355338
      %v610 = vmul.f32 %v606, 0.35355338
      %v611 = vadd.f32 %v609, %v222
      %v612 = vadd.f32 %v610, %v222
      %v613 = vsel %vm226, %v611, -inf
      %614 = vmax.xlane.f32.xlu0 %v613
      %v615 = vpop.xlane.xlu0 %614
      %v616 = vsel %vm230, %v612, -inf
      %617 = vmax.xlane.f32.xlu0 %v616
      %v618 = vpop.xlane.xlu0 %617
      %v619 = vsub.f32 %v611, %v615
      %v620 = vsub.f32 %v612, %v618
      %v621 = vmul.f32 %v619, 1.442695
      %v622 = vpow.pop %v621
      %v623 = vmul.f32 %v620, 1.442695
      %v624 = vpow.pop %v623
      %v625 = vsel %vm226, %v622, 0.0
      %626 = vadd.xlane.f32.xlu0 %v625
      %v627 = vpop.xlane.xlu0 %626
      %v628 = vsel %vm230, %v624, 0.0
      %629 = vadd.xlane.f32.xlu0 %v628
      %v630 = vpop.xlane.xlu0 %629
      %v631 = vrcp.pop %v627
      %v632 = vrcp.pop %v630
      %v633 = vmul.f32 %v622, %v631
      %v634 = vmul.f32 %v624, %v632
      %v635 = vpack.c.bf16 %v634, %v633
      %636 = vrot.lane.b32.xlu0 %v164, 40
      %v637 = vpop.permute.xlu0 %636
      %v639 = vsel %vm226, %v635, 0
      %v642 = vand.u32 %v637, %v259
      %644 = vmatprep.subr.bf16.mxu0 0
      %645 = vmatpush1.bf16.msra.mxu0 %v642
      %646 = vmatprep.subr.bf16.mxu0 0
      %647 = vmatpush1.bf16.msra.mxu0 0
      %648 = vmatprep.subr.bf16.mxu0 0
      %649 = vmatpush1.bf16.msra.mxu0 0
      %650 = vmatprep.subr.bf16.mxu0 0
      %651 = vmatpush1.bf16.msra.mxu0 0
      %652 = vmatprep.subr.bf16.mxu0 0
      %653 = vmatpush1.bf16.msra.mxu0 0
      %654 = vmatprep.subr.bf16.mxu0 0
      %655 = vmatpush1.bf16.msra.mxu0 0
      %656 = vmatprep.subr.bf16.mxu0 0
      %657 = vmatpush1.bf16.msra.mxu0 0
      %658 = vmatprep.subr.bf16.mxu0 0
      %659 = vmatpush1.bf16.msra.mxu0 0
      %660 = vmatprep.subr.bf16.mxu0 0
      %661 = vmatpush1.bf16.msra.mxu0 0
      %662 = vmatprep.subr.bf16.mxu0 0
      %663 = vmatpush1.bf16.msra.mxu0 0
      %664 = vmatprep.subr.bf16.mxu0 0
      %665 = vmatpush1.bf16.msra.mxu0 0
      %666 = vmatprep.subr.bf16.mxu0 0
      %667 = vmatpush1.bf16.msra.mxu0 0
      %668 = vmatprep.subr.bf16.mxu0 0
      %669 = vmatpush1.bf16.msra.mxu0 0
      %670 = vmatprep.subr.bf16.mxu0 0
      %671 = vmatpush1.bf16.msra.mxu0 0
      %672 = vmatprep.subr.bf16.mxu0 0
      %673 = vmatpush1.bf16.msra.mxu0 0
      %674 = vmatprep.subr.bf16.mxu0 0
      %675 = vmatpush1.bf16.msra.mxu0 0
      %676 = vmatprep.mubr.bf16.mxu0 0
      %677 = vmatmul.mubr.bf16.gmra.mrb[0].mxu0 %v639
      %v678 = vpop.f32.mrb[0].mxu0
      %v679 = vadd.f32 0.0, %v678
      %v680 = vpop.f32.mrb[0].mxu0
      %v681 = vpop.f32.mrb[0].mxu0
      %v682 = vadd.f32 0.0, %v681
      %v683 = vpop.f32.mrb[0].mxu0
      %684 = vdwg.mxu0
      %687 = vrot.lane.b32.xlu0 %v425, 8
      %v688 = vpop.permute.xlu0 %687
      %689 = vrot.lane.b32.xlu0 %v428, 8
      %v690 = vpop.permute.xlu0 %689
      %695 = vrot.lane.b32.xlu0 %v552, 16
      %v696 = vpop.permute.xlu0 %695
      %697 = vrot.lane.b32.xlu0 %v555, 16
      %v698 = vpop.permute.xlu0 %697
      %703 = vrot.lane.b32.xlu0 %v679, 24
      %v704 = vpop.permute.xlu0 %703
      %705 = vrot.lane.b32.xlu0 %v682, 24
      %v706 = vpop.permute.xlu0 %705
      %v709 = vsel %vm168, %v298, %v688
      %v710 = vsel %vm168, %v301, %v690
      %vm711 = vcmask 130048
      %v712 = vsel %vm711, %v709, %v696
      %v713 = vsel %vm711, %v710, %v698
      %vm714 = vcmask 195584
      %v715 = vsel %vm714, %v712, %v704
      %v716 = vsel %vm714, %v713, %v706
      %vm717 = vcmask 261120
      %718 = vst.msk [vmem:[%s157] sm:$0xff] %vm717, %v715
      %vm719 = vcmask 260096
      %720 = vst.msk [vmem:[%s157 + $0x8] sm:$0x7f] %vm719, %v716
      %p721 = scmp.lt.s32.totalorder %s13, 1
      %s722 = scalar_select %p721, %s13, 1
      %s723 = smul.addr %s722, 2
      %s724 = smul.addr %s723, 8
      %s725 = scalar_lea.vmem %s2, %s724
      // Predicated region
      $region29: #{bart_speech_ner_forward.39} parent=27 // pred_check
        %p726 = pneg %p83
      $region30: #{bart_speech_ner_forward.39} parent=27 // pred_check_branch
        %728 = sbr.rel (%p726) target = $region32
      $region31: #{bart_speech_ner_forward.39} parent=27 // pred_region
        _
      $region32: #{bart_speech_ner_forward.39} parent=27 // pred_fallthru
        _
    $region28: #{bart_speech_ner_forward.39} parent=5 // pred_fallthru
      _
    %p729 = scmp.le.s32.totalorder 2, %s8
    // Predicated region
    $region33: #{bart_speech_ner_forward.39} parent=5 // pred_check
      %p730 = pneg %p729
    $region34: #{bart_speech_ner_forward.39} parent=5 // pred_check_branch
      %732 = sbr.rel (%p730) target = $region36
    $region35: #{bart_speech_ner_forward.39} parent=5 // pred_region
      %s733 = ssub.s32 %s8, 2
      // Predicated region
      $region37: #{bart_speech_ner_forward.39} parent=35 // pred_check
        %p734 = pneg %p89
      $region38: #{bart_speech_ner_forward.39} parent=35 // pred_check_branch
        %736 = sbr.rel (%p734) target = $region40
      $region39: #{bart_speech_ner_forward.39} parent=35 // pred_region
        %p737 = scmp.lt.s32.totalorder %s14, 1
        %s738 = scalar_select %p737, %s14, 1
        %s739 = smul.addr %s738, 2
        %s740 = smul.addr %s739, 8
        %s741 = scalar_lea.vmem %s2, %s740
      $region40: #{bart_speech_ner_forward.39} parent=35 // pred_fallthru
        _
    $region36: #{bart_speech_ner_forward.39} parent=5 // pred_fallthru
      _
  $region6: #{bart_speech_ner_forward.39} parent=0 // loop_footer
    %s12 = sadd.s32 1, %s8
  $region7: #{bart_speech_ner_forward.39} parent=0 // loop_footer_branch
    %7 = sbr.rel target = $region3
  $region8: #{bart_speech_ner_forward.39} parent=0 // loop_exit
    _

// kernel: bart_speech_ner_forward.40
$region0: #{bart_speech_ner_forward.40}
  #allocation0 [shape = 'u32[]', space=smem, size = 0x4, offset = 0x4, fixed_abs, tag = 'smem constant byte address 0x4 - core index']
  #allocation1 [shape = 'u32[144,128]{1,0:T(1,128)}', space=vmem, size = 0x12000, scoped, tag = 'internal scratch']
  #allocation2 [shape = 'f32[32,128]{1,0:T(8,128)}', space=vmem, size = 0x4000, scoped, tag = 'scratch operand']
  %s0 = inlined_call_operand.vmem [shape: bf16[32,128], index: 0, kind: input, shape index: {}]
  %s1 = inlined_call_operand.vmem [shape: bf16[128,128], index: 1, kind: input, shape index: {}]
  %s2 = inlined_call_operand.vmem [shape: f32[1,128], index: 2, kind: input, shape index: {}]
  %s3 = inlined_call_operand.vmem [shape: f32[32,128], index: 3, kind: input, shape index: {}]
  %s4 = inlined_call_operand.vmem [shape: f32[32,128], index: 4, kind: output, shape index: {}]
  %s5 = sld [smem:[#allocation0]]
  $region34: #{bart_speech_ner_forward.40} parent=0
    _
  %s7 = ssub.s32 1, %s5
  %s8 = scalar_select 0, %s7, %s5
  // Predicated region
  $region2: #{bart_speech_ner_forward.40} parent=0 // pred_check
    _
  $region3: #{bart_speech_ner_forward.40} parent=0 // pred_check_branch
    %10 = sbr.rel (0) target = $region5
  $region4: #{bart_speech_ner_forward.40} parent=0 // pred_region
    _
  $region5: #{bart_speech_ner_forward.40} parent=0 // pred_fallthru
    _
  // Predicated region
  $region6: #{bart_speech_ner_forward.40} parent=0 // pred_check
    _
  $region7: #{bart_speech_ner_forward.40} parent=0 // pred_check_branch
    %12 = sbr.rel (0) target = $region9
  $region8: #{bart_speech_ner_forward.40} parent=0 // pred_region
    _
  $region9: #{bart_speech_ner_forward.40} parent=0 // pred_fallthru
    _
  // Predicated region
  $region10: #{bart_speech_ner_forward.40} parent=0 // pred_check
    _
  $region11: #{bart_speech_ner_forward.40} parent=0 // pred_check_branch
    %14 = sbr.rel (0) target = $region13
  $region12: #{bart_speech_ner_forward.40} parent=0 // pred_region
    _
  $region13: #{bart_speech_ner_forward.40} parent=0 // pred_fallthru
    _
  // Predicated region
  $region14: #{bart_speech_ner_forward.40} parent=0 // pred_check
    _
  $region15: #{bart_speech_ner_forward.40} parent=0 // pred_check_branch
    %16 = sbr.rel (0) target = $region17
  $region16: #{bart_speech_ner_forward.40} parent=0 // pred_region
    _
  $region17: #{bart_speech_ner_forward.40} parent=0 // pred_fallthru
    _
  %p18 = scmp.eq.s32.totalorder 0, 0
  // Predicated region
  $region18: #{bart_speech_ner_forward.40} parent=0 // pred_check
    %p19 = pneg %p18
  $region19: #{bart_speech_ner_forward.40} parent=0 // pred_check_branch
    %21 = sbr.rel (%p19) target = $region21
  $region20: #{bart_speech_ner_forward.40} parent=0 // pred_region
    %22 = vst [vmem:[#allocation2] sm:$0xff] 0.0
    %23 = vst [vmem:[#allocation2 + $0x8] sm:$0xff] 0.0
    %24 = vst [vmem:[#allocation2 + $0x10] sm:$0xff] 0.0
    %25 = vst [vmem:[#allocation2 + $0x18] sm:$0xff] 0.0
  $region21: #{bart_speech_ner_forward.40} parent=0 // pred_fallthru
    _
  %v26 = vld [vmem:[#allocation2] sm:$0xff]
  %v27 = vld [vmem:[#allocation2 + $0x8] sm:$0xff]
  %v28 = vld [vmem:[#allocation2 + $0x10] sm:$0xff]
  %v29 = vld [vmem:[#allocation2 + $0x18] sm:$0xff]
  %v30 = vld [vmem:[%s0] sm:$0xf]
  %v31 = vld [vmem:[%s0 + $0x4] sm:$0xf]
  %v32 = vld [vmem:[%s0 + $0x8] sm:$0xf]
  %v33 = vld [vmem:[%s0 + $0xc] sm:$0xf]
  %v34 = vld [vmem:[%s1] sm:$0xf]
  %v35 = vld [vmem:[%s1 + $0x4] sm:$0xf]
  %v36 = vld [vmem:[%s1 + $0x8] sm:$0xf]
  %v37 = vld [vmem:[%s1 + $0xc] sm:$0xf]
  %v38 = vld [vmem:[%s1 + $0x10] sm:$0xf]
  %v39 = vld [vmem:[%s1 + $0x14] sm:$0xf]
  %v40 = vld [vmem:[%s1 + $0x18] sm:$0xf]
  %v41 = vld [vmem:[%s1 + $0x1c] sm:$0xf]
  %v42 = vld [vmem:[%s1 + $0x20] sm:$0xf]
  %v43 = vld [vmem:[%s1 + $0x24] sm:$0xf]
  %v44 = vld [vmem:[%s1 + $0x28] sm:$0xf]
  %v45 = vld [vmem:[%s1 + $0x2c] sm:$0xf]
  %v46 = vld [vmem:[%s1 + $0x30] sm:$0xf]
  %v47 = vld [vmem:[%s1 + $0x34] sm:$0xf]
  %v48 = vld [vmem:[%s1 + $0x38] sm:$0xf]
  %v49 = vld [vmem:[%s1 + $0x3c] sm:$0xf]
  %v54 = vunpack.c.l.b16 %v30
  %v55 = vunpack.c.l.b16 %v31
  %v56 = vunpack.c.l.b16 %v32
  %v57 = vunpack.c.l.b16 %v33
  %v58 = vpack.c.b16 %v55, %v54
  %v59 = vpack.c.b16 %v57, %v56
  %v78 = vunpack.c.l.b16 %v34
  %v79 = vunpack.c.l.b16 %v35
  %v80 = vunpack.c.l.b16 %v36
  %v81 = vunpack.c.l.b16 %v37
  %v82 = vunpack.c.l.b16 %v38
  %v83 = vunpack.c.l.b16 %v39
  %v84 = vunpack.c.l.b16 %v40
  %v85 = vunpack.c.l.b16 %v41
  %v86 = vunpack.c.l.b16 %v42
  %v87 = vunpack.c.l.b16 %v43
  %v88 = vunpack.c.l.b16 %v44
  %v89 = vunpack.c.l.b16 %v45
  %v90 = vunpack.c.l.b16 %v46
  %v91 = vunpack.c.l.b16 %v47
  %v92 = vunpack.c.l.b16 %v48
  %v93 = vunpack.c.l.b16 %v49
  %v94 = vpack.c.b16 %v79, %v78
  %v95 = vpack.c.b16 %v81, %v80
  %v96 = vpack.c.b16 %v83, %v82
  %v97 = vpack.c.b16 %v85, %v84
  %v98 = vpack.c.b16 %v87, %v86
  %v99 = vpack.c.b16 %v89, %v88
  %v100 = vpack.c.b16 %v91, %v90
  %v101 = vpack.c.b16 %v93, %v92
  %110 = vmatprep.subr.bf16.mxu0 0
  %111 = vmatpush1.bf16.msra.mxu0 %v94
  %112 = vmatprep.subr.bf16.mxu0 0
  %113 = vmatpush1.bf16.msra.mxu0 %v95
  %114 = vmatprep.subr.bf16.mxu0 0
  %115 = vmatpush1.bf16.msra.mxu0 %v96
  %116 = vmatprep.subr.bf16.mxu0 0
  %117 = vmatpush1.bf16.msra.mxu0 %v97
  %118 = vmatprep.subr.bf16.mxu0 0
  %119 = vmatpush1.bf16.msra.mxu0 %v98
  %120 = vmatprep.subr.bf16.mxu0 0
  %121 = vmatpush1.bf16.msra.mxu0 %v99
  %122 = vmatprep.subr.bf16.mxu0 0
  %123 = vmatpush1.bf16.msra.mxu0 %v100
  %124 = vmatprep.subr.bf16.mxu0 0
  %125 = vmatpush1.bf16.msra.mxu0 %v101
  %126 = vmatprep.subr.bf16.mxu0 0
  %127 = vmatpush1.bf16.msra.mxu0 0
  %128 = vmatprep.subr.bf16.mxu0 0
  %129 = vmatpush1.bf16.msra.mxu0 0
  %130 = vmatprep.subr.bf16.mxu0 0
  %131 = vmatpush1.bf16.msra.mxu0 0
  %132 = vmatprep.subr.bf16.mxu0 0
  %133 = vmatpush1.bf16.msra.mxu0 0
  %134 = vmatprep.subr.bf16.mxu0 0
  %135 = vmatpush1.bf16.msra.mxu0 0
  %136 = vmatprep.subr.bf16.mxu0 0
  %137 = vmatpush1.bf16.msra.mxu0 0
  %138 = vmatprep.subr.bf16.mxu0 0
  %139 = vmatpush1.bf16.msra.mxu0 0
  %140 = vmatprep.subr.bf16.mxu0 0
  %141 = vmatpush1.bf16.msra.mxu0 0
  %142 = vmatprep.mubr.bf16.mxu0 0
  %143 = vmatmul.mubr.bf16.gmra.mrb[0].mxu0 %v58
  %v144 = vpop.f32.mrb[0].mxu0
  %v145 = vadd.f32 0.0, %v144
  %v146 = vpop.f32.mrb[0].mxu0
  %v147 = vpop.f32.mrb[0].mxu0
  %v148 = vadd.f32 0.0, %v147
  %v149 = vpop.f32.mrb[0].mxu0
  %150 = vmatprep.mubr.bf16.mxu0 0
  %151 = vmatmul.mubr.bf16.gmra.mrb[0].mxu0 %v59
  %v152 = vpop.f32.mrb[0].mxu0
  %v153 = vadd.f32 0.0, %v152
  %v154 = vpop.f32.mrb[0].mxu0
  %v155 = vpop.f32.mrb[0].mxu0
  %v156 = vadd.f32 0.0, %v155
  %v157 = vpop.f32.mrb[0].mxu0
  %158 = vdwg.mxu0
  %v159 = vadd.f32 %v26, %v145
  %v160 = vadd.f32 %v27, %v148
  %v161 = vadd.f32 %v28, %v153
  %v162 = vadd.f32 %v29, %v156
  %163 = vst [vmem:[#allocation2] sm:$0xff] %v159
  %164 = vst [vmem:[#allocation2 + $0x8] sm:$0xff] %v160
  %165 = vst [vmem:[#allocation2 + $0x10] sm:$0xff] %v161
  %166 = vst [vmem:[#allocation2 + $0x18] sm:$0xff] %v162
  // Predicated region
  $region22: #{bart_speech_ner_forward.40} parent=0 // pred_check
    %p167 = pneg %p18
  $region23: #{bart_speech_ner_forward.40} parent=0 // pred_check_branch
    %169 = sbr.rel (%p167) target = $region25
  $region24: #{bart_speech_ner_forward.40} parent=0 // pred_region
    %v170 = vld [vmem:[#allocation2] sm:$0xff]
    %v171 = vld [vmem:[#allocation2 + $0x8] sm:$0xff]
    %v172 = vld [vmem:[#allocation2 + $0x10] sm:$0xff]
    %v173 = vld [vmem:[#allocation2 + $0x18] sm:$0xff]
    %v174 = vld [vmem:[%s2] sm:$0x1]
    %v176 = vlaneseq
    %v177 = vshrl.u32 %v176, 7
    %v178 = vsub.s32 0, %v177
    %v179 = vrot.slane %v174, %v178
    %v181 = vadd.f32 %v170, %v179
    %v182 = vadd.f32 %v171, %v179
    %v183 = vadd.f32 %v172, %v179
    %v184 = vadd.f32 %v173, %v179
    %v185 = vld [vmem:[%s3] sm:$0xff]
    %v186 = vld [vmem:[%s3 + $0x8] sm:$0xff]
    %v187 = vld [vmem:[%s3 + $0x10] sm:$0xff]
    %v188 = vld [vmem:[%s3 + $0x18] sm:$0xff]
    %v189 = vadd.f32 %v181, %v185
    %v190 = vadd.f32 %v182, %v186
    %v191 = vadd.f32 %v183, %v187
    %v192 = vadd.f32 %v184, %v188
    %193 = vst [vmem:[%s4] sm:$0xff] %v189
    %194 = vst [vmem:[%s4 + $0x8] sm:$0xff] %v190
    %195 = vst [vmem:[%s4 + $0x10] sm:$0xff] %v191
    %196 = vst [vmem:[%s4 + $0x18] sm:$0xff] %v192
  $region25: #{bart_speech_ner_forward.40} parent=0 // pred_fallthru
    _
  // Predicated region
  $region26: #{bart_speech_ner_forward.40} parent=0 // pred_check
    _
  $region27: #{bart_speech_ner_forward.40} parent=0 // pred_check_branch
    %198 = sbr.rel (0) target = $region29
  $region28: #{bart_speech_ner_forward.40} parent=0 // pred_region
    _
  $region29: #{bart_speech_ner_forward.40} parent=0 // pred_fallthru
    _
  // Predicated region
  $region30: #{bart_speech_ner_forward.40} parent=0 // pred_check
    _
  $region31: #{bart_speech_ner_forward.40} parent=0 // pred_check_branch
    %200 = sbr.rel (0) target = $region33
  $region32: #{bart_speech_ner_forward.40} parent=0 // pred_region
    _
  $region33: #{bart_speech_ner_forward.40} parent=0 // pred_fallthru
    _

// kernel: bart_speech_ner_forward.42
$region0: #{bart_speech_ner_forward.42}
  #allocation0 [shape = 'u32[]', space=smem, size = 0x4, offset = 0x4, fixed_abs, tag = 'smem constant byte address 0x4 - core index']
  #allocation1 [shape = 'u32[144,128]{1,0:T(1,128)}', space=vmem, size = 0x12000, scoped, tag = 'internal scratch']
  #allocation2 [shape = 'f32[32,128]{1,0:T(8,128)}', space=vmem, size = 0x4000, scoped, tag = 'scratch operand']
  %s0 = inlined_call_operand.vmem [shape: bf16[32,128], index: 0, kind: input, shape index: {}]
  %s1 = inlined_call_operand.vmem [shape: bf16[128,128], index: 1, kind: input, shape index: {}]
  %s2 = inlined_call_operand.vmem [shape: f32[1,128], index: 2, kind: input, shape index: {}]
  %s3 = inlined_call_operand.vmem [shape: f32[32,128], index: 3, kind: output, shape index: {}]
  %s4 = sld [smem:[#allocation0]]
  $region30: #{bart_speech_ner_forward.42} parent=0
    _
  %s6 = ssub.s32 1, %s4
  %s7 = scalar_select 0, %s6, %s4
  // Predicated region
  $region2: #{bart_speech_ner_forward.42} parent=0 // pred_check
    _
  $region3: #{bart_speech_ner_forward.42} parent=0 // pred_check_branch
    %9 = sbr.rel (0) target = $region5
  $region4: #{bart_speech_ner_forward.42} parent=0 // pred_region
    _
  $region5: #{bart_speech_ner_forward.42} parent=0 // pred_fallthru
    _
  // Predicated region
  $region6: #{bart_speech_ner_forward.42} parent=0 // pred_check
    _
  $region7: #{bart_speech_ner_forward.42} parent=0 // pred_check_branch
    %11 = sbr.rel (0) target = $region9
  $region8: #{bart_speech_ner_forward.42} parent=0 // pred_region
    _
  $region9: #{bart_speech_ner_forward.42} parent=0 // pred_fallthru
    _
  // Predicated region
  $region10: #{bart_speech_ner_forward.42} parent=0 // pred_check
    _
  $region11: #{bart_speech_ner_forward.42} parent=0 // pred_check_branch
    %13 = sbr.rel (0) target = $region13
  $region12: #{bart_speech_ner_forward.42} parent=0 // pred_region
    _
  $region13: #{bart_speech_ner_forward.42} parent=0 // pred_fallthru
    _
  %p15 = scmp.eq.s32.totalorder 0, 0
  // Predicated region
  $region14: #{bart_speech_ner_forward.42} parent=0 // pred_check
    %p16 = pneg %p15
  $region15: #{bart_speech_ner_forward.42} parent=0 // pred_check_branch
    %18 = sbr.rel (%p16) target = $region17
  $region16: #{bart_speech_ner_forward.42} parent=0 // pred_region
    %19 = vst [vmem:[#allocation2] sm:$0xff] 0.0
    %20 = vst [vmem:[#allocation2 + $0x8] sm:$0xff] 0.0
    %21 = vst [vmem:[#allocation2 + $0x10] sm:$0xff] 0.0
    %22 = vst [vmem:[#allocation2 + $0x18] sm:$0xff] 0.0
  $region17: #{bart_speech_ner_forward.42} parent=0 // pred_fallthru
    _
  %v23 = vld [vmem:[#allocation2] sm:$0xff]
  %v24 = vld [vmem:[#allocation2 + $0x8] sm:$0xff]
  %v25 = vld [vmem:[#allocation2 + $0x10] sm:$0xff]
  %v26 = vld [vmem:[#allocation2 + $0x18] sm:$0xff]
  %v27 = vld [vmem:[%s0] sm:$0xf]
  %v28 = vld [vmem:[%s0 + $0x4] sm:$0xf]
  %v29 = vld [vmem:[%s0 + $0x8] sm:$0xf]
  %v30 = vld [vmem:[%s0 + $0xc] sm:$0xf]
  %v31 = vld [vmem:[%s1] sm:$0xf]
  %v32 = vld [vmem:[%s1 + $0x4] sm:$0xf]
  %v33 = vld [vmem:[%s1 + $0x8] sm:$0xf]
  %v34 = vld [vmem:[%s1 + $0xc] sm:$0xf]
  %v35 = vld [vmem:[%s1 + $0x10] sm:$0xf]
  %v36 = vld [vmem:[%s1 + $0x14] sm:$0xf]
  %v37 = vld [vmem:[%s1 + $0x18] sm:$0xf]
  %v38 = vld [vmem:[%s1 + $0x1c] sm:$0xf]
  %v39 = vld [vmem:[%s1 + $0x20] sm:$0xf]
  %v40 = vld [vmem:[%s1 + $0x24] sm:$0xf]
  %v41 = vld [vmem:[%s1 + $0x28] sm:$0xf]
  %v42 = vld [vmem:[%s1 + $0x2c] sm:$0xf]
  %v43 = vld [vmem:[%s1 + $0x30] sm:$0xf]
  %v44 = vld [vmem:[%s1 + $0x34] sm:$0xf]
  %v45 = vld [vmem:[%s1 + $0x38] sm:$0xf]
  %v46 = vld [vmem:[%s1 + $0x3c] sm:$0xf]
  %v51 = vunpack.c.l.b16 %v27
  %v52 = vunpack.c.l.b16 %v28
  %v53 = vunpack.c.l.b16 %v29
  %v54 = vunpack.c.l.b16 %v30
  %v55 = vpack.c.b16 %v52, %v51
  %v56 = vpack.c.b16 %v54, %v53
  %v75 = vunpack.c.l.b16 %v31
  %v76 = vunpack.c.l.b16 %v32
  %v77 = vunpack.c.l.b16 %v33
  %v78 = vunpack.c.l.b16 %v34
  %v79 = vunpack.c.l.b16 %v35
  %v80 = vunpack.c.l.b16 %v36
  %v81 = vunpack.c.l.b16 %v37
  %v82 = vunpack.c.l.b16 %v38
  %v83 = vunpack.c.l.b16 %v39
  %v84 = vunpack.c.l.b16 %v40
  %v85 = vunpack.c.l.b16 %v41
  %v86 = vunpack.c.l.b16 %v42
  %v87 = vunpack.c.l.b16 %v43
  %v88 = vunpack.c.l.b16 %v44
  %v89 = vunpack.c.l.b16 %v45
  %v90 = vunpack.c.l.b16 %v46
  %v91 = vpack.c.b16 %v76, %v75
  %v92 = vpack.c.b16 %v78, %v77
  %v93 = vpack.c.b16 %v80, %v79
  %v94 = vpack.c.b16 %v82, %v81
  %v95 = vpack.c.b16 %v84, %v83
  %v96 = vpack.c.b16 %v86, %v85
  %v97 = vpack.c.b16 %v88, %v87
  %v98 = vpack.c.b16 %v90, %v89
  %107 = vmatprep.subr.bf16.mxu0 0
  %108 = vmatpush1.bf16.msra.mxu0 %v91
  %109 = vmatprep.subr.bf16.mxu0 0
  %110 = vmatpush1.bf16.msra.mxu0 %v92
  %111 = vmatprep.subr.bf16.mxu0 0
  %112 = vmatpush1.bf16.msra.mxu0 %v93
  %113 = vmatprep.subr.bf16.mxu0 0
  %114 = vmatpush1.bf16.msra.mxu0 %v94
  %115 = vmatprep.subr.bf16.mxu0 0
  %116 = vmatpush1.bf16.msra.mxu0 %v95
  %117 = vmatprep.subr.bf16.mxu0 0
  %118 = vmatpush1.bf16.msra.mxu0 %v96
  %119 = vmatprep.subr.bf16.mxu0 0
  %120 = vmatpush1.bf16.msra.mxu0 %v97
  %121 = vmatprep.subr.bf16.mxu0 0
  %122 = vmatpush1.bf16.msra.mxu0 %v98
  %123 = vmatprep.subr.bf16.mxu0 0
  %124 = vmatpush1.bf16.msra.mxu0 0
  %125 = vmatprep.subr.bf16.mxu0 0
  %126 = vmatpush1.bf16.msra.mxu0 0
  %127 = vmatprep.subr.bf16.mxu0 0
  %128 = vmatpush1.bf16.msra.mxu0 0
  %129 = vmatprep.subr.bf16.mxu0 0
  %130 = vmatpush1.bf16.msra.mxu0 0
  %131 = vmatprep.subr.bf16.mxu0 0
  %132 = vmatpush1.bf16.msra.mxu0 0
  %133 = vmatprep.subr.bf16.mxu0 0
  %134 = vmatpush1.bf16.msra.mxu0 0
  %135 = vmatprep.subr.bf16.mxu0 0
  %136 = vmatpush1.bf16.msra.mxu0 0
  %137 = vmatprep.subr.bf16.mxu0 0
  %138 = vmatpush1.bf16.msra.mxu0 0
  %139 = vmatprep.mubr.bf16.mxu0 0
  %140 = vmatmul.mubr.bf16.gmra.mrb[0].mxu0 %v55
  %v141 = vpop.f32.mrb[0].mxu0
  %v142 = vadd.f32 0.0, %v141
  %v143 = vpop.f32.mrb[0].mxu0
  %v144 = vpop.f32.mrb[0].mxu0
  %v145 = vadd.f32 0.0, %v144
  %v146 = vpop.f32.mrb[0].mxu0
  %147 = vmatprep.mubr.bf16.mxu0 0
  %148 = vmatmul.mubr.bf16.gmra.mrb[0].mxu0 %v56
  %v149 = vpop.f32.mrb[0].mxu0
  %v150 = vadd.f32 0.0, %v149
  %v151 = vpop.f32.mrb[0].mxu0
  %v152 = vpop.f32.mrb[0].mxu0
  %v153 = vadd.f32 0.0, %v152
  %v154 = vpop.f32.mrb[0].mxu0
  %155 = vdwg.mxu0
  %v156 = vadd.f32 %v23, %v142
  %v157 = vadd.f32 %v24, %v145
  %v158 = vadd.f32 %v25, %v150
  %v159 = vadd.f32 %v26, %v153
  %160 = vst [vmem:[#allocation2] sm:$0xff] %v156
  %161 = vst [vmem:[#allocation2 + $0x8] sm:$0xff] %v157
  %162 = vst [vmem:[#allocation2 + $0x10] sm:$0xff] %v158
  %163 = vst [vmem:[#allocation2 + $0x18] sm:$0xff] %v159
  // Predicated region
  $region18: #{bart_speech_ner_forward.42} parent=0 // pred_check
    %p164 = pneg %p15
  $region19: #{bart_speech_ner_forward.42} parent=0 // pred_check_branch
    %166 = sbr.rel (%p164) target = $region21
  $region20: #{bart_speech_ner_forward.42} parent=0 // pred_region
    %v167 = vld [vmem:[#allocation2] sm:$0xff]
    %v168 = vld [vmem:[#allocation2 + $0x8] sm:$0xff]
    %v169 = vld [vmem:[#allocation2 + $0x10] sm:$0xff]
    %v170 = vld [vmem:[#allocation2 + $0x18] sm:$0xff]
    %v171 = vld [vmem:[%s2] sm:$0x1]
    %v173 = vlaneseq
    %v174 = vshrl.u32 %v173, 7
    %v175 = vsub.s32 0, %v174
    %v176 = vrot.slane %v171, %v175
    %v178 = vadd.f32 %v167, %v176
    %v179 = vadd.f32 %v168, %v176
    %v180 = vadd.f32 %v169, %v176
    %v181 = vadd.f32 %v170, %v176
    %v182 = vmax.f32 %v178, 0.0
    %v183 = vmax.f32 %v179, 0.0
    %v184 = vmax.f32 %v180, 0.0
    %v185 = vmax.f32 %v181, 0.0
    %186 = vst [vmem:[%s3] sm:$0xff] %v182
    %187 = vst [vmem:[%s3 + $0x8] sm:$0xff] %v183
    %188 = vst [vmem:[%s3 + $0x10] sm:$0xff] %v184
    %189 = vst [vmem:[%s3 + $0x18] sm:$0xff] %v185
  $region21: #{bart_speech_ner_forward.42} parent=0 // pred_fallthru
    _
  // Predicated region
  $region22: #{bart_speech_ner_forward.42} parent=0 // pred_check
    _
  $region23: #{bart_speech_ner_forward.42} parent=0 // pred_check_branch
    %191 = sbr.rel (0) target = $region25
  $region24: #{bart_speech_ner_forward.42} parent=0 // pred_region
    _
  $region25: #{bart_speech_ner_forward.42} parent=0 // pred_fallthru
    _
  // Predicated region
  $region26: #{bart_speech_ner_forward.42} parent=0 // pred_check
    _
  $region27: #{bart_speech_ner_forward.42} parent=0 // pred_check_branch
    %193 = sbr.rel (0) target = $region29
  $region28: #{bart_speech_ner_forward.42} parent=0 // pred_region
    _
  $region29: #{bart_speech_ner_forward.42} parent=0 // pred_fallthru
    _

// kernel: bart_speech_ner_forward.55
$region0: #{bart_speech_ner_forward.55}
  #allocation0 [shape = 'u32[]', space=smem, size = 0x4, offset = 0x4, fixed_abs, tag = 'smem constant byte address 0x4 - core index']
  #allocation1 [shape = 'u32[144,128]{1,0:T(1,128)}', space=vmem, size = 0x12000, scoped, tag = 'internal scratch']
  %s0 = inlined_call_operand.vmem [shape: f32[32,32], index: 0, kind: input, shape index: {}]
  %s1 = inlined_call_operand.vmem [shape: f32[1,32], index: 1, kind: input, shape index: {}]
  %s2 = inlined_call_operand.vmem [shape: f32[1,32], index: 2, kind: input, shape index: {}]
  %s3 = inlined_call_operand.vmem [shape: f32[32,32], index: 3, kind: output, shape index: {}]
  %s4 = sld [smem:[#allocation0]]
  $region22: #{bart_speech_ner_forward.55} parent=0
    _
  %s6 = ssub.s32 1, %s4
  %s7 = scalar_select 0, %s6, %s4
  // Predicated region
  $region2: #{bart_speech_ner_forward.55} parent=0 // pred_check
    _
  $region3: #{bart_speech_ner_forward.55} parent=0 // pred_check_branch
    %9 = sbr.rel (0) target = $region5
  $region4: #{bart_speech_ner_forward.55} parent=0 // pred_region
    _
  $region5: #{bart_speech_ner_forward.55} parent=0 // pred_fallthru
    _
  // Predicated region
  $region6: #{bart_speech_ner_forward.55} parent=0 // pred_check
    _
  $region7: #{bart_speech_ner_forward.55} parent=0 // pred_check_branch
    %11 = sbr.rel (0) target = $region9
  $region8: #{bart_speech_ner_forward.55} parent=0 // pred_region
    _
  $region9: #{bart_speech_ner_forward.55} parent=0 // pred_fallthru
    _
  // Predicated region
  $region10: #{bart_speech_ner_forward.55} parent=0 // pred_check
    _
  $region11: #{bart_speech_ner_forward.55} parent=0 // pred_check_branch
    %13 = sbr.rel (0) target = $region13
  $region12: #{bart_speech_ner_forward.55} parent=0 // pred_region
    _
  $region13: #{bart_speech_ner_forward.55} parent=0 // pred_fallthru
    _
  %v14 = vld [vmem:[%s0] sm:$0xff]
  %v15 = vld [vmem:[%s0 + $0x8] sm:$0xff]
  %v16 = vld [vmem:[%s0 + $0x10] sm:$0xff]
  %v17 = vld [vmem:[%s0 + $0x18] sm:$0xff]
  %vm18 = vcmask 261120
  %v19 = vsel %vm18, %v14, 0.0
  %20 = vadd.xlane.f32.xlu0 %v19
  %v21 = vpop.xlane.xlu0 %20
  %v22 = vsel %vm18, %v15, 0.0
  %23 = vadd.xlane.f32.xlu0 %v22
  %v24 = vpop.xlane.xlu0 %23
  %v25 = vsel %vm18, %v16, 0.0
  %26 = vadd.xlane.f32.xlu0 %v25
  %v27 = vpop.xlane.xlu0 %26
  %v28 = vsel %vm18, %v17, 0.0
  %29 = vadd.xlane.f32.xlu0 %v28
  %v30 = vpop.xlane.xlu0 %29
  %v31 = vrcp.pop 32.0
  %v32 = vmul.f32 %v21, %v31
  %v33 = vmul.f32 %v24, %v31
  %v34 = vmul.f32 %v27, %v31
  %v35 = vmul.f32 %v30, %v31
  %v36 = vsub.f32 %v14, %v32
  %v37 = vsub.f32 %v15, %v33
  %v38 = vsub.f32 %v16, %v34
  %v39 = vsub.f32 %v17, %v35
  %v40 = vmul.f32 %v36, %v36
  %v41 = vmul.f32 %v37, %v37
  %v42 = vmul.f32 %v38, %v38
  %v43 = vmul.f32 %v39, %v39
  %v44 = vsel %vm18, %v40, 0.0
  %45 = vadd.xlane.f32.xlu0 %v44
  %v46 = vpop.xlane.xlu0 %45
  %v47 = vsel %vm18, %v41, 0.0
  %48 = vadd.xlane.f32.xlu0 %v47
  %v49 = vpop.xlane.xlu0 %48
  %v50 = vsel %vm18, %v42, 0.0
  %51 = vadd.xlane.f32.xlu0 %v50
  %v52 = vpop.xlane.xlu0 %51
  %v53 = vsel %vm18, %v43, 0.0
  %54 = vadd.xlane.f32.xlu0 %v53
  %v55 = vpop.xlane.xlu0 %54
  %v56 = vmul.f32 %v46, %v31
  %v57 = vmul.f32 %v49, %v31
  %v58 = vmul.f32 %v52, %v31
  %v59 = vmul.f32 %v55, %v31
  %v60 = vadd.f32 %v56, 1e-05
  %v61 = vadd.f32 %v57, 1e-05
  %v62 = vadd.f32 %v58, 1e-05
  %v63 = vadd.f32 %v59, 1e-05
  %v64 = vrsqrt.pop %v60
  %v65 = vrsqrt.pop %v61
  %v66 = vrsqrt.pop %v62
  %v67 = vrsqrt.pop %v63
  %v68 = vmul.f32 %v36, %v64
  %v69 = vmul.f32 %v37, %v65
  %v70 = vmul.f32 %v38, %v66
  %v71 = vmul.f32 %v39, %v67
  %v72 = vld [vmem:[%s1] sm:$0x1]
  %v74 = vlaneseq
  %v75 = vshrl.u32 %v74, 7
  %v76 = vsub.s32 0, %v75
  %v77 = vrot.slane %v72, %v76
  %v79 = vmul.f32 %v68, %v77
  %v80 = vmul.f32 %v69, %v77
  %v81 = vmul.f32 %v70, %v77
  %v82 = vmul.f32 %v71, %v77
  %v83 = vld [vmem:[%s2] sm:$0x1]
  %v85 = vlaneseq
  %v86 = vshrl.u32 %v85, 7
  %v87 = vsub.s32 0, %v86
  %v88 = vrot.slane %v83, %v87
  %v90 = vadd.f32 %v79, %v88
  %v91 = vadd.f32 %v80, %v88
  %v92 = vadd.f32 %v81, %v88
  %v93 = vadd.f32 %v82, %v88
  %94 = vst.msk [vmem:[%s3] sm:$0xff] %vm18, %v90
  %95 = vst.msk [vmem:[%s3 + $0x8] sm:$0xff] %vm18, %v91
  %96 = vst.msk [vmem:[%s3 + $0x10] sm:$0xff] %vm18, %v92
  %97 = vst.msk [vmem:[%s3 + $0x18] sm:$0xff] %vm18, %v93
  // Predicated region
  $region14: #{bart_speech_ner_forward.55} parent=0 // pred_check
    _
  $region15: #{bart_speech_ner_forward.55} parent=0 // pred_check_branch
    %99 = sbr.rel (0) target = $region17
  $region16: #{bart_speech_ner_forward.55} parent=0 // pred_region
    _
  $region17: #{bart_speech_ner_forward.55} parent=0 // pred_fallthru
    _
  // Predicated region
  $region18: #{bart_speech_ner_forward.55} parent=0 // pred_check
    _
  $region19: #{bart_speech_ner_forward.55} parent=0 // pred_check_branch
    %101 = sbr.rel (0) target = $region21
  $region20: #{bart_speech_ner_forward.55} parent=0 // pred_region
    _
  $region21: #{bart_speech_ner_forward.55} parent=0 // pred_fallthru
    _

// kernel: bart_speech_ner_forward.56
$region0: #{bart_speech_ner_forward.56}
  #allocation0 [shape = 'u32[]', space=smem, size = 0x4, offset = 0x4, fixed_abs, tag = 'smem constant byte address 0x4 - core index']
  #allocation1 [shape = 'u32[144,128]{1,0:T(1,128)}', space=vmem, size = 0x12000, scoped, tag = 'internal scratch']
  #allocation2 [shape = 'f32[32,128]{1,0:T(8,128)}', space=vmem, size = 0x4000, scoped, tag = 'scratch operand']
  %s0 = inlined_call_operand.vmem [shape: bf16[32,128], index: 0, kind: input, shape index: {}]
  %s1 = inlined_call_operand.vmem [shape: bf16[128,128], index: 1, kind: input, shape index: {}]
  %s2 = inlined_call_operand.vmem [shape: f32[1,128], index: 2, kind: input, shape index: {}]
  %s3 = inlined_call_operand.vmem [shape: f32[32,128], index: 3, kind: output, shape index: {}]
  %s4 = sld [smem:[#allocation0]]
  $region30: #{bart_speech_ner_forward.56} parent=0
    _
  %s6 = ssub.s32 1, %s4
  %s7 = scalar_select 0, %s6, %s4
  // Predicated region
  $region2: #{bart_speech_ner_forward.56} parent=0 // pred_check
    _
  $region3: #{bart_speech_ner_forward.56} parent=0 // pred_check_branch
    %9 = sbr.rel (0) target = $region5
  $region4: #{bart_speech_ner_forward.56} parent=0 // pred_region
    _
  $region5: #{bart_speech_ner_forward.56} parent=0 // pred_fallthru
    _
  // Predicated region
  $region6: #{bart_speech_ner_forward.56} parent=0 // pred_check
    _
  $region7: #{bart_speech_ner_forward.56} parent=0 // pred_check_branch
    %11 = sbr.rel (0) target = $region9
  $region8: #{bart_speech_ner_forward.56} parent=0 // pred_region
    _
  $region9: #{bart_speech_ner_forward.56} parent=0 // pred_fallthru
    _
  // Predicated region
  $region10: #{bart_speech_ner_forward.56} parent=0 // pred_check
    _
  $region11: #{bart_speech_ner_forward.56} parent=0 // pred_check_branch
    %13 = sbr.rel (0) target = $region13
  $region12: #{bart_speech_ner_forward.56} parent=0 // pred_region
    _
  $region13: #{bart_speech_ner_forward.56} parent=0 // pred_fallthru
    _
  %p15 = scmp.eq.s32.totalorder 0, 0
  // Predicated region
  $region14: #{bart_speech_ner_forward.56} parent=0 // pred_check
    %p16 = pneg %p15
  $region15: #{bart_speech_ner_forward.56} parent=0 // pred_check_branch
    %18 = sbr.rel (%p16) target = $region17
  $region16: #{bart_speech_ner_forward.56} parent=0 // pred_region
    %19 = vst [vmem:[#allocation2] sm:$0xff] 0.0
    %20 = vst [vmem:[#allocation2 + $0x8] sm:$0xff] 0.0
    %21 = vst [vmem:[#allocation2 + $0x10] sm:$0xff] 0.0
    %22 = vst [vmem:[#allocation2 + $0x18] sm:$0xff] 0.0
  $region17: #{bart_speech_ner_forward.56} parent=0 // pred_fallthru
    _
  %v23 = vld [vmem:[#allocation2] sm:$0xff]
  %v24 = vld [vmem:[#allocation2 + $0x8] sm:$0xff]
  %v25 = vld [vmem:[#allocation2 + $0x10] sm:$0xff]
  %v26 = vld [vmem:[#allocation2 + $0x18] sm:$0xff]
  %v27 = vld [vmem:[%s0] sm:$0xf]
  %v28 = vld [vmem:[%s0 + $0x4] sm:$0xf]
  %v29 = vld [vmem:[%s0 + $0x8] sm:$0xf]
  %v30 = vld [vmem:[%s0 + $0xc] sm:$0xf]
  %v31 = vld [vmem:[%s1] sm:$0xf]
  %v32 = vld [vmem:[%s1 + $0x4] sm:$0xf]
  %v33 = vld [vmem:[%s1 + $0x8] sm:$0xf]
  %v34 = vld [vmem:[%s1 + $0xc] sm:$0xf]
  %v35 = vld [vmem:[%s1 + $0x10] sm:$0xf]
  %v36 = vld [vmem:[%s1 + $0x14] sm:$0xf]
  %v37 = vld [vmem:[%s1 + $0x18] sm:$0xf]
  %v38 = vld [vmem:[%s1 + $0x1c] sm:$0xf]
  %v39 = vld [vmem:[%s1 + $0x20] sm:$0xf]
  %v40 = vld [vmem:[%s1 + $0x24] sm:$0xf]
  %v41 = vld [vmem:[%s1 + $0x28] sm:$0xf]
  %v42 = vld [vmem:[%s1 + $0x2c] sm:$0xf]
  %v43 = vld [vmem:[%s1 + $0x30] sm:$0xf]
  %v44 = vld [vmem:[%s1 + $0x34] sm:$0xf]
  %v45 = vld [vmem:[%s1 + $0x38] sm:$0xf]
  %v46 = vld [vmem:[%s1 + $0x3c] sm:$0xf]
  %v51 = vunpack.c.l.b16 %v27
  %v52 = vunpack.c.l.b16 %v28
  %v53 = vunpack.c.l.b16 %v29
  %v54 = vunpack.c.l.b16 %v30
  %v55 = vpack.c.b16 %v52, %v51
  %v56 = vpack.c.b16 %v54, %v53
  %v75 = vunpack.c.l.b16 %v31
  %v76 = vunpack.c.l.b16 %v32
  %v77 = vunpack.c.l.b16 %v33
  %v78 = vunpack.c.l.b16 %v34
  %v79 = vunpack.c.l.b16 %v35
  %v80 = vunpack.c.l.b16 %v36
  %v81 = vunpack.c.l.b16 %v37
  %v82 = vunpack.c.l.b16 %v38
  %v83 = vunpack.c.l.b16 %v39
  %v84 = vunpack.c.l.b16 %v40
  %v85 = vunpack.c.l.b16 %v41
  %v86 = vunpack.c.l.b16 %v42
  %v87 = vunpack.c.l.b16 %v43
  %v88 = vunpack.c.l.b16 %v44
  %v89 = vunpack.c.l.b16 %v45
  %v90 = vunpack.c.l.b16 %v46
  %v91 = vpack.c.b16 %v76, %v75
  %v92 = vpack.c.b16 %v78, %v77
  %v93 = vpack.c.b16 %v80, %v79
  %v94 = vpack.c.b16 %v82, %v81
  %v95 = vpack.c.b16 %v84, %v83
  %v96 = vpack.c.b16 %v86, %v85
  %v97 = vpack.c.b16 %v88, %v87
  %v98 = vpack.c.b16 %v90, %v89
  %107 = vmatprep.subr.bf16.mxu0 0
  %108 = vmatpush1.bf16.msra.mxu0 %v91
  %109 = vmatprep.subr.bf16.mxu0 0
  %110 = vmatpush1.bf16.msra.mxu0 %v92
  %111 = vmatprep.subr.bf16.mxu0 0
  %112 = vmatpush1.bf16.msra.mxu0 %v93
  %113 = vmatprep.subr.bf16.mxu0 0
  %114 = vmatpush1.bf16.msra.mxu0 %v94
  %115 = vmatprep.subr.bf16.mxu0 0
  %116 = vmatpush1.bf16.msra.mxu0 %v95
  %117 = vmatprep.subr.bf16.mxu0 0
  %118 = vmatpush1.bf16.msra.mxu0 %v96
  %119 = vmatprep.subr.bf16.mxu0 0
  %120 = vmatpush1.bf16.msra.mxu0 %v97
  %121 = vmatprep.subr.bf16.mxu0 0
  %122 = vmatpush1.bf16.msra.mxu0 %v98
  %123 = vmatprep.subr.bf16.mxu0 0
  %124 = vmatpush1.bf16.msra.mxu0 0
  %125 = vmatprep.subr.bf16.mxu0 0
  %126 = vmatpush1.bf16.msra.mxu0 0
  %127 = vmatprep.subr.bf16.mxu0 0
  %128 = vmatpush1.bf16.msra.mxu0 0
  %129 = vmatprep.subr.bf16.mxu0 0
  %130 = vmatpush1.bf16.msra.mxu0 0
  %131 = vmatprep.subr.bf16.mxu0 0
  %132 = vmatpush1.bf16.msra.mxu0 0
  %133 = vmatprep.subr.bf16.mxu0 0
  %134 = vmatpush1.bf16.msra.mxu0 0
  %135 = vmatprep.subr.bf16.mxu0 0
  %136 = vmatpush1.bf16.msra.mxu0 0
  %137 = vmatprep.subr.bf16.mxu0 0
  %138 = vmatpush1.bf16.msra.mxu0 0
  %139 = vmatprep.mubr.bf16.mxu0 0
  %140 = vmatmul.mubr.bf16.gmra.mrb[0].mxu0 %v55
  %v141 = vpop.f32.mrb[0].mxu0
  %v142 = vadd.f32 0.0, %v141
  %v143 = vpop.f32.mrb[0].mxu0
  %v144 = vpop.f32.mrb[0].mxu0
  %v145 = vadd.f32 0.0, %v144
  %v146 = vpop.f32.mrb[0].mxu0
  %147 = vmatprep.mubr.bf16.mxu0 0
  %148 = vmatmul.mubr.bf16.gmra.mrb[0].mxu0 %v56
  %v149 = vpop.f32.mrb[0].mxu0
  %v150 = vadd.f32 0.0, %v149
  %v151 = vpop.f32.mrb[0].mxu0
  %v152 = vpop.f32.mrb[0].mxu0
  %v153 = vadd.f32 0.0, %v152
  %v154 = vpop.f32.mrb[0].mxu0
  %155 = vdwg.mxu0
  %v156 = vadd.f32 %v23, %v142
  %v157 = vadd.f32 %v24, %v145
  %v158 = vadd.f32 %v25, %v150
  %v159 = vadd.f32 %v26, %v153
  %160 = vst [vmem:[#allocation2] sm:$0xff] %v156
  %161 = vst [vmem:[#allocation2 + $0x8] sm:$0xff] %v157
  %162 = vst [vmem:[#allocation2 + $0x10] sm:$0xff] %v158
  %163 = vst [vmem:[#allocation2 + $0x18] sm:$0xff] %v159
  // Predicated region
  $region18: #{bart_speech_ner_forward.56} parent=0 // pred_check
    %p164 = pneg %p15
  $region19: #{bart_speech_ner_forward.56} parent=0 // pred_check_branch
    %166 = sbr.rel (%p164) target = $region21
  $region20: #{bart_speech_ner_forward.56} parent=0 // pred_region
    %v167 = vld [vmem:[#allocation2] sm:$0xff]
    %v168 = vld [vmem:[#allocation2 + $0x8] sm:$0xff]
    %v169 = vld [vmem:[#allocation2 + $0x10] sm:$0xff]
    %v170 = vld [vmem:[#allocation2 + $0x18] sm:$0xff]
    %v171 = vld [vmem:[%s2] sm:$0x1]
    %v173 = vlaneseq
    %v174 = vshrl.u32 %v173, 7
    %v175 = vsub.s32 0, %v174
    %v176 = vrot.slane %v171, %v175
    %v178 = vadd.f32 %v167, %v176
    %v179 = vadd.f32 %v168, %v176
    %v180 = vadd.f32 %v169, %v176
    %v181 = vadd.f32 %v170, %v176
    %v182 = vmul.f32 %v178, %v178
    %v183 = vmul.f32 %v179, %v179
    %v184 = vmul.f32 %v180, %v180
    %v185 = vmul.f32 %v181, %v181
    %v186 = vmul.f32 %v178, %v182
    %v187 = vmul.f32 %v179, %v183
    %v188 = vmul.f32 %v180, %v184
    %v189 = vmul.f32 %v181, %v185
    %v190 = vmul.f32 %v186, 0.044715
    %v191 = vmul.f32 %v187, 0.044715
    %v192 = vmul.f32 %v188, 0.044715
    %v193 = vmul.f32 %v189, 0.044715
    %v194 = vadd.f32 %v178, %v190
    %v195 = vadd.f32 %v179, %v191
    %v196 = vadd.f32 %v180, %v192
    %v197 = vadd.f32 %v181, %v193
    %v198 = vmul.f32 %v194, 0.7978846
    %v199 = vmul.f32 %v195, 0.7978846
    %v200 = vmul.f32 %v196, 0.7978846
    %v201 = vmul.f32 %v197, 0.7978846
    %v202 = vtanh.pop %v198
    %v203 = vtanh.pop %v199
    %v204 = vtanh.pop %v200
    %v205 = vtanh.pop %v201
    %v206 = vadd.f32 %v202, 1.0
    %v207 = vadd.f32 %v203, 1.0
    %v208 = vadd.f32 %v204, 1.0
    %v209 = vadd.f32 %v205, 1.0
    %v210 = vmul.f32 %v206, 0.5
    %v211 = vmul.f32 %v207, 0.5
    %v212 = vmul.f32 %v208, 0.5
    %v213 = vmul.f32 %v209, 0.5
    %v214 = vmul.f32 %v178, %v210
    %v215 = vmul.f32 %v179, %v211
    %v216 = vmul.f32 %v180, %v212
    %v217 = vmul.f32 %v181, %v213
    %218 = vst [vmem:[%s3] sm:$0xff] %v214
    %219 = vst [vmem:[%s3 + $0x8] sm:$0xff] %v215
    %220 = vst [vmem:[%s3 + $0x10] sm:$0xff] %v216
    %221 = vst [vmem:[%s3 + $0x18] sm:$0xff] %v217
  $region21: #{bart_speech_ner_forward.56} parent=0 // pred_fallthru
    _
  // Predicated region
  $region22: #{bart_speech_ner_forward.56} parent=0 // pred_check
    _
  $region23: #{bart_speech_ner_forward.56} parent=0 // pred_check_branch
    %223 = sbr.rel (0) target = $region25
  $region24: #{bart_speech_ner_forward.56} parent=0 // pred_region
    _
  $region25: #{bart_speech_ner_forward.56} parent=0 // pred_fallthru
    _
  // Predicated region
  $region26: #{bart_speech_ner_forward.56} parent=0 // pred_check
    _
  $region27: #{bart_speech_ner_forward.56} parent=0 // pred_check_branch
    %225 = sbr.rel (0) target = $region29
  $region28: #{bart_speech_ner_forward.56} parent=0 // pred_region
    _
  $region29: #{bart_speech_ner_forward.56} parent=0 // pred_fallthru
    _

</llo_original>
